<compile_context>
chip_gen: v6e
topology: v6e:2x2x1
jax: 0.10.0
libtpu: 0.0.40
codegen_flags: <defaults>
</compile_context>

<pallas_src>
import jax
import jax.numpy as jnp
from jax import lax
from jax.experimental import pallas as pl
from jax.experimental.pallas import tpu as pltpu

d_k = d_v = 64
d_model = 512
n_heads = 8
LN_EPS = 1e-5

# Explicit scoped-VMEM budget: above the 16/32 MiB defaults, below v7x's 64 MiB.
_VMEM_LIMIT = 48 * 1024 * 1024


def _mha_fused_kernel(xq_ref, xk_ref, xv_ref,
                      wq_ref, wk_ref, wv_ref, wfc_ref,
                      out_ref, atten_ref,
                      k_scr, v_scr):
    # xq: (tq, 512) f32 (also the residual); xk/xv: (Sk, 512) f32;
    # w*: (512, 512) bf16 pre-transposed so y = x @ w;
    # out: (tq, 512) f32; atten: (H, tq, Sk) f32;
    # k_scr: (Sk, 512) f32; v_scr: (Sk, 512) bf16.
    iq = pl.program_id(1)

    # Project K and V for this batch ONCE; keep them resident in VMEM scratch
    # across all q-blocks (grid axis 1 is "arbitrary", scratch persists).
    @pl.when(iq == 0)
    def _():
        xk = xk_ref[...].astype(jnp.bfloat16)
        xv = xv_ref[...].astype(jnp.bfloat16)
        # Single 512-contraction matmuls, bf16 MXU inputs, f32 accumulation.
        k_scr[...] = jnp.dot(xk, wk_ref[...], preferred_element_type=jnp.float32)
        v_scr[...] = jnp.dot(xv, wv_ref[...],
                             preferred_element_type=jnp.float32).astype(jnp.bfloat16)

    # Q projection for this q-block; fold 1/sqrt(d_k) into Q (exact: *0.125).
    res = xq_ref[...]                                            # residual, f32
    qp = jnp.dot(res.astype(jnp.bfloat16), wq_ref[...],
                 preferred_element_type=jnp.float32) * (1.0 / 8.0)   # (tq, 512)

    kp = k_scr[...]                                              # (Sk, 512) f32
    vp = v_scr[...]                                              # (Sk, 512) bf16
    wfc = wfc_ref[...]                                           # (512, 512) bf16

    # Per-head attention + fc accumulated straight into the residual so the
    # (tq, 512) context is never materialized or concatenated:
    #   acc = residual + sum_h softmax(Q_h K_h^T / sqrt(d_k)) @ V_h @ Wfc_h
    acc = res
    for h in range(n_heads):
        sl = slice(h * d_k, (h + 1) * d_k)
        # Scores kept in f32 (atten is a returned output -> keep it accurate).
        s = lax.dot_general(qp[:, sl], kp[:, sl],
                            (((1,), (1,)), ((), ())),
                            preferred_element_type=jnp.float32)   # (tq, Sk)
        m = jnp.max(s, axis=-1, keepdims=True)
        e = jnp.exp(s - m)
        # Multiply by a (tq,1) reciprocal instead of a (tq,Sk) divide.
        p = e * pl.reciprocal(jnp.sum(e, axis=-1, keepdims=True), approx=False)
        atten_ref[h] = p
        ctx_h = jnp.dot(p.astype(jnp.bfloat16), vp[:, sl],
                        preferred_element_type=jnp.float32)       # (tq, 64)
        acc = acc + jnp.dot(ctx_h.astype(jnp.bfloat16), wfc[sl, :],
                            preferred_element_type=jnp.float32)   # (tq, 512)

    # LayerNorm(d_model) created fresh in forward(): weight=1, bias=0, eps=1e-5.
    mu = jnp.mean(acc, axis=-1, keepdims=True)
    var = jnp.mean((acc - mu) * (acc - mu), axis=-1, keepdims=True)
    out_ref[...] = (acc - mu) * lax.rsqrt(var + LN_EPS)           # rsqrt -> EUP


def _pick_q_tile(Sq, Sk):
    """q-block tile: whole sequence when small, otherwise bound the per-step
    (H, tq, Sk) f32 atten block to a few MiB.  Always a multiple of 8."""
    if Sq <= 256:
        return Sq
    tq = 256
    while tq > 8 and n_heads * tq * Sk * 4 > (4 << 20):
        tq //= 2
    return tq


@jax.jit
def multi_head_attention(q, k, v, mask, w_q, w_k, w_v, w_fc):
    """q,k,v: (B, S, d_model) f32; mask: (B, Sq, Sk) bool.

    NOTE: the mask is accepted but IGNORED — the reference's masked_fill is
    non-in-place, so it has no effect on the PyTorch module's output.

    Returns (LayerNorm(fc(context) + q): (B, Sq, d_model),
             atten:                      (B, H, Sq, Sk)).
    """
    del mask  # non-in-place masked_fill in the reference -> no effect
    B, Sq, D = q.shape
    Sk = k.shape[1]
    H = n_heads

    # nn.Linear does y = x @ W.T: pre-transpose + pre-cast to bf16 once (tiny
    # one-time XLA op).  Halves weight DMA/VMEM and feeds the bf16 MXU directly.
    wq_t = w_q.T.astype(jnp.bfloat16)
    wk_t = w_k.T.astype(jnp.bfloat16)
    wv_t = w_v.T.astype(jnp.bfloat16)
    wfc_t = w_fc.T.astype(jnp.bfloat16)

    tq = _pick_q_tile(Sq, Sk)
    nq = pl.cdiv(Sq, tq)

    def weight_spec():
        # Grid-invariant weights: single-buffered to save VMEM.
        return pl.BlockSpec((D, D), lambda b, i: (0, 0),
                            pipeline_mode=pl.Buffered(1))

    out, atten = pl.pallas_call(
        _mha_fused_kernel,
        out_shape=(
            jax.ShapeDtypeStruct((B, Sq, D), jnp.float32),
            jax.ShapeDtypeStruct((B, H, Sq, Sk), jnp.float32),
        ),
        grid_spec=pltpu.PrefetchScalarGridSpec(
            num_scalar_prefetch=0,
            grid=(B, nq),
            in_specs=[
                pl.BlockSpec((None, tq, D), lambda b, i: (b, i, 0)),   # q block
                pl.BlockSpec((None, Sk, D), lambda b, i: (b, 0, 0)),   # full K rows
                pl.BlockSpec((None, Sk, D), lambda b, i: (b, 0, 0)),   # full V rows
                weight_spec(),   # W_Q^T
                weight_spec(),   # W_K^T
                weight_spec(),   # W_V^T
                weight_spec(),   # W_fc^T
            ],
            out_specs=[
                pl.BlockSpec((None, tq, D), lambda b, i: (b, i, 0)),
                pl.BlockSpec((None, H, tq, Sk), lambda b, i: (b, 0, i, 0)),
            ],
            scratch_shapes=[
                pltpu.VMEM((Sk, D), jnp.float32),    # projected K (f32 scores)
                pltpu.VMEM((Sk, D), jnp.bfloat16),   # projected V (bf16 P@V)
            ],
        ),
        compiler_params=pltpu.CompilerParams(
            dimension_semantics=("parallel", "arbitrary"),
            vmem_limit_bytes=_VMEM_LIMIT),
    )(q, k, v, wq_t, wk_t, wv_t, wfc_t)

    return out, atten


def _reference(q, k, v, mask, w_q, w_k, w_v, w_fc):
    """Pure-JAX f32 reference mirroring the PyTorch forward exactly."""
    del mask  # masked_fill without assignment -> no-op
    B, Sq, D = q.shape
    H = n_heads
    Qp = (q @ w_q.T).reshape(B, Sq, H, d_k).transpose(0, 2, 1, 3)
    Kp = (k @ w_k.T).reshape(B, -1, H, d_k).transpose(0, 2, 1, 3)
    Vp = (v @ w_v.T).reshape(B, -1, H, d_v).transpose(0, 2, 1, 3)
    scores = jnp.einsum('bhqe,bhke->bhqk', Qp, Kp) / jnp.sqrt(jnp.float32(d_k))
    atten = jax.nn.softmax(scores, axis=-1)
    ctx = jnp.einsum('bhqk,bhke->bhqe', atten, Vp)
    ctx = ctx.transpose(0, 2, 1, 3).reshape(B, Sq, H * d_v)
    ctx = ctx @ w_fc.T
    y = ctx + q
    mean = jnp.mean(y, axis=-1, keepdims=True)
    var = jnp.mean((y - mean) ** 2, axis=-1, keepdims=True)
    return (y - mean) / jnp.sqrt(var + LN_EPS), atten


if __name__ == "__main__":
    key = jax.random.PRNGKey(0)
    k_q, k_k, k_v, k_wq, k_wk, k_wv, k_fc = jax.random.split(key, 7)

    B, Sq, Sk = 2, 8, 8
    q = jax.random.normal(k_q, (B, Sq, d_model), dtype=jnp.float32)
    k = jax.random.normal(k_k, (B, Sk, d_model), dtype=jnp.float32)
    v = jax.random.normal(k_v, (B, Sk, d_model), dtype=jnp.float32)
    mask = jnp.zeros((B, Sq, Sk), dtype=jnp.bool_)

    # Deterministic "nn.Linear(bias=False)"-shaped weights: (out, in).
    scale = 1.0 / jnp.sqrt(jnp.float32(d_model))
    w_q = jax.random.normal(k_wq, (n_heads * d_k, d_model), jnp.float32) * scale
    w_k = jax.random.normal(k_wk, (n_heads * d_k, d_model), jnp.float32) * scale
    w_v = jax.random.normal(k_wv, (n_heads * d_v, d_model), jnp.float32) * scale
    w_fc = jax.random.normal(k_fc, (d_model, n_heads * d_v), jnp.float32) * scale

    out, atten = multi_head_attention(q, k, v, mask, w_q, w_k, w_v, w_fc)
    out = jax.block_until_ready(out)
    atten = jax.block_until_ready(atten)

    ref_out, ref_atten = _reference(q, k, v, mask, w_q, w_k, w_v, w_fc)
    assert out.shape == (B, Sq, d_model)
    assert atten.shape == (B, n_heads, Sq, Sk)
    # Tolerances reflect bf16 MXU operands (f32 accumulation): ~1e-2-scale
    # element error on O(1) outputs; scores/softmax are f32 so atten is tighter.
    assert jnp.allclose(out, ref_out, atol=6e-2, rtol=6e-2)
    assert jnp.allclose(atten, ref_atten, atol=3e-2, rtol=3e-2)

    print("KERNEL_OK")
</pallas_src>

<mosaic_0001>
module attributes {stable_mosaic.version = 11 : i64} {
  func.func @_mha_fused_kernel(%arg0: i32, %arg1: i32, %arg2: memref<1x8x512xf32, #tpu.memory_space<vmem>>, %arg3: memref<1x8x512xf32, #tpu.memory_space<vmem>>, %arg4: memref<1x8x512xf32, #tpu.memory_space<vmem>>, %arg5: memref<512x512xbf16, #tpu.memory_space<vmem>>, %arg6: memref<512x512xbf16, #tpu.memory_space<vmem>>, %arg7: memref<512x512xbf16, #tpu.memory_space<vmem>>, %arg8: memref<512x512xbf16, #tpu.memory_space<vmem>>, %arg9: memref<1x8x512xf32, #tpu.memory_space<vmem>>, %arg10: memref<1x8x8x8xf32, #tpu.memory_space<vmem>>, %arg11: memref<8x512xf32, #tpu.memory_space<vmem>>, %arg12: memref<8x512xbf16, #tpu.memory_space<vmem>>) attributes {dimension_semantics = [#tpu.dimension_semantics<parallel>, #tpu.dimension_semantics<arbitrary>], iteration_bounds = array<i64: 2, 1>, scalar_prefetch = 0 : i64, scratch_operands = 2 : i64, tpu.core_type = #tpu.core_type<tc>, window_params = [{transform_indices = @transform_0, window_bounds = array<i64: 1, 8, 512>}, {transform_indices = @transform_1, window_bounds = array<i64: 1, 8, 512>}, {transform_indices = @transform_2, window_bounds = array<i64: 1, 8, 512>}, {pipeline_mode = #tpu.pipeline_mode<synchronous>, transform_indices = @transform_3, window_bounds = array<i64: 512, 512>}, {pipeline_mode = #tpu.pipeline_mode<synchronous>, transform_indices = @transform_4, window_bounds = array<i64: 512, 512>}, {pipeline_mode = #tpu.pipeline_mode<synchronous>, transform_indices = @transform_5, window_bounds = array<i64: 512, 512>}, {pipeline_mode = #tpu.pipeline_mode<synchronous>, transform_indices = @transform_6, window_bounds = array<i64: 512, 512>}, {transform_indices = @transform_7, window_bounds = array<i64: 1, 8, 512>}, {transform_indices = @transform_8, window_bounds = array<i64: 1, 8, 8, 8>}]} {
    %c0_i32 = arith.constant 0 : i32
    %0 = arith.cmpi eq, %arg1, %c0_i32 : i32
    %1 = arith.extui %0 : i1 to i32
    %c0_i32_0 = arith.constant 0 : i32
    %2 = arith.cmpi ne, %1, %c0_i32_0 : i32
    scf.if %2 {
      %c0_85 = arith.constant 0 : index
      %c0_86 = arith.constant 0 : index
      %c0_87 = arith.constant 0 : index
      %220 = vector.load %arg3[%c0_85, %c0_86, %c0_87] : memref<1x8x512xf32, #tpu.memory_space<vmem>>, vector<1x8x512xf32>
      %221 = vector.shape_cast %220 : vector<1x8x512xf32> to vector<8x512xf32>
      %222 = arith.truncf %221 : vector<8x512xf32> to vector<8x512xbf16>
      %c0_88 = arith.constant 0 : index
      %c0_89 = arith.constant 0 : index
      %c0_90 = arith.constant 0 : index
      %223 = vector.load %arg4[%c0_88, %c0_89, %c0_90] : memref<1x8x512xf32, #tpu.memory_space<vmem>>, vector<1x8x512xf32>
      %224 = vector.shape_cast %223 : vector<1x8x512xf32> to vector<8x512xf32>
      %225 = arith.truncf %224 : vector<8x512xf32> to vector<8x512xbf16>
      %c0_91 = arith.constant 0 : index
      %c0_92 = arith.constant 0 : index
      %226 = vector.load %arg6[%c0_91, %c0_92] : memref<512x512xbf16, #tpu.memory_space<vmem>>, vector<512x512xbf16>
      %cst_93 = arith.constant dense<0.000000e+00> : vector<8x512xf32>
      %227 = tpu.matmul %222, %226, %cst_93 {dimension_numbers = #tpu.dot_dimension_numbers<[1], [0], [0], [1], [0, 0, 1, 1], [], []>} : vector<8x512xbf16>, vector<512x512xbf16>, vector<8x512xf32> -> vector<8x512xf32>
      %c0_94 = arith.constant 0 : index
      %c0_95 = arith.constant 0 : index
      %228 = vector.load %arg11[%c0_94, %c0_95] : memref<8x512xf32, #tpu.memory_space<vmem>>, vector<8x512xf32>
      tpu.vector_store %arg11[%c0_94, %c0_95], %227 {strides = array<i32>} : memref<8x512xf32, #tpu.memory_space<vmem>>, vector<8x512xf32>,
      %c0_96 = arith.constant 0 : index
      %c0_97 = arith.constant 0 : index
      %229 = vector.load %arg7[%c0_96, %c0_97] : memref<512x512xbf16, #tpu.memory_space<vmem>>, vector<512x512xbf16>
      %cst_98 = arith.constant dense<0.000000e+00> : vector<8x512xf32>
      %230 = tpu.matmul %225, %229, %cst_98 {dimension_numbers = #tpu.dot_dimension_numbers<[1], [0], [0], [1], [0, 0, 1, 1], [], []>} : vector<8x512xbf16>, vector<512x512xbf16>, vector<8x512xf32> -> vector<8x512xf32>
      %231 = arith.truncf %230 : vector<8x512xf32> to vector<8x512xbf16>
      %c0_99 = arith.constant 0 : index
      %c0_100 = arith.constant 0 : index
      %232 = vector.load %arg12[%c0_99, %c0_100] : memref<8x512xbf16, #tpu.memory_space<vmem>>, vector<8x512xbf16>
      tpu.vector_store %arg12[%c0_99, %c0_100], %231 {strides = array<i32>} : memref<8x512xbf16, #tpu.memory_space<vmem>>, vector<8x512xbf16>,
    } else {
    }
    %c0 = arith.constant 0 : index
    %c0_1 = arith.constant 0 : index
    %c0_2 = arith.constant 0 : index
    %3 = vector.load %arg2[%c0, %c0_1, %c0_2] : memref<1x8x512xf32, #tpu.memory_space<vmem>>, vector<1x8x512xf32>
    %4 = vector.shape_cast %3 : vector<1x8x512xf32> to vector<8x512xf32>
    %5 = arith.truncf %4 : vector<8x512xf32> to vector<8x512xbf16>
    %c0_3 = arith.constant 0 : index
    %c0_4 = arith.constant 0 : index
    %6 = vector.load %arg5[%c0_3, %c0_4] : memref<512x512xbf16, #tpu.memory_space<vmem>>, vector<512x512xbf16>
    %cst = arith.constant dense<0.000000e+00> : vector<8x512xf32>
    %7 = tpu.matmul %5, %6, %cst {dimension_numbers = #tpu.dot_dimension_numbers<[1], [0], [0], [1], [0, 0, 1, 1], [], []>} : vector<8x512xbf16>, vector<512x512xbf16>, vector<8x512xf32> -> vector<8x512xf32>
    %cst_5 = arith.constant 1.250000e-01 : f32
    %8 = vector.broadcast %cst_5 : f32 to vector<8x512xf32>
    %9 = arith.mulf %7, %8 : vector<8x512xf32>
    %c0_6 = arith.constant 0 : index
    %c0_7 = arith.constant 0 : index
    %10 = vector.load %arg11[%c0_6, %c0_7] : memref<8x512xf32, #tpu.memory_space<vmem>>, vector<8x512xf32>
    %c0_8 = arith.constant 0 : index
    %c0_9 = arith.constant 0 : index
    %11 = vector.load %arg12[%c0_8, %c0_9] : memref<8x512xbf16, #tpu.memory_space<vmem>>, vector<8x512xbf16>
    %c0_10 = arith.constant 0 : index
    %c0_11 = arith.constant 0 : index
    %12 = vector.load %arg8[%c0_10, %c0_11] : memref<512x512xbf16, #tpu.memory_space<vmem>>, vector<512x512xbf16>
    %13 = vector.extract_strided_slice %9 {offsets = [0, 0], sizes = [8, 64], strides = [1, 1]} : vector<8x512xf32> to vector<8x64xf32>
    %14 = vector.extract_strided_slice %10 {offsets = [0, 0], sizes = [8, 64], strides = [1, 1]} : vector<8x512xf32> to vector<8x64xf32>
    %cst_12 = arith.constant dense<0.000000e+00> : vector<8x8xf32>
    %15 = tpu.matmul %13, %14, %cst_12 {dimension_numbers = #tpu.dot_dimension_numbers<[1], [1], [0], [0], [0, 0, 1, 0], [], []>} : vector<8x64xf32>, vector<8x64xf32>, vector<8x8xf32> -> vector<8x8xf32>
    %cst_13 = arith.constant dense<0xFF800000> : vector<8xf32>
    %16 = vector.multi_reduction <maximumf>, %15, %cst_13 [1] : vector<8x8xf32> to vector<8xf32>
    %17 = vector.shape_cast %16 : vector<8xf32> to vector<8x1xf32>
    %18 = vector.broadcast %17 : vector<8x1xf32> to vector<8x8xf32>
    %19 = arith.subf %15, %18 : vector<8x8xf32>
    %20 = math.exp %19 : vector<8x8xf32>
    %cst_14 = arith.constant dense<0.000000e+00> : vector<8xf32>
    %21 = vector.multi_reduction <add>, %20, %cst_14 [1] : vector<8x8xf32> to vector<8xf32>
    %22 = vector.shape_cast %21 : vector<8xf32> to vector<8x1xf32>
    %23 = tpu.reciprocal %22 : vector<8x1xf32> -> vector<8x1xf32>
    %24 = vector.broadcast %23 : vector<8x1xf32> to vector<8x8xf32>
    %25 = arith.mulf %20, %24 : vector<8x8xf32>
    %c0_15 = arith.constant 0 : index
    %c0_16 = arith.constant 0 : index
    %c0_17 = arith.constant 0 : index
    %c0_18 = arith.constant 0 : index
    %26 = vector.load %arg10[%c0_15, %c0_16, %c0_17, %c0_18] : memref<1x8x8x8xf32, #tpu.memory_space<vmem>>, vector<1x1x8x8xf32>
    %27 = vector.shape_cast %26 : vector<1x1x8x8xf32> to vector<8x8xf32>
    %28 = vector.shape_cast %25 : vector<8x8xf32> to vector<1x1x8x8xf32>
    tpu.vector_store %arg10[%c0_15, %c0_16, %c0_17, %c0_18], %28 {strides = array<i32>} : memref<1x8x8x8xf32, #tpu.memory_space<vmem>>, vector<1x1x8x8xf32>,
    %29 = arith.truncf %25 : vector<8x8xf32> to vector<8x8xbf16>
    %30 = vector.extract_strided_slice %11 {offsets = [0, 0], sizes = [8, 64], strides = [1, 1]} : vector<8x512xbf16> to vector<8x64xbf16>
    %cst_19 = arith.constant dense<0.000000e+00> : vector<8x64xf32>
    %31 = tpu.matmul %29, %30, %cst_19 {dimension_numbers = #tpu.dot_dimension_numbers<[1], [0], [0], [1], [0, 0, 1, 1], [], []>} : vector<8x8xbf16>, vector<8x64xbf16>, vector<8x64xf32> -> vector<8x64xf32>
    %32 = arith.truncf %31 : vector<8x64xf32> to vector<8x64xbf16>
    %33 = vector.extract_strided_slice %12 {offsets = [0, 0], sizes = [64, 512], strides = [1, 1]} : vector<512x512xbf16> to vector<64x512xbf16>
    %cst_20 = arith.constant dense<0.000000e+00> : vector<8x512xf32>
    %34 = tpu.matmul %32, %33, %cst_20 {dimension_numbers = #tpu.dot_dimension_numbers<[1], [0], [0], [1], [0, 0, 1, 1], [], []>} : vector<8x64xbf16>, vector<64x512xbf16>, vector<8x512xf32> -> vector<8x512xf32>
    %35 = arith.addf %4, %34 : vector<8x512xf32>
    %36 = vector.extract_strided_slice %9 {offsets = [0, 64], sizes = [8, 64], strides = [1, 1]} : vector<8x512xf32> to vector<8x64xf32>
    %37 = vector.extract_strided_slice %10 {offsets = [0, 64], sizes = [8, 64], strides = [1, 1]} : vector<8x512xf32> to vector<8x64xf32>
    %cst_21 = arith.constant dense<0.000000e+00> : vector<8x8xf32>
    %38 = tpu.matmul %36, %37, %cst_21 {dimension_numbers = #tpu.dot_dimension_numbers<[1], [1], [0], [0], [0, 0, 1, 0], [], []>} : vector<8x64xf32>, vector<8x64xf32>, vector<8x8xf32> -> vector<8x8xf32>
    %cst_22 = arith.constant dense<0xFF800000> : vector<8xf32>
    %39 = vector.multi_reduction <maximumf>, %38, %cst_22 [1] : vector<8x8xf32> to vector<8xf32>
    %40 = vector.shape_cast %39 : vector<8xf32> to vector<8x1xf32>
    %41 = vector.broadcast %40 : vector<8x1xf32> to vector<8x8xf32>
    %42 = arith.subf %38, %41 : vector<8x8xf32>
    %43 = math.exp %42 : vector<8x8xf32>
    %cst_23 = arith.constant dense<0.000000e+00> : vector<8xf32>
    %44 = vector.multi_reduction <add>, %43, %cst_23 [1] : vector<8x8xf32> to vector<8xf32>
    %45 = vector.shape_cast %44 : vector<8xf32> to vector<8x1xf32>
    %46 = tpu.reciprocal %45 : vector<8x1xf32> -> vector<8x1xf32>
    %47 = vector.broadcast %46 : vector<8x1xf32> to vector<8x8xf32>
    %48 = arith.mulf %43, %47 : vector<8x8xf32>
    %c0_24 = arith.constant 0 : index
    %c1 = arith.constant 1 : index
    %c0_25 = arith.constant 0 : index
    %c0_26 = arith.constant 0 : index
    %49 = vector.load %arg10[%c0_24, %c1, %c0_25, %c0_26] : memref<1x8x8x8xf32, #tpu.memory_space<vmem>>, vector<1x1x8x8xf32>
    %50 = vector.shape_cast %49 : vector<1x1x8x8xf32> to vector<8x8xf32>
    %51 = vector.shape_cast %48 : vector<8x8xf32> to vector<1x1x8x8xf32>
    tpu.vector_store %arg10[%c0_24, %c1, %c0_25, %c0_26], %51 {strides = array<i32>} : memref<1x8x8x8xf32, #tpu.memory_space<vmem>>, vector<1x1x8x8xf32>,
    %52 = arith.truncf %48 : vector<8x8xf32> to vector<8x8xbf16>
    %53 = vector.extract_strided_slice %11 {offsets = [0, 64], sizes = [8, 64], strides = [1, 1]} : vector<8x512xbf16> to vector<8x64xbf16>
    %cst_27 = arith.constant dense<0.000000e+00> : vector<8x64xf32>
    %54 = tpu.matmul %52, %53, %cst_27 {dimension_numbers = #tpu.dot_dimension_numbers<[1], [0], [0], [1], [0, 0, 1, 1], [], []>} : vector<8x8xbf16>, vector<8x64xbf16>, vector<8x64xf32> -> vector<8x64xf32>
    %55 = arith.truncf %54 : vector<8x64xf32> to vector<8x64xbf16>
    %56 = vector.extract_strided_slice %12 {offsets = [64, 0], sizes = [64, 512], strides = [1, 1]} : vector<512x512xbf16> to vector<64x512xbf16>
    %cst_28 = arith.constant dense<0.000000e+00> : vector<8x512xf32>
    %57 = tpu.matmul %55, %56, %cst_28 {dimension_numbers = #tpu.dot_dimension_numbers<[1], [0], [0], [1], [0, 0, 1, 1], [], []>} : vector<8x64xbf16>, vector<64x512xbf16>, vector<8x512xf32> -> vector<8x512xf32>
    %58 = arith.addf %35, %57 : vector<8x512xf32>
    %59 = vector.extract_strided_slice %9 {offsets = [0, 128], sizes = [8, 64], strides = [1, 1]} : vector<8x512xf32> to vector<8x64xf32>
    %60 = vector.extract_strided_slice %10 {offsets = [0, 128], sizes = [8, 64], strides = [1, 1]} : vector<8x512xf32> to vector<8x64xf32>
    %cst_29 = arith.constant dense<0.000000e+00> : vector<8x8xf32>
    %61 = tpu.matmul %59, %60, %cst_29 {dimension_numbers = #tpu.dot_dimension_numbers<[1], [1], [0], [0], [0, 0, 1, 0], [], []>} : vector<8x64xf32>, vector<8x64xf32>, vector<8x8xf32> -> vector<8x8xf32>
    %cst_30 = arith.constant dense<0xFF800000> : vector<8xf32>
    %62 = vector.multi_reduction <maximumf>, %61, %cst_30 [1] : vector<8x8xf32> to vector<8xf32>
    %63 = vector.shape_cast %62 : vector<8xf32> to vector<8x1xf32>
    %64 = vector.broadcast %63 : vector<8x1xf32> to vector<8x8xf32>
    %65 = arith.subf %61, %64 : vector<8x8xf32>
    %66 = math.exp %65 : vector<8x8xf32>
    %cst_31 = arith.constant dense<0.000000e+00> : vector<8xf32>
    %67 = vector.multi_reduction <add>, %66, %cst_31 [1] : vector<8x8xf32> to vector<8xf32>
    %68 = vector.shape_cast %67 : vector<8xf32> to vector<8x1xf32>
    %69 = tpu.reciprocal %68 : vector<8x1xf32> -> vector<8x1xf32>
    %70 = vector.broadcast %69 : vector<8x1xf32> to vector<8x8xf32>
    %71 = arith.mulf %66, %70 : vector<8x8xf32>
    %c0_32 = arith.constant 0 : index
    %c2 = arith.constant 2 : index
    %c0_33 = arith.constant 0 : index
    %c0_34 = arith.constant 0 : index
    %72 = vector.load %arg10[%c0_32, %c2, %c0_33, %c0_34] : memref<1x8x8x8xf32, #tpu.memory_space<vmem>>, vector<1x1x8x8xf32>
    %73 = vector.shape_cast %72 : vector<1x1x8x8xf32> to vector<8x8xf32>
    %74 = vector.shape_cast %71 : vector<8x8xf32> to vector<1x1x8x8xf32>
    tpu.vector_store %arg10[%c0_32, %c2, %c0_33, %c0_34], %74 {strides = array<i32>} : memref<1x8x8x8xf32, #tpu.memory_space<vmem>>, vector<1x1x8x8xf32>,
    %75 = arith.truncf %71 : vector<8x8xf32> to vector<8x8xbf16>
    %76 = vector.extract_strided_slice %11 {offsets = [0, 128], sizes = [8, 64], strides = [1, 1]} : vector<8x512xbf16> to vector<8x64xbf16>
    %cst_35 = arith.constant dense<0.000000e+00> : vector<8x64xf32>
    %77 = tpu.matmul %75, %76, %cst_35 {dimension_numbers = #tpu.dot_dimension_numbers<[1], [0], [0], [1], [0, 0, 1, 1], [], []>} : vector<8x8xbf16>, vector<8x64xbf16>, vector<8x64xf32> -> vector<8x64xf32>
    %78 = arith.truncf %77 : vector<8x64xf32> to vector<8x64xbf16>
    %79 = vector.extract_strided_slice %12 {offsets = [128, 0], sizes = [64, 512], strides = [1, 1]} : vector<512x512xbf16> to vector<64x512xbf16>
    %cst_36 = arith.constant dense<0.000000e+00> : vector<8x512xf32>
    %80 = tpu.matmul %78, %79, %cst_36 {dimension_numbers = #tpu.dot_dimension_numbers<[1], [0], [0], [1], [0, 0, 1, 1], [], []>} : vector<8x64xbf16>, vector<64x512xbf16>, vector<8x512xf32> -> vector<8x512xf32>
    %81 = arith.addf %58, %80 : vector<8x512xf32>
    %82 = vector.extract_strided_slice %9 {offsets = [0, 192], sizes = [8, 64], strides = [1, 1]} : vector<8x512xf32> to vector<8x64xf32>
    %83 = vector.extract_strided_slice %10 {offsets = [0, 192], sizes = [8, 64], strides = [1, 1]} : vector<8x512xf32> to vector<8x64xf32>
    %cst_37 = arith.constant dense<0.000000e+00> : vector<8x8xf32>
    %84 = tpu.matmul %82, %83, %cst_37 {dimension_numbers = #tpu.dot_dimension_numbers<[1], [1], [0], [0], [0, 0, 1, 0], [], []>} : vector<8x64xf32>, vector<8x64xf32>, vector<8x8xf32> -> vector<8x8xf32>
    %cst_38 = arith.constant dense<0xFF800000> : vector<8xf32>
    %85 = vector.multi_reduction <maximumf>, %84, %cst_38 [1] : vector<8x8xf32> to vector<8xf32>
    %86 = vector.shape_cast %85 : vector<8xf32> to vector<8x1xf32>
    %87 = vector.broadcast %86 : vector<8x1xf32> to vector<8x8xf32>
    %88 = arith.subf %84, %87 : vector<8x8xf32>
    %89 = math.exp %88 : vector<8x8xf32>
    %cst_39 = arith.constant dense<0.000000e+00> : vector<8xf32>
    %90 = vector.multi_reduction <add>, %89, %cst_39 [1] : vector<8x8xf32> to vector<8xf32>
    %91 = vector.shape_cast %90 : vector<8xf32> to vector<8x1xf32>
    %92 = tpu.reciprocal %91 : vector<8x1xf32> -> vector<8x1xf32>
    %93 = vector.broadcast %92 : vector<8x1xf32> to vector<8x8xf32>
    %94 = arith.mulf %89, %93 : vector<8x8xf32>
    %c0_40 = arith.constant 0 : index
    %c3 = arith.constant 3 : index
    %c0_41 = arith.constant 0 : index
    %c0_42 = arith.constant 0 : index
    %95 = vector.load %arg10[%c0_40, %c3, %c0_41, %c0_42] : memref<1x8x8x8xf32, #tpu.memory_space<vmem>>, vector<1x1x8x8xf32>
    %96 = vector.shape_cast %95 : vector<1x1x8x8xf32> to vector<8x8xf32>
    %97 = vector.shape_cast %94 : vector<8x8xf32> to vector<1x1x8x8xf32>
    tpu.vector_store %arg10[%c0_40, %c3, %c0_41, %c0_42], %97 {strides = array<i32>} : memref<1x8x8x8xf32, #tpu.memory_space<vmem>>, vector<1x1x8x8xf32>,
    %98 = arith.truncf %94 : vector<8x8xf32> to vector<8x8xbf16>
    %99 = vector.extract_strided_slice %11 {offsets = [0, 192], sizes = [8, 64], strides = [1, 1]} : vector<8x512xbf16> to vector<8x64xbf16>
    %cst_43 = arith.constant dense<0.000000e+00> : vector<8x64xf32>
    %100 = tpu.matmul %98, %99, %cst_43 {dimension_numbers = #tpu.dot_dimension_numbers<[1], [0], [0], [1], [0, 0, 1, 1], [], []>} : vector<8x8xbf16>, vector<8x64xbf16>, vector<8x64xf32> -> vector<8x64xf32>
    %101 = arith.truncf %100 : vector<8x64xf32> to vector<8x64xbf16>
    %102 = vector.extract_strided_slice %12 {offsets = [192, 0], sizes = [64, 512], strides = [1, 1]} : vector<512x512xbf16> to vector<64x512xbf16>
    %cst_44 = arith.constant dense<0.000000e+00> : vector<8x512xf32>
    %103 = tpu.matmul %101, %102, %cst_44 {dimension_numbers = #tpu.dot_dimension_numbers<[1], [0], [0], [1], [0, 0, 1, 1], [], []>} : vector<8x64xbf16>, vector<64x512xbf16>, vector<8x512xf32> -> vector<8x512xf32>
    %104 = arith.addf %81, %103 : vector<8x512xf32>
    %105 = vector.extract_strided_slice %9 {offsets = [0, 256], sizes = [8, 64], strides = [1, 1]} : vector<8x512xf32> to vector<8x64xf32>
    %106 = vector.extract_strided_slice %10 {offsets = [0, 256], sizes = [8, 64], strides = [1, 1]} : vector<8x512xf32> to vector<8x64xf32>
    %cst_45 = arith.constant dense<0.000000e+00> : vector<8x8xf32>
    %107 = tpu.matmul %105, %106, %cst_45 {dimension_numbers = #tpu.dot_dimension_numbers<[1], [1], [0], [0], [0, 0, 1, 0], [], []>} : vector<8x64xf32>, vector<8x64xf32>, vector<8x8xf32> -> vector<8x8xf32>
    %cst_46 = arith.constant dense<0xFF800000> : vector<8xf32>
    %108 = vector.multi_reduction <maximumf>, %107, %cst_46 [1] : vector<8x8xf32> to vector<8xf32>
    %109 = vector.shape_cast %108 : vector<8xf32> to vector<8x1xf32>
    %110 = vector.broadcast %109 : vector<8x1xf32> to vector<8x8xf32>
    %111 = arith.subf %107, %110 : vector<8x8xf32>
    %112 = math.exp %111 : vector<8x8xf32>
    %cst_47 = arith.constant dense<0.000000e+00> : vector<8xf32>
    %113 = vector.multi_reduction <add>, %112, %cst_47 [1] : vector<8x8xf32> to vector<8xf32>
    %114 = vector.shape_cast %113 : vector<8xf32> to vector<8x1xf32>
    %115 = tpu.reciprocal %114 : vector<8x1xf32> -> vector<8x1xf32>
    %116 = vector.broadcast %115 : vector<8x1xf32> to vector<8x8xf32>
    %117 = arith.mulf %112, %116 : vector<8x8xf32>
    %c0_48 = arith.constant 0 : index
    %c4 = arith.constant 4 : index
    %c0_49 = arith.constant 0 : index
    %c0_50 = arith.constant 0 : index
    %118 = vector.load %arg10[%c0_48, %c4, %c0_49, %c0_50] : memref<1x8x8x8xf32, #tpu.memory_space<vmem>>, vector<1x1x8x8xf32>
    %119 = vector.shape_cast %118 : vector<1x1x8x8xf32> to vector<8x8xf32>
    %120 = vector.shape_cast %117 : vector<8x8xf32> to vector<1x1x8x8xf32>
    tpu.vector_store %arg10[%c0_48, %c4, %c0_49, %c0_50], %120 {strides = array<i32>} : memref<1x8x8x8xf32, #tpu.memory_space<vmem>>, vector<1x1x8x8xf32>,
    %121 = arith.truncf %117 : vector<8x8xf32> to vector<8x8xbf16>
    %122 = vector.extract_strided_slice %11 {offsets = [0, 256], sizes = [8, 64], strides = [1, 1]} : vector<8x512xbf16> to vector<8x64xbf16>
    %cst_51 = arith.constant dense<0.000000e+00> : vector<8x64xf32>
    %123 = tpu.matmul %121, %122, %cst_51 {dimension_numbers = #tpu.dot_dimension_numbers<[1], [0], [0], [1], [0, 0, 1, 1], [], []>} : vector<8x8xbf16>, vector<8x64xbf16>, vector<8x64xf32> -> vector<8x64xf32>
    %124 = arith.truncf %123 : vector<8x64xf32> to vector<8x64xbf16>
    %125 = vector.extract_strided_slice %12 {offsets = [256, 0], sizes = [64, 512], strides = [1, 1]} : vector<512x512xbf16> to vector<64x512xbf16>
    %cst_52 = arith.constant dense<0.000000e+00> : vector<8x512xf32>
    %126 = tpu.matmul %124, %125, %cst_52 {dimension_numbers = #tpu.dot_dimension_numbers<[1], [0], [0], [1], [0, 0, 1, 1], [], []>} : vector<8x64xbf16>, vector<64x512xbf16>, vector<8x512xf32> -> vector<8x512xf32>
    %127 = arith.addf %104, %126 : vector<8x512xf32>
    %128 = vector.extract_strided_slice %9 {offsets = [0, 320], sizes = [8, 64], strides = [1, 1]} : vector<8x512xf32> to vector<8x64xf32>
    %129 = vector.extract_strided_slice %10 {offsets = [0, 320], sizes = [8, 64], strides = [1, 1]} : vector<8x512xf32> to vector<8x64xf32>
    %cst_53 = arith.constant dense<0.000000e+00> : vector<8x8xf32>
    %130 = tpu.matmul %128, %129, %cst_53 {dimension_numbers = #tpu.dot_dimension_numbers<[1], [1], [0], [0], [0, 0, 1, 0], [], []>} : vector<8x64xf32>, vector<8x64xf32>, vector<8x8xf32> -> vector<8x8xf32>
    %cst_54 = arith.constant dense<0xFF800000> : vector<8xf32>
    %131 = vector.multi_reduction <maximumf>, %130, %cst_54 [1] : vector<8x8xf32> to vector<8xf32>
    %132 = vector.shape_cast %131 : vector<8xf32> to vector<8x1xf32>
    %133 = vector.broadcast %132 : vector<8x1xf32> to vector<8x8xf32>
    %134 = arith.subf %130, %133 : vector<8x8xf32>
    %135 = math.exp %134 : vector<8x8xf32>
    %cst_55 = arith.constant dense<0.000000e+00> : vector<8xf32>
    %136 = vector.multi_reduction <add>, %135, %cst_55 [1] : vector<8x8xf32> to vector<8xf32>
    %137 = vector.shape_cast %136 : vector<8xf32> to vector<8x1xf32>
    %138 = tpu.reciprocal %137 : vector<8x1xf32> -> vector<8x1xf32>
    %139 = vector.broadcast %138 : vector<8x1xf32> to vector<8x8xf32>
    %140 = arith.mulf %135, %139 : vector<8x8xf32>
    %c0_56 = arith.constant 0 : index
    %c5 = arith.constant 5 : index
    %c0_57 = arith.constant 0 : index
    %c0_58 = arith.constant 0 : index
    %141 = vector.load %arg10[%c0_56, %c5, %c0_57, %c0_58] : memref<1x8x8x8xf32, #tpu.memory_space<vmem>>, vector<1x1x8x8xf32>
    %142 = vector.shape_cast %141 : vector<1x1x8x8xf32> to vector<8x8xf32>
    %143 = vector.shape_cast %140 : vector<8x8xf32> to vector<1x1x8x8xf32>
    tpu.vector_store %arg10[%c0_56, %c5, %c0_57, %c0_58], %143 {strides = array<i32>} : memref<1x8x8x8xf32, #tpu.memory_space<vmem>>, vector<1x1x8x8xf32>,
    %144 = arith.truncf %140 : vector<8x8xf32> to vector<8x8xbf16>
    %145 = vector.extract_strided_slice %11 {offsets = [0, 320], sizes = [8, 64], strides = [1, 1]} : vector<8x512xbf16> to vector<8x64xbf16>
    %cst_59 = arith.constant dense<0.000000e+00> : vector<8x64xf32>
    %146 = tpu.matmul %144, %145, %cst_59 {dimension_numbers = #tpu.dot_dimension_numbers<[1], [0], [0], [1], [0, 0, 1, 1], [], []>} : vector<8x8xbf16>, vector<8x64xbf16>, vector<8x64xf32> -> vector<8x64xf32>
    %147 = arith.truncf %146 : vector<8x64xf32> to vector<8x64xbf16>
    %148 = vector.extract_strided_slice %12 {offsets = [320, 0], sizes = [64, 512], strides = [1, 1]} : vector<512x512xbf16> to vector<64x512xbf16>
    %cst_60 = arith.constant dense<0.000000e+00> : vector<8x512xf32>
    %149 = tpu.matmul %147, %148, %cst_60 {dimension_numbers = #tpu.dot_dimension_numbers<[1], [0], [0], [1], [0, 0, 1, 1], [], []>} : vector<8x64xbf16>, vector<64x512xbf16>, vector<8x512xf32> -> vector<8x512xf32>
    %150 = arith.addf %127, %149 : vector<8x512xf32>
    %151 = vector.extract_strided_slice %9 {offsets = [0, 384], sizes = [8, 64], strides = [1, 1]} : vector<8x512xf32> to vector<8x64xf32>
    %152 = vector.extract_strided_slice %10 {offsets = [0, 384], sizes = [8, 64], strides = [1, 1]} : vector<8x512xf32> to vector<8x64xf32>
    %cst_61 = arith.constant dense<0.000000e+00> : vector<8x8xf32>
    %153 = tpu.matmul %151, %152, %cst_61 {dimension_numbers = #tpu.dot_dimension_numbers<[1], [1], [0], [0], [0, 0, 1, 0], [], []>} : vector<8x64xf32>, vector<8x64xf32>, vector<8x8xf32> -> vector<8x8xf32>
    %cst_62 = arith.constant dense<0xFF800000> : vector<8xf32>
    %154 = vector.multi_reduction <maximumf>, %153, %cst_62 [1] : vector<8x8xf32> to vector<8xf32>
    %155 = vector.shape_cast %154 : vector<8xf32> to vector<8x1xf32>
    %156 = vector.broadcast %155 : vector<8x1xf32> to vector<8x8xf32>
    %157 = arith.subf %153, %156 : vector<8x8xf32>
    %158 = math.exp %157 : vector<8x8xf32>
    %cst_63 = arith.constant dense<0.000000e+00> : vector<8xf32>
    %159 = vector.multi_reduction <add>, %158, %cst_63 [1] : vector<8x8xf32> to vector<8xf32>
    %160 = vector.shape_cast %159 : vector<8xf32> to vector<8x1xf32>
    %161 = tpu.reciprocal %160 : vector<8x1xf32> -> vector<8x1xf32>
    %162 = vector.broadcast %161 : vector<8x1xf32> to vector<8x8xf32>
    %163 = arith.mulf %158, %162 : vector<8x8xf32>
    %c0_64 = arith.constant 0 : index
    %c6 = arith.constant 6 : index
    %c0_65 = arith.constant 0 : index
    %c0_66 = arith.constant 0 : index
    %164 = vector.load %arg10[%c0_64, %c6, %c0_65, %c0_66] : memref<1x8x8x8xf32, #tpu.memory_space<vmem>>, vector<1x1x8x8xf32>
    %165 = vector.shape_cast %164 : vector<1x1x8x8xf32> to vector<8x8xf32>
    %166 = vector.shape_cast %163 : vector<8x8xf32> to vector<1x1x8x8xf32>
    tpu.vector_store %arg10[%c0_64, %c6, %c0_65, %c0_66], %166 {strides = array<i32>} : memref<1x8x8x8xf32, #tpu.memory_space<vmem>>, vector<1x1x8x8xf32>,
    %167 = arith.truncf %163 : vector<8x8xf32> to vector<8x8xbf16>
    %168 = vector.extract_strided_slice %11 {offsets = [0, 384], sizes = [8, 64], strides = [1, 1]} : vector<8x512xbf16> to vector<8x64xbf16>
    %cst_67 = arith.constant dense<0.000000e+00> : vector<8x64xf32>
    %169 = tpu.matmul %167, %168, %cst_67 {dimension_numbers = #tpu.dot_dimension_numbers<[1], [0], [0], [1], [0, 0, 1, 1], [], []>} : vector<8x8xbf16>, vector<8x64xbf16>, vector<8x64xf32> -> vector<8x64xf32>
    %170 = arith.truncf %169 : vector<8x64xf32> to vector<8x64xbf16>
    %171 = vector.extract_strided_slice %12 {offsets = [384, 0], sizes = [64, 512], strides = [1, 1]} : vector<512x512xbf16> to vector<64x512xbf16>
    %cst_68 = arith.constant dense<0.000000e+00> : vector<8x512xf32>
    %172 = tpu.matmul %170, %171, %cst_68 {dimension_numbers = #tpu.dot_dimension_numbers<[1], [0], [0], [1], [0, 0, 1, 1], [], []>} : vector<8x64xbf16>, vector<64x512xbf16>, vector<8x512xf32> -> vector<8x512xf32>
    %173 = arith.addf %150, %172 : vector<8x512xf32>
    %174 = vector.extract_strided_slice %9 {offsets = [0, 448], sizes = [8, 64], strides = [1, 1]} : vector<8x512xf32> to vector<8x64xf32>
    %175 = vector.extract_strided_slice %10 {offsets = [0, 448], sizes = [8, 64], strides = [1, 1]} : vector<8x512xf32> to vector<8x64xf32>
    %cst_69 = arith.constant dense<0.000000e+00> : vector<8x8xf32>
    %176 = tpu.matmul %174, %175, %cst_69 {dimension_numbers = #tpu.dot_dimension_numbers<[1], [1], [0], [0], [0, 0, 1, 0], [], []>} : vector<8x64xf32>, vector<8x64xf32>, vector<8x8xf32> -> vector<8x8xf32>
    %cst_70 = arith.constant dense<0xFF800000> : vector<8xf32>
    %177 = vector.multi_reduction <maximumf>, %176, %cst_70 [1] : vector<8x8xf32> to vector<8xf32>
    %178 = vector.shape_cast %177 : vector<8xf32> to vector<8x1xf32>
    %179 = vector.broadcast %178 : vector<8x1xf32> to vector<8x8xf32>
    %180 = arith.subf %176, %179 : vector<8x8xf32>
    %181 = math.exp %180 : vector<8x8xf32>
    %cst_71 = arith.constant dense<0.000000e+00> : vector<8xf32>
    %182 = vector.multi_reduction <add>, %181, %cst_71 [1] : vector<8x8xf32> to vector<8xf32>
    %183 = vector.shape_cast %182 : vector<8xf32> to vector<8x1xf32>
    %184 = tpu.reciprocal %183 : vector<8x1xf32> -> vector<8x1xf32>
    %185 = vector.broadcast %184 : vector<8x1xf32> to vector<8x8xf32>
    %186 = arith.mulf %181, %185 : vector<8x8xf32>
    %c0_72 = arith.constant 0 : index
    %c7 = arith.constant 7 : index
    %c0_73 = arith.constant 0 : index
    %c0_74 = arith.constant 0 : index
    %187 = vector.load %arg10[%c0_72, %c7, %c0_73, %c0_74] : memref<1x8x8x8xf32, #tpu.memory_space<vmem>>, vector<1x1x8x8xf32>
    %188 = vector.shape_cast %187 : vector<1x1x8x8xf32> to vector<8x8xf32>
    %189 = vector.shape_cast %186 : vector<8x8xf32> to vector<1x1x8x8xf32>
    tpu.vector_store %arg10[%c0_72, %c7, %c0_73, %c0_74], %189 {strides = array<i32>} : memref<1x8x8x8xf32, #tpu.memory_space<vmem>>, vector<1x1x8x8xf32>,
    %190 = arith.truncf %186 : vector<8x8xf32> to vector<8x8xbf16>
    %191 = vector.extract_strided_slice %11 {offsets = [0, 448], sizes = [8, 64], strides = [1, 1]} : vector<8x512xbf16> to vector<8x64xbf16>
    %cst_75 = arith.constant dense<0.000000e+00> : vector<8x64xf32>
    %192 = tpu.matmul %190, %191, %cst_75 {dimension_numbers = #tpu.dot_dimension_numbers<[1], [0], [0], [1], [0, 0, 1, 1], [], []>} : vector<8x8xbf16>, vector<8x64xbf16>, vector<8x64xf32> -> vector<8x64xf32>
    %193 = arith.truncf %192 : vector<8x64xf32> to vector<8x64xbf16>
    %194 = vector.extract_strided_slice %12 {offsets = [448, 0], sizes = [64, 512], strides = [1, 1]} : vector<512x512xbf16> to vector<64x512xbf16>
    %cst_76 = arith.constant dense<0.000000e+00> : vector<8x512xf32>
    %195 = tpu.matmul %193, %194, %cst_76 {dimension_numbers = #tpu.dot_dimension_numbers<[1], [0], [0], [1], [0, 0, 1, 1], [], []>} : vector<8x64xbf16>, vector<64x512xbf16>, vector<8x512xf32> -> vector<8x512xf32>
    %196 = arith.addf %173, %195 : vector<8x512xf32>
    %cst_77 = arith.constant dense<0.000000e+00> : vector<8xf32>
    %197 = vector.multi_reduction <add>, %196, %cst_77 [1] : vector<8x512xf32> to vector<8xf32>
    %198 = vector.shape_cast %197 : vector<8xf32> to vector<8x1xf32>
    %cst_78 = arith.constant 5.120000e+02 : f32
    %199 = vector.broadcast %cst_78 : f32 to vector<8x1xf32>
    %200 = arith.divf %198, %199 : vector<8x1xf32>
    %201 = vector.broadcast %200 : vector<8x1xf32> to vector<8x512xf32>
    %202 = arith.subf %196, %201 : vector<8x512xf32>
    %203 = vector.broadcast %200 : vector<8x1xf32> to vector<8x512xf32>
    %204 = arith.subf %196, %203 : vector<8x512xf32>
    %205 = arith.mulf %202, %204 : vector<8x512xf32>
    %cst_79 = arith.constant dense<0.000000e+00> : vector<8xf32>
    %206 = vector.multi_reduction <add>, %205, %cst_79 [1] : vector<8x512xf32> to vector<8xf32>
    %207 = vector.shape_cast %206 : vector<8xf32> to vector<8x1xf32>
    %cst_80 = arith.constant 5.120000e+02 : f32
    %208 = vector.broadcast %cst_80 : f32 to vector<8x1xf32>
    %209 = arith.divf %207, %208 : vector<8x1xf32>
    %210 = vector.broadcast %200 : vector<8x1xf32> to vector<8x512xf32>
    %211 = arith.subf %196, %210 : vector<8x512xf32>
    %cst_81 = arith.constant 9.99999974E-6 : f32
    %212 = vector.broadcast %cst_81 : f32 to vector<8x1xf32>
    %213 = arith.addf %209, %212 : vector<8x1xf32>
    %214 = math.rsqrt %213 : vector<8x1xf32>
    %215 = vector.broadcast %214 : vector<8x1xf32> to vector<8x512xf32>
    %216 = arith.mulf %211, %215 : vector<8x512xf32>
    %c0_82 = arith.constant 0 : index
    %c0_83 = arith.constant 0 : index
    %c0_84 = arith.constant 0 : index
    %217 = vector.load %arg9[%c0_82, %c0_83, %c0_84] : memref<1x8x512xf32, #tpu.memory_space<vmem>>, vector<1x8x512xf32>
    %218 = vector.shape_cast %217 : vector<1x8x512xf32> to vector<8x512xf32>
    %219 = vector.shape_cast %216 : vector<8x512xf32> to vector<1x8x512xf32>
    tpu.vector_store %arg9[%c0_82, %c0_83, %c0_84], %219 {strides = array<i32>} : memref<1x8x512xf32, #tpu.memory_space<vmem>>, vector<1x8x512xf32>,
    return
  }
  func.func @transform_0(%arg0: i32, %arg1: i32) -> (i32, i32, i32) {
    %c0_i32 = arith.constant 0 : i32
    %c0_i32_0 = arith.constant 0 : i32
    return %arg0, %arg1, %c0_i32 : i32, i32, i32
  }
  func.func @transform_1(%arg0: i32, %arg1: i32) -> (i32, i32, i32) {
    %c0_i32 = arith.constant 0 : i32
    %c0_i32_0 = arith.constant 0 : i32
    %c0_i32_1 = arith.constant 0 : i32
    return %arg0, %c0_i32, %c0_i32_0 : i32, i32, i32
  }
  func.func @transform_2(%arg0: i32, %arg1: i32) -> (i32, i32, i32) {
    %c0_i32 = arith.constant 0 : i32
    %c0_i32_0 = arith.constant 0 : i32
    %c0_i32_1 = arith.constant 0 : i32
    return %arg0, %c0_i32, %c0_i32_0 : i32, i32, i32
  }
  func.func @transform_3(%arg0: i32, %arg1: i32) -> (i32, i32) {
    %c0_i32 = arith.constant 0 : i32
    %c0_i32_0 = arith.constant 0 : i32
    %c0_i32_1 = arith.constant 0 : i32
    return %c0_i32, %c0_i32_0 : i32, i32
  }
  func.func @transform_4(%arg0: i32, %arg1: i32) -> (i32, i32) {
    %c0_i32 = arith.constant 0 : i32
    %c0_i32_0 = arith.constant 0 : i32
    %c0_i32_1 = arith.constant 0 : i32
    return %c0_i32, %c0_i32_0 : i32, i32
  }
  func.func @transform_5(%arg0: i32, %arg1: i32) -> (i32, i32) {
    %c0_i32 = arith.constant 0 : i32
    %c0_i32_0 = arith.constant 0 : i32
    %c0_i32_1 = arith.constant 0 : i32
    return %c0_i32, %c0_i32_0 : i32, i32
  }
  func.func @transform_6(%arg0: i32, %arg1: i32) -> (i32, i32) {
    %c0_i32 = arith.constant 0 : i32
    %c0_i32_0 = arith.constant 0 : i32
    %c0_i32_1 = arith.constant 0 : i32
    return %c0_i32, %c0_i32_0 : i32, i32
  }
  func.func @transform_7(%arg0: i32, %arg1: i32) -> (i32, i32, i32) {
    %c0_i32 = arith.constant 0 : i32
    %c0_i32_0 = arith.constant 0 : i32
    return %arg0, %arg1, %c0_i32 : i32, i32, i32
  }
  func.func @transform_8(%arg0: i32, %arg1: i32) -> (i32, i32, i32, i32) {
    %c0_i32 = arith.constant 0 : i32
    %c0_i32_0 = arith.constant 0 : i32
    %c0_i32_1 = arith.constant 0 : i32
    return %arg0, %c0_i32, %arg1, %c0_i32_0 : i32, i32, i32, i32
  }
}

</mosaic_0001>

<llo_original>
// kernel: multi_head_attention.1
$region0: #{multi_head_attention.1}
  #allocation0 [shape = 'u32[]', space=smem, size = 0x4, offset = 0x4, fixed_abs, tag = 'smem constant byte address 0x4 - core index']
  #allocation1 [shape = 'u32[144,128]{1,0:T(1,128)}', space=vmem, size = 0x12000, scoped, tag = 'internal scratch']
  #allocation2 [shape = 'f32[8,512]{1,0:T(8,128)}', space=vmem, size = 0x4000, scoped, tag = 'scratch operand']
  #allocation3 [shape = 'bf16[8,512]{1,0:T(8,128)(2,1)}', space=vmem, size = 0x2000, scoped, tag = 'scratch operand']
  %s0 = inlined_call_operand.vmem [shape: f32[2,8,512], index: 0, kind: input, shape index: {}]
  %s1 = inlined_call_operand.vmem [shape: f32[2,8,512], index: 1, kind: input, shape index: {}]
  %s2 = inlined_call_operand.vmem [shape: f32[2,8,512], index: 2, kind: input, shape index: {}]
  %s3 = inlined_call_operand.vmem [shape: bf16[512,512], index: 3, kind: input, shape index: {}]
  %s4 = inlined_call_operand.vmem [shape: bf16[512,512], index: 4, kind: input, shape index: {}]
  %s5 = inlined_call_operand.vmem [shape: bf16[512,512], index: 5, kind: input, shape index: {}]
  %s6 = inlined_call_operand.vmem [shape: bf16[512,512], index: 6, kind: input, shape index: {}]
  %s7 = inlined_call_operand.hbm [shape: f32[2,8,512], index: 7, kind: output, shape index: {0}]
  %s8 = inlined_call_operand.hbm [shape: f32[2,8,8,8], index: 8, kind: output, shape index: {1}]
  %9 = xla_tuple %s7, %s8
  %s10 = sld [smem:[#allocation0]]
  $region73: #{multi_head_attention.1} parent=0
    _
  %s12 = ssub.s32 1, %s10
  %s13 = scalar_select 0, %s12, %s10
  $region1: #{multi_head_attention.1} parent=0
    #allocation4 [shape = 'u8[32768]{0}', space=vmem, size = 0x8000, scoped, tag = 'output window, operand 0']
    #allocation5 [shape = 's32[2]{0}', space=sflag, size = 0x8, scoped, tag = 'scoped memory for multi_head_attention.1']
    #allocation6 [shape = 'u8[65536]{0}', space=vmem, size = 0x10000, scoped, tag = 'output window, operand 1']
    #allocation7 [shape = 's32[2]{0}', space=sflag, size = 0x8, scoped, tag = 'scoped memory for multi_head_attention.1']
    %14 = vsyncpa [#allocation5], 0
    %s15 = scalar_lea.sflag [#allocation5], 1
    %16 = vsyncpa %s15, 0
    %17 = vsyncpa [#allocation7], 0
    %s18 = scalar_lea.sflag [#allocation7], 1
    %19 = vsyncpa %s18, 0
    loop: start=0, step=1, limit=4
    $region2: #{multi_head_attention.1} parent=1 // loop_pre_header
      _
    $region3: #{multi_head_attention.1} parent=1 // loop_header
      %s21 = sphi 0, %s25
      %p22 = scmp.ge.s32.totalorder %s21, 4
      %s28 = sphi 0, %s40
      %s29 = sphi 0, %s36
      %s30 = sphi 0, %s28
      %s31 = sphi 0, %s29
      %s32 = sphi 0, %s30
      %s33 = sphi 0, %s31
      %s45 = sphi 0, %s47
      %s48 = sphi 0, %s45
      %s49 = sphi 0, %s48
      %s65 = sphi 0, %s49
      %s71 = sphi 0, %s73
      %s74 = sphi 0, %s71
      %s75 = sphi 0, %s74
      %s91 = sphi 0, %s75
      %s97 = sphi 0, %s99
      %s100 = sphi 0, %s97
      %s101 = sphi 0, %s100
      %s117 = sphi 0, %s101
      %s121 = sphi 0, %s121
      %s123 = sphi 0, %s121
      %s124 = sphi 0, %s123
      %s138 = sphi 0, %s124
      %s142 = sphi 0, %s142
      %s144 = sphi 0, %s142
      %s145 = sphi 0, %s144
      %s159 = sphi 0, %s145
      %s163 = sphi 0, %s163
      %s165 = sphi 0, %s163
      %s166 = sphi 0, %s165
      %s180 = sphi 0, %s166
      %s184 = sphi 0, %s184
      %s186 = sphi 0, %s184
      %s187 = sphi 0, %s186
      %s201 = sphi 0, %s187
      %s209 = sphi 0, %s211
      %s212 = sphi 0, %s209
      %s213 = sphi 0, %s212
      %s229 = sphi 0, %s213
      %s237 = sphi 0, %s239
      %s240 = sphi 0, %s237
      %s241 = sphi 0, %s240
      %s257 = sphi 0, %s241
    $region4: #{multi_head_attention.1} parent=1 // loop_header_branch
      %24 = sbr.rel (%p22) target = $region8
    $region5: #{multi_head_attention.1} parent=1 // loop_body
      %s26 = ssub.s32 %s21, 1
      %s27 = ssub.s32 %s21, 2
      %s34 = sadd.s32 1, %s29
      %p35 = scmp.ge.s32.totalorder %s34, 1
      %s36 = scalar_select %p35, 0, %s34
      %s37 = sadd.s32 1, %s28
      %s38 = scalar_select %p35, %s37, %s28
      %p39 = scmp.ge.s32.totalorder %s38, 2
      %s40 = scalar_select %p39, 0, %s38
      %s41 = ssub.s32 %s28, %s40
      %s42 = ssub.s32 %s29, %s36
      %s43 = sor.u32 %s41, %s42
      %p44 = scmp.eq.s32.totalorder %s43, 0
      %s46 = sadd.s32 %s45, 1
      %s47 = scalar_select %p44, %s45, %s46
      %p50 = pneg %p44
      %p51 = scmp.eq.s32.totalorder %s21, 1
      %p52 = por %p50, %p51
      %p53 = scmp.ne.s32.totalorder %s45, %s48
      %p54 = scmp.eq.s32.totalorder %s21, 0
      %p55 = por %p53, %p54
      %p56 = scmp.ne.s32.totalorder %s45, %s48
      %p57 = scmp.eq.s32.totalorder %s26, 1
      %p58 = por %p56, %p57
      %p59 = scmp.ne.s32.totalorder %s48, %s49
      %p60 = scmp.eq.s32.totalorder %s26, 0
      %p61 = por %p59, %p60
      %p62 = scmp.ne.s32.totalorder %s48, %s49
      %p63 = scmp.eq.s32.totalorder %s27, 1
      %p64 = por %p62, %p63
      %p66 = scmp.ne.s32.totalorder %s49, %s65
      %p67 = scmp.eq.s32.totalorder %s27, 0
      %p68 = por %p66, %p67
      %s69 = ssub.s32 %s28, %s40
      %p70 = scmp.eq.s32.totalorder %s69, 0
      %s72 = sadd.s32 %s71, 1
      %s73 = scalar_select %p70, %s71, %s72
      %p76 = pneg %p70
      %p77 = scmp.eq.s32.totalorder %s21, 1
      %p78 = por %p76, %p77
      %p79 = scmp.ne.s32.totalorder %s71, %s74
      %p80 = scmp.eq.s32.totalorder %s21, 0
      %p81 = por %p79, %p80
      %p82 = scmp.ne.s32.totalorder %s71, %s74
      %p83 = scmp.eq.s32.totalorder %s26, 1
      %p84 = por %p82, %p83
      %p85 = scmp.ne.s32.totalorder %s74, %s75
      %p86 = scmp.eq.s32.totalorder %s26, 0
      %p87 = por %p85, %p86
      %p88 = scmp.ne.s32.totalorder %s74, %s75
      %p89 = scmp.eq.s32.totalorder %s27, 1
      %p90 = por %p88, %p89
      %p92 = scmp.ne.s32.totalorder %s75, %s91
      %p93 = scmp.eq.s32.totalorder %s27, 0
      %p94 = por %p92, %p93
      %s95 = ssub.s32 %s28, %s40
      %p96 = scmp.eq.s32.totalorder %s95, 0
      %s98 = sadd.s32 %s97, 1
      %s99 = scalar_select %p96, %s97, %s98
      %p102 = pneg %p96
      %p103 = scmp.eq.s32.totalorder %s21, 1
      %p104 = por %p102, %p103
      %p105 = scmp.ne.s32.totalorder %s97, %s100
      %p106 = scmp.eq.s32.totalorder %s21, 0
      %p107 = por %p105, %p106
      %p108 = scmp.ne.s32.totalorder %s97, %s100
      %p109 = scmp.eq.s32.totalorder %s26, 1
      %p110 = por %p108, %p109
      %p111 = scmp.ne.s32.totalorder %s100, %s101
      %p112 = scmp.eq.s32.totalorder %s26, 0
      %p113 = por %p111, %p112
      %p114 = scmp.ne.s32.totalorder %s100, %s101
      %p115 = scmp.eq.s32.totalorder %s27, 1
      %p116 = por %p114, %p115
      %p118 = scmp.ne.s32.totalorder %s101, %s117
      %p119 = scmp.eq.s32.totalorder %s27, 0
      %p120 = por %p118, %p119
      %s122 = sadd.s32 %s121, 1
      %p125 = scmp.eq.s32.totalorder %s21, 1
      %p126 = scmp.ne.s32.totalorder %s121, %s123
      %p127 = scmp.eq.s32.totalorder %s21, 0
      %p128 = por %p126, %p127
      %p129 = scmp.ne.s32.totalorder %s121, %s123
      %p130 = scmp.eq.s32.totalorder %s26, 1
      %p131 = por %p129, %p130
      %p132 = scmp.ne.s32.totalorder %s123, %s124
      %p133 = scmp.eq.s32.totalorder %s26, 0
      %p134 = por %p132, %p133
      %p135 = scmp.ne.s32.totalorder %s123, %s124
      %p136 = scmp.eq.s32.totalorder %s27, 1
      %p137 = por %p135, %p136
      %p139 = scmp.ne.s32.totalorder %s124, %s138
      %p140 = scmp.eq.s32.totalorder %s27, 0
      %p141 = por %p139, %p140
      %s143 = sadd.s32 %s142, 1
      %p146 = scmp.eq.s32.totalorder %s21, 1
      %p147 = scmp.ne.s32.totalorder %s142, %s144
      %p148 = scmp.eq.s32.totalorder %s21, 0
      %p149 = por %p147, %p148
      %p150 = scmp.ne.s32.totalorder %s142, %s144
      %p151 = scmp.eq.s32.totalorder %s26, 1
      %p152 = por %p150, %p151
      %p153 = scmp.ne.s32.totalorder %s144, %s145
      %p154 = scmp.eq.s32.totalorder %s26, 0
      %p155 = por %p153, %p154
      %p156 = scmp.ne.s32.totalorder %s144, %s145
      %p157 = scmp.eq.s32.totalorder %s27, 1
      %p158 = por %p156, %p157
      %p160 = scmp.ne.s32.totalorder %s145, %s159
      %p161 = scmp.eq.s32.totalorder %s27, 0
      %p162 = por %p160, %p161
      %s164 = sadd.s32 %s163, 1
      %p167 = scmp.eq.s32.totalorder %s21, 1
      %p168 = scmp.ne.s32.totalorder %s163, %s165
      %p169 = scmp.eq.s32.totalorder %s21, 0
      %p170 = por %p168, %p169
      %p171 = scmp.ne.s32.totalorder %s163, %s165
      %p172 = scmp.eq.s32.totalorder %s26, 1
      %p173 = por %p171, %p172
      %p174 = scmp.ne.s32.totalorder %s165, %s166
      %p175 = scmp.eq.s32.totalorder %s26, 0
      %p176 = por %p174, %p175
      %p177 = scmp.ne.s32.totalorder %s165, %s166
      %p178 = scmp.eq.s32.totalorder %s27, 1
      %p179 = por %p177, %p178
      %p181 = scmp.ne.s32.totalorder %s166, %s180
      %p182 = scmp.eq.s32.totalorder %s27, 0
      %p183 = por %p181, %p182
      %s185 = sadd.s32 %s184, 1
      %p188 = scmp.eq.s32.totalorder %s21, 1
      %p189 = scmp.ne.s32.totalorder %s184, %s186
      %p190 = scmp.eq.s32.totalorder %s21, 0
      %p191 = por %p189, %p190
      %p192 = scmp.ne.s32.totalorder %s184, %s186
      %p193 = scmp.eq.s32.totalorder %s26, 1
      %p194 = por %p192, %p193
      %p195 = scmp.ne.s32.totalorder %s186, %s187
      %p196 = scmp.eq.s32.totalorder %s26, 0
      %p197 = por %p195, %p196
      %p198 = scmp.ne.s32.totalorder %s186, %s187
      %p199 = scmp.eq.s32.totalorder %s27, 1
      %p200 = por %p198, %p199
      %p202 = scmp.ne.s32.totalorder %s187, %s201
      %p203 = scmp.eq.s32.totalorder %s27, 0
      %p204 = por %p202, %p203
      %s205 = ssub.s32 %s28, %s40
      %s206 = ssub.s32 %s29, %s36
      %s207 = sor.u32 %s205, %s206
      %p208 = scmp.eq.s32.totalorder %s207, 0
      %s210 = sadd.s32 %s209, 1
      %s211 = scalar_select %p208, %s209, %s210
      %p214 = pneg %p208
      %p215 = scmp.eq.s32.totalorder %s21, 1
      %p216 = por %p214, %p215
      %p217 = scmp.ne.s32.totalorder %s209, %s212
      %p218 = scmp.eq.s32.totalorder %s21, 0
      %p219 = por %p217, %p218
      %p220 = scmp.ne.s32.totalorder %s209, %s212
      %p221 = scmp.eq.s32.totalorder %s26, 1
      %p222 = por %p220, %p221
      %p223 = scmp.ne.s32.totalorder %s212, %s213
      %p224 = scmp.eq.s32.totalorder %s26, 0
      %p225 = por %p223, %p224
      %p226 = scmp.ne.s32.totalorder %s212, %s213
      %p227 = scmp.eq.s32.totalorder %s27, 1
      %p228 = por %p226, %p227
      %p230 = scmp.ne.s32.totalorder %s213, %s229
      %p231 = scmp.eq.s32.totalorder %s27, 0
      %p232 = por %p230, %p231
      %s233 = ssub.s32 %s28, %s40
      %s234 = ssub.s32 %s29, %s36
      %s235 = sor.u32 %s233, %s234
      %p236 = scmp.eq.s32.totalorder %s235, 0
      %s238 = sadd.s32 %s237, 1
      %s239 = scalar_select %p236, %s237, %s238
      %p242 = pneg %p236
      %p243 = scmp.eq.s32.totalorder %s21, 1
      %p244 = por %p242, %p243
      %p245 = scmp.ne.s32.totalorder %s237, %s240
      %p246 = scmp.eq.s32.totalorder %s21, 0
      %p247 = por %p245, %p246
      %p248 = scmp.ne.s32.totalorder %s237, %s240
      %p249 = scmp.eq.s32.totalorder %s26, 1
      %p250 = por %p248, %p249
      %p251 = scmp.ne.s32.totalorder %s240, %s241
      %p252 = scmp.eq.s32.totalorder %s26, 0
      %p253 = por %p251, %p252
      %p254 = scmp.ne.s32.totalorder %s240, %s241
      %p255 = scmp.eq.s32.totalorder %s27, 1
      %p256 = por %p254, %p255
      %p258 = scmp.ne.s32.totalorder %s241, %s257
      %p259 = scmp.eq.s32.totalorder %s27, 0
      %p260 = por %p258, %p259
      %p261 = scmp.le.s32.totalorder 1, %s21
      %p262 = scmp.lt.s32.totalorder %s21, 3
      %p263 = pnand %p261, %p262
      %p264 = pneg %p263
      // Predicated region
      $region9: #{multi_head_attention.1} parent=5 // pred_check
        _
      $region10: #{multi_head_attention.1} parent=5 // pred_check_branch
        %266 = sbr.rel (%p263) target = $region12
      $region11: #{multi_head_attention.1} parent=5 // pred_region
        %s267 = ssub.s32 %s21, 1
        // Predicated region
        $region13: #{multi_head_attention.1} parent=11 // pred_check
          %p268 = pneg %p134
        $region14: #{multi_head_attention.1} parent=11 // pred_check_branch
          %270 = sbr.rel (%p268) target = $region16
        $region15: #{multi_head_attention.1} parent=11 // pred_region
          _
        $region16: #{multi_head_attention.1} parent=11 // pred_fallthru
          _
        // Predicated region
        $region17: #{multi_head_attention.1} parent=11 // pred_check
          %p271 = pneg %p155
        $region18: #{multi_head_attention.1} parent=11 // pred_check_branch
          %273 = sbr.rel (%p271) target = $region20
        $region19: #{multi_head_attention.1} parent=11 // pred_region
          _
        $region20: #{multi_head_attention.1} parent=11 // pred_fallthru
          _
        // Predicated region
        $region21: #{multi_head_attention.1} parent=11 // pred_check
          %p274 = pneg %p176
        $region22: #{multi_head_attention.1} parent=11 // pred_check_branch
          %276 = sbr.rel (%p274) target = $region24
        $region23: #{multi_head_attention.1} parent=11 // pred_region
          _
        $region24: #{multi_head_attention.1} parent=11 // pred_fallthru
          _
        // Predicated region
        $region25: #{multi_head_attention.1} parent=11 // pred_check
          %p277 = pneg %p197
        $region26: #{multi_head_attention.1} parent=11 // pred_check_branch
          %279 = sbr.rel (%p277) target = $region28
        $region27: #{multi_head_attention.1} parent=11 // pred_region
          _
        $region28: #{multi_head_attention.1} parent=11 // pred_fallthru
          _
      $region12: #{multi_head_attention.1} parent=5 // pred_fallthru
        _
      %p280 = scmp.lt.s32.totalorder %s21, 2
      // Predicated region
      $region29: #{multi_head_attention.1} parent=5 // pred_check
        %p281 = pneg %p280
      $region30: #{multi_head_attention.1} parent=5 // pred_check_branch
        %283 = sbr.rel (%p281) target = $region32
      $region31: #{multi_head_attention.1} parent=5 // pred_region
        // Predicated region
        $region33: #{multi_head_attention.1} parent=31 // pred_check
          %p284 = pneg %p55
        $region34: #{multi_head_attention.1} parent=31 // pred_check_branch
          %286 = sbr.rel (%p284) target = $region36
        $region35: #{multi_head_attention.1} parent=31 // pred_region
          %p287 = scmp.lt.s32.totalorder %s28, 1
          %s288 = scalar_select %p287, %s28, 1
          %p289 = scmp.lt.s32.totalorder %s29, 0
          %s290 = scalar_select %p289, %s29, 0
          %s291 = smul.addr %s290, 4
          %s292 = smul.addr %s288, 4
          %s293 = sadd.s32 %s291, %s292
          %s294 = smul.addr %s293, 8
          %s295 = scalar_lea.vmem %s0, %s294
        $region36: #{multi_head_attention.1} parent=31 // pred_fallthru
          _
        // Predicated region
        $region37: #{multi_head_attention.1} parent=31 // pred_check
          %p296 = pneg %p81
        $region38: #{multi_head_attention.1} parent=31 // pred_check_branch
          %298 = sbr.rel (%p296) target = $region40
        $region39: #{multi_head_attention.1} parent=31 // pred_region
          %p299 = scmp.lt.s32.totalorder %s28, 1
          %s300 = scalar_select %p299, %s28, 1
          %s301 = smul.addr %s300, 4
          %s302 = smul.addr %s301, 8
          %s303 = scalar_lea.vmem %s1, %s302
        $region40: #{multi_head_attention.1} parent=31 // pred_fallthru
          _
        // Predicated region
        $region41: #{multi_head_attention.1} parent=31 // pred_check
          %p304 = pneg %p107
        $region42: #{multi_head_attention.1} parent=31 // pred_check_branch
          %306 = sbr.rel (%p304) target = $region44
        $region43: #{multi_head_attention.1} parent=31 // pred_region
          %p307 = scmp.lt.s32.totalorder %s28, 1
          %s308 = scalar_select %p307, %s28, 1
          %s309 = smul.addr %s308, 4
          %s310 = smul.addr %s309, 8
          %s311 = scalar_lea.vmem %s2, %s310
        $region44: #{multi_head_attention.1} parent=31 // pred_fallthru
          _
      $region32: #{multi_head_attention.1} parent=5 // pred_fallthru
        _
      %p312 = scmp.le.s32.totalorder 1, %s21
      %p313 = scmp.lt.s32.totalorder %s21, 3
      %p314 = pnand %p312, %p313
      %p315 = pneg %p314
      // Predicated region
      $region45: #{multi_head_attention.1} parent=5 // pred_check
        _
      $region46: #{multi_head_attention.1} parent=5 // pred_check_branch
        %317 = sbr.rel (%p314) target = $region48
      $region47: #{multi_head_attention.1} parent=5 // pred_region
        %s318 = ssub.s32 %s21, 1
        %p319 = scmp.lt.s32.totalorder %s30, 1
        %s320 = scalar_select %p319, %s30, 1
        %p321 = scmp.lt.s32.totalorder %s31, 0
        %s322 = scalar_select %p321, %s31, 0
        %s323 = smul.addr %s322, 4
        %s324 = smul.addr %s320, 4
        %s325 = sadd.s32 %s323, %s324
        %s326 = smul.addr %s325, 8
        %s327 = scalar_lea.vmem %s0, %s326
        %p328 = pneg %p61
        %p329 = pneg %p58
        %p330 = scmp.lt.s32.totalorder %s30, 1
        %s331 = scalar_select %p330, %s30, 1
        %s332 = smul.addr %s331, 4
        %s333 = smul.addr %s332, 8
        %s334 = scalar_lea.vmem %s1, %s333
        %p335 = pneg %p87
        %p336 = pneg %p84
        %p337 = scmp.lt.s32.totalorder %s30, 1
        %s338 = scalar_select %p337, %s30, 1
        %s339 = smul.addr %s338, 4
        %s340 = smul.addr %s339, 8
        %s341 = scalar_lea.vmem %s2, %s340
        %p342 = pneg %p113
        %p343 = pneg %p110
        %p344 = pneg %p134
        %p345 = pneg %p131
        %p346 = pneg %p155
        %p347 = pneg %p152
        %p348 = pneg %p176
        %p349 = pneg %p173
        %p350 = pneg %p197
        %p351 = pneg %p194
        %p352 = pneg %p225
        %p353 = pneg %p222
        %s354 = sand.u32 %s212, 1
        %s355 = scalar_lea.sflag [#allocation5], %s354
        %s356 = sand.u32 %s212, 1
        %s357 = smul.addr %s356, 32
        %s358 = scalar_lea.vmem [#allocation4], %s357
        %p359 = pneg %p253
        %p360 = pneg %p250
        %s361 = sand.u32 %s240, 1
        %s362 = scalar_lea.sflag [#allocation7], %s361
        %s363 = sand.u32 %s240, 1
        %s364 = smul.addr %s363, 64
        %s365 = scalar_lea.vmem [#allocation6], %s364
        %p366 = scmp.lt.s32.totalorder %s30, 1
        %s367 = scalar_select %p366, %s30, 1
        %p368 = scmp.lt.s32.totalorder %s31, 0
        %s369 = scalar_select %p368, %s31, 0
        %s370 = smul.addr %s369, 4
        %s371 = smul.addr %s367, 4
        %s372 = sadd.s32 %s370, %s371
        %s373 = smul.addr %s372, 8
        %s374 = scalar_lea.vmem %s0, %s373
        %p375 = scmp.lt.s32.totalorder %s30, 1
        %s376 = scalar_select %p375, %s30, 1
        %s377 = smul.addr %s376, 4
        %s378 = smul.addr %s377, 8
        %s379 = scalar_lea.vmem %s1, %s378
        %p380 = scmp.lt.s32.totalorder %s30, 1
        %s381 = scalar_select %p380, %s30, 1
        %s382 = smul.addr %s381, 4
        %s383 = smul.addr %s382, 8
        %s384 = scalar_lea.vmem %s2, %s383
        %p386 = scmp.eq.s32.totalorder %s31, 0
        // Predicated region
        $region49: #{multi_head_attention.1} parent=47 // pred_check
          %p387 = pneg %p386
        $region50: #{multi_head_attention.1} parent=47 // pred_check_branch
          %389 = sbr.rel (%p387) target = $region52
        $region51: #{multi_head_attention.1} parent=47 // pred_region
          %v390 = vld [vmem:[%s379] sm:$0xff]
          %v391 = vld [vmem:[%s379 + $0x8] sm:$0xff]
          %v392 = vld [vmem:[%s379 + $0x10] sm:$0xff]
          %v393 = vld [vmem:[%s379 + $0x18] sm:$0xff]
          %v394 = vpack.c.bf16 %v390, %v390
          %v395 = vpack.c.bf16 %v391, %v391
          %v396 = vpack.c.bf16 %v392, %v392
          %v397 = vpack.c.bf16 %v393, %v393
          %v398 = vld [vmem:[%s384] sm:$0xff]
          %v399 = vld [vmem:[%s384 + $0x8] sm:$0xff]
          %v400 = vld [vmem:[%s384 + $0x10] sm:$0xff]
          %v401 = vld [vmem:[%s384 + $0x18] sm:$0xff]
          %v402 = vpack.c.bf16 %v398, %v398
          %v403 = vpack.c.bf16 %v399, %v399
          %v404 = vpack.c.bf16 %v400, %v400
          %v405 = vpack.c.bf16 %v401, %v401
          %v406 = vld [vmem:[%s4] sm:$0xff]
          %v407 = vld [vmem:[%s4 + $0x8] sm:$0xff]
          %v408 = vld [vmem:[%s4 + $0x10] sm:$0xff]
          %v409 = vld [vmem:[%s4 + $0x18] sm:$0xff]
          %v410 = vld [vmem:[%s4 + $0x20] sm:$0xff]
          %v411 = vld [vmem:[%s4 + $0x28] sm:$0xff]
          %v412 = vld [vmem:[%s4 + $0x30] sm:$0xff]
          %v413 = vld [vmem:[%s4 + $0x38] sm:$0xff]
          %v414 = vld [vmem:[%s4 + $0x40] sm:$0xff]
          %v415 = vld [vmem:[%s4 + $0x48] sm:$0xff]
          %v416 = vld [vmem:[%s4 + $0x50] sm:$0xff]
          %v417 = vld [vmem:[%s4 + $0x58] sm:$0xff]
          %v418 = vld [vmem:[%s4 + $0x60] sm:$0xff]
          %v419 = vld [vmem:[%s4 + $0x68] sm:$0xff]
          %v420 = vld [vmem:[%s4 + $0x70] sm:$0xff]
          %v421 = vld [vmem:[%s4 + $0x78] sm:$0xff]
          %v422 = vld [vmem:[%s4 + $0x80] sm:$0xff]
          %v423 = vld [vmem:[%s4 + $0x88] sm:$0xff]
          %v424 = vld [vmem:[%s4 + $0x90] sm:$0xff]
          %v425 = vld [vmem:[%s4 + $0x98] sm:$0xff]
          %v426 = vld [vmem:[%s4 + $0xa0] sm:$0xff]
          %v427 = vld [vmem:[%s4 + $0xa8] sm:$0xff]
          %v428 = vld [vmem:[%s4 + $0xb0] sm:$0xff]
          %v429 = vld [vmem:[%s4 + $0xb8] sm:$0xff]
          %v430 = vld [vmem:[%s4 + $0xc0] sm:$0xff]
          %v431 = vld [vmem:[%s4 + $0xc8] sm:$0xff]
          %v432 = vld [vmem:[%s4 + $0xd0] sm:$0xff]
          %v433 = vld [vmem:[%s4 + $0xd8] sm:$0xff]
          %v434 = vld [vmem:[%s4 + $0xe0] sm:$0xff]
          %v435 = vld [vmem:[%s4 + $0xe8] sm:$0xff]
          %v436 = vld [vmem:[%s4 + $0xf0] sm:$0xff]
          %v437 = vld [vmem:[%s4 + $0xf8] sm:$0xff]
          %v438 = vld [vmem:[%s4 + $0x100] sm:$0xff]
          %v439 = vld [vmem:[%s4 + $0x108] sm:$0xff]
          %v440 = vld [vmem:[%s4 + $0x110] sm:$0xff]
          %v441 = vld [vmem:[%s4 + $0x118] sm:$0xff]
          %v442 = vld [vmem:[%s4 + $0x120] sm:$0xff]
          %v443 = vld [vmem:[%s4 + $0x128] sm:$0xff]
          %v444 = vld [vmem:[%s4 + $0x130] sm:$0xff]
          %v445 = vld [vmem:[%s4 + $0x138] sm:$0xff]
          %v446 = vld [vmem:[%s4 + $0x140] sm:$0xff]
          %v447 = vld [vmem:[%s4 + $0x148] sm:$0xff]
          %v448 = vld [vmem:[%s4 + $0x150] sm:$0xff]
          %v449 = vld [vmem:[%s4 + $0x158] sm:$0xff]
          %v450 = vld [vmem:[%s4 + $0x160] sm:$0xff]
          %v451 = vld [vmem:[%s4 + $0x168] sm:$0xff]
          %v452 = vld [vmem:[%s4 + $0x170] sm:$0xff]
          %v453 = vld [vmem:[%s4 + $0x178] sm:$0xff]
          %v454 = vld [vmem:[%s4 + $0x180] sm:$0xff]
          %v455 = vld [vmem:[%s4 + $0x188] sm:$0xff]
          %v456 = vld [vmem:[%s4 + $0x190] sm:$0xff]
          %v457 = vld [vmem:[%s4 + $0x198] sm:$0xff]
          %v458 = vld [vmem:[%s4 + $0x1a0] sm:$0xff]
          %v459 = vld [vmem:[%s4 + $0x1a8] sm:$0xff]
          %v460 = vld [vmem:[%s4 + $0x1b0] sm:$0xff]
          %v461 = vld [vmem:[%s4 + $0x1b8] sm:$0xff]
          %v462 = vld [vmem:[%s4 + $0x1c0] sm:$0xff]
          %v463 = vld [vmem:[%s4 + $0x1c8] sm:$0xff]
          %v464 = vld [vmem:[%s4 + $0x1d0] sm:$0xff]
          %v465 = vld [vmem:[%s4 + $0x1d8] sm:$0xff]
          %v466 = vld [vmem:[%s4 + $0x1e0] sm:$0xff]
          %v467 = vld [vmem:[%s4 + $0x1e8] sm:$0xff]
          %v468 = vld [vmem:[%s4 + $0x1f0] sm:$0xff]
          %v469 = vld [vmem:[%s4 + $0x1f8] sm:$0xff]
          %v470 = vld [vmem:[%s4 + $0x200] sm:$0xff]
          %v471 = vld [vmem:[%s4 + $0x208] sm:$0xff]
          %v472 = vld [vmem:[%s4 + $0x210] sm:$0xff]
          %v473 = vld [vmem:[%s4 + $0x218] sm:$0xff]
          %v474 = vld [vmem:[%s4 + $0x220] sm:$0xff]
          %v475 = vld [vmem:[%s4 + $0x228] sm:$0xff]
          %v476 = vld [vmem:[%s4 + $0x230] sm:$0xff]
          %v477 = vld [vmem:[%s4 + $0x238] sm:$0xff]
          %v478 = vld [vmem:[%s4 + $0x240] sm:$0xff]
          %v479 = vld [vmem:[%s4 + $0x248] sm:$0xff]
          %v480 = vld [vmem:[%s4 + $0x250] sm:$0xff]
          %v481 = vld [vmem:[%s4 + $0x258] sm:$0xff]
          %v482 = vld [vmem:[%s4 + $0x260] sm:$0xff]
          %v483 = vld [vmem:[%s4 + $0x268] sm:$0xff]
          %v484 = vld [vmem:[%s4 + $0x270] sm:$0xff]
          %v485 = vld [vmem:[%s4 + $0x278] sm:$0xff]
          %v486 = vld [vmem:[%s4 + $0x280] sm:$0xff]
          %v487 = vld [vmem:[%s4 + $0x288] sm:$0xff]
          %v488 = vld [vmem:[%s4 + $0x290] sm:$0xff]
          %v489 = vld [vmem:[%s4 + $0x298] sm:$0xff]
          %v490 = vld [vmem:[%s4 + $0x2a0] sm:$0xff]
          %v491 = vld [vmem:[%s4 + $0x2a8] sm:$0xff]
          %v492 = vld [vmem:[%s4 + $0x2b0] sm:$0xff]
          %v493 = vld [vmem:[%s4 + $0x2b8] sm:$0xff]
          %v494 = vld [vmem:[%s4 + $0x2c0] sm:$0xff]
          %v495 = vld [vmem:[%s4 + $0x2c8] sm:$0xff]
          %v496 = vld [vmem:[%s4 + $0x2d0] sm:$0xff]
          %v497 = vld [vmem:[%s4 + $0x2d8] sm:$0xff]
          %v498 = vld [vmem:[%s4 + $0x2e0] sm:$0xff]
          %v499 = vld [vmem:[%s4 + $0x2e8] sm:$0xff]
          %v500 = vld [vmem:[%s4 + $0x2f0] sm:$0xff]
          %v501 = vld [vmem:[%s4 + $0x2f8] sm:$0xff]
          %v502 = vld [vmem:[%s4 + $0x300] sm:$0xff]
          %v503 = vld [vmem:[%s4 + $0x308] sm:$0xff]
          %v504 = vld [vmem:[%s4 + $0x310] sm:$0xff]
          %v505 = vld [vmem:[%s4 + $0x318] sm:$0xff]
          %v506 = vld [vmem:[%s4 + $0x320] sm:$0xff]
          %v507 = vld [vmem:[%s4 + $0x328] sm:$0xff]
          %v508 = vld [vmem:[%s4 + $0x330] sm:$0xff]
          %v509 = vld [vmem:[%s4 + $0x338] sm:$0xff]
          %v510 = vld [vmem:[%s4 + $0x340] sm:$0xff]
          %v511 = vld [vmem:[%s4 + $0x348] sm:$0xff]
          %v512 = vld [vmem:[%s4 + $0x350] sm:$0xff]
          %v513 = vld [vmem:[%s4 + $0x358] sm:$0xff]
          %v514 = vld [vmem:[%s4 + $0x360] sm:$0xff]
          %v515 = vld [vmem:[%s4 + $0x368] sm:$0xff]
          %v516 = vld [vmem:[%s4 + $0x370] sm:$0xff]
          %v517 = vld [vmem:[%s4 + $0x378] sm:$0xff]
          %v518 = vld [vmem:[%s4 + $0x380] sm:$0xff]
          %v519 = vld [vmem:[%s4 + $0x388] sm:$0xff]
          %v520 = vld [vmem:[%s4 + $0x390] sm:$0xff]
          %v521 = vld [vmem:[%s4 + $0x398] sm:$0xff]
          %v522 = vld [vmem:[%s4 + $0x3a0] sm:$0xff]
          %v523 = vld [vmem:[%s4 + $0x3a8] sm:$0xff]
          %v524 = vld [vmem:[%s4 + $0x3b0] sm:$0xff]
          %v525 = vld [vmem:[%s4 + $0x3b8] sm:$0xff]
          %v526 = vld [vmem:[%s4 + $0x3c0] sm:$0xff]
          %v527 = vld [vmem:[%s4 + $0x3c8] sm:$0xff]
          %v528 = vld [vmem:[%s4 + $0x3d0] sm:$0xff]
          %v529 = vld [vmem:[%s4 + $0x3d8] sm:$0xff]
          %v530 = vld [vmem:[%s4 + $0x3e0] sm:$0xff]
          %v531 = vld [vmem:[%s4 + $0x3e8] sm:$0xff]
          %v532 = vld [vmem:[%s4 + $0x3f0] sm:$0xff]
          %v533 = vld [vmem:[%s4 + $0x3f8] sm:$0xff]
          %v662 = vunpack.c.l.b16 %v406
          %v663 = vunpack.c.h.b16 %v406
          %v664 = vunpack.c.l.b16 %v407
          %v665 = vunpack.c.h.b16 %v407
          %v666 = vunpack.c.l.b16 %v408
          %v667 = vunpack.c.h.b16 %v408
          %v668 = vunpack.c.l.b16 %v409
          %v669 = vunpack.c.h.b16 %v409
          %v670 = vunpack.c.l.b16 %v410
          %v671 = vunpack.c.h.b16 %v410
          %v672 = vunpack.c.l.b16 %v411
          %v673 = vunpack.c.h.b16 %v411
          %v674 = vunpack.c.l.b16 %v412
          %v675 = vunpack.c.h.b16 %v412
          %v676 = vunpack.c.l.b16 %v413
          %v677 = vunpack.c.h.b16 %v413
          %v678 = vunpack.c.l.b16 %v414
          %v679 = vunpack.c.h.b16 %v414
          %v680 = vunpack.c.l.b16 %v415
          %v681 = vunpack.c.h.b16 %v415
          %v682 = vunpack.c.l.b16 %v416
          %v683 = vunpack.c.h.b16 %v416
          %v684 = vunpack.c.l.b16 %v417
          %v685 = vunpack.c.h.b16 %v417
          %v686 = vunpack.c.l.b16 %v418
          %v687 = vunpack.c.h.b16 %v418
          %v688 = vunpack.c.l.b16 %v419
          %v689 = vunpack.c.h.b16 %v419
          %v690 = vunpack.c.l.b16 %v420
          %v691 = vunpack.c.h.b16 %v420
          %v692 = vunpack.c.l.b16 %v421
          %v693 = vunpack.c.h.b16 %v421
          %v694 = vunpack.c.l.b16 %v422
          %v695 = vunpack.c.h.b16 %v422
          %v696 = vunpack.c.l.b16 %v423
          %v697 = vunpack.c.h.b16 %v423
          %v698 = vunpack.c.l.b16 %v424
          %v699 = vunpack.c.h.b16 %v424
          %v700 = vunpack.c.l.b16 %v425
          %v701 = vunpack.c.h.b16 %v425
          %v702 = vunpack.c.l.b16 %v426
          %v703 = vunpack.c.h.b16 %v426
          %v704 = vunpack.c.l.b16 %v427
          %v705 = vunpack.c.h.b16 %v427
          %v706 = vunpack.c.l.b16 %v428
          %v707 = vunpack.c.h.b16 %v428
          %v708 = vunpack.c.l.b16 %v429
          %v709 = vunpack.c.h.b16 %v429
          %v710 = vunpack.c.l.b16 %v430
          %v711 = vunpack.c.h.b16 %v430
          %v712 = vunpack.c.l.b16 %v431
          %v713 = vunpack.c.h.b16 %v431
          %v714 = vunpack.c.l.b16 %v432
          %v715 = vunpack.c.h.b16 %v432
          %v716 = vunpack.c.l.b16 %v433
          %v717 = vunpack.c.h.b16 %v433
          %v718 = vunpack.c.l.b16 %v434
          %v719 = vunpack.c.h.b16 %v434
          %v720 = vunpack.c.l.b16 %v435
          %v721 = vunpack.c.h.b16 %v435
          %v722 = vunpack.c.l.b16 %v436
          %v723 = vunpack.c.h.b16 %v436
          %v724 = vunpack.c.l.b16 %v437
          %v725 = vunpack.c.h.b16 %v437
          %v726 = vunpack.c.l.b16 %v438
          %v727 = vunpack.c.h.b16 %v438
          %v728 = vunpack.c.l.b16 %v439
          %v729 = vunpack.c.h.b16 %v439
          %v730 = vunpack.c.l.b16 %v440
          %v731 = vunpack.c.h.b16 %v440
          %v732 = vunpack.c.l.b16 %v441
          %v733 = vunpack.c.h.b16 %v441
          %v734 = vunpack.c.l.b16 %v442
          %v735 = vunpack.c.h.b16 %v442
          %v736 = vunpack.c.l.b16 %v443
          %v737 = vunpack.c.h.b16 %v443
          %v738 = vunpack.c.l.b16 %v444
          %v739 = vunpack.c.h.b16 %v444
          %v740 = vunpack.c.l.b16 %v445
          %v741 = vunpack.c.h.b16 %v445
          %v742 = vunpack.c.l.b16 %v446
          %v743 = vunpack.c.h.b16 %v446
          %v744 = vunpack.c.l.b16 %v447
          %v745 = vunpack.c.h.b16 %v447
          %v746 = vunpack.c.l.b16 %v448
          %v747 = vunpack.c.h.b16 %v448
          %v748 = vunpack.c.l.b16 %v449
          %v749 = vunpack.c.h.b16 %v449
          %v750 = vunpack.c.l.b16 %v450
          %v751 = vunpack.c.h.b16 %v450
          %v752 = vunpack.c.l.b16 %v451
          %v753 = vunpack.c.h.b16 %v451
          %v754 = vunpack.c.l.b16 %v452
          %v755 = vunpack.c.h.b16 %v452
          %v756 = vunpack.c.l.b16 %v453
          %v757 = vunpack.c.h.b16 %v453
          %v758 = vunpack.c.l.b16 %v454
          %v759 = vunpack.c.h.b16 %v454
          %v760 = vunpack.c.l.b16 %v455
          %v761 = vunpack.c.h.b16 %v455
          %v762 = vunpack.c.l.b16 %v456
          %v763 = vunpack.c.h.b16 %v456
          %v764 = vunpack.c.l.b16 %v457
          %v765 = vunpack.c.h.b16 %v457
          %v766 = vunpack.c.l.b16 %v458
          %v767 = vunpack.c.h.b16 %v458
          %v768 = vunpack.c.l.b16 %v459
          %v769 = vunpack.c.h.b16 %v459
          %v770 = vunpack.c.l.b16 %v460
          %v771 = vunpack.c.h.b16 %v460
          %v772 = vunpack.c.l.b16 %v461
          %v773 = vunpack.c.h.b16 %v461
          %v774 = vunpack.c.l.b16 %v462
          %v775 = vunpack.c.h.b16 %v462
          %v776 = vunpack.c.l.b16 %v463
          %v777 = vunpack.c.h.b16 %v463
          %v778 = vunpack.c.l.b16 %v464
          %v779 = vunpack.c.h.b16 %v464
          %v780 = vunpack.c.l.b16 %v465
          %v781 = vunpack.c.h.b16 %v465
          %v782 = vunpack.c.l.b16 %v466
          %v783 = vunpack.c.h.b16 %v466
          %v784 = vunpack.c.l.b16 %v467
          %v785 = vunpack.c.h.b16 %v467
          %v786 = vunpack.c.l.b16 %v468
          %v787 = vunpack.c.h.b16 %v468
          %v788 = vunpack.c.l.b16 %v469
          %v789 = vunpack.c.h.b16 %v469
          %v790 = vunpack.c.l.b16 %v470
          %v791 = vunpack.c.h.b16 %v470
          %v792 = vunpack.c.l.b16 %v471
          %v793 = vunpack.c.h.b16 %v471
          %v794 = vunpack.c.l.b16 %v472
          %v795 = vunpack.c.h.b16 %v472
          %v796 = vunpack.c.l.b16 %v473
          %v797 = vunpack.c.h.b16 %v473
          %v798 = vunpack.c.l.b16 %v474
          %v799 = vunpack.c.h.b16 %v474
          %v800 = vunpack.c.l.b16 %v475
          %v801 = vunpack.c.h.b16 %v475
          %v802 = vunpack.c.l.b16 %v476
          %v803 = vunpack.c.h.b16 %v476
          %v804 = vunpack.c.l.b16 %v477
          %v805 = vunpack.c.h.b16 %v477
          %v806 = vunpack.c.l.b16 %v478
          %v807 = vunpack.c.h.b16 %v478
          %v808 = vunpack.c.l.b16 %v479
          %v809 = vunpack.c.h.b16 %v479
          %v810 = vunpack.c.l.b16 %v480
          %v811 = vunpack.c.h.b16 %v480
          %v812 = vunpack.c.l.b16 %v481
          %v813 = vunpack.c.h.b16 %v481
          %v814 = vunpack.c.l.b16 %v482
          %v815 = vunpack.c.h.b16 %v482
          %v816 = vunpack.c.l.b16 %v483
          %v817 = vunpack.c.h.b16 %v483
          %v818 = vunpack.c.l.b16 %v484
          %v819 = vunpack.c.h.b16 %v484
          %v820 = vunpack.c.l.b16 %v485
          %v821 = vunpack.c.h.b16 %v485
          %v822 = vunpack.c.l.b16 %v486
          %v823 = vunpack.c.h.b16 %v486
          %v824 = vunpack.c.l.b16 %v487
          %v825 = vunpack.c.h.b16 %v487
          %v826 = vunpack.c.l.b16 %v488
          %v827 = vunpack.c.h.b16 %v488
          %v828 = vunpack.c.l.b16 %v489
          %v829 = vunpack.c.h.b16 %v489
          %v830 = vunpack.c.l.b16 %v490
          %v831 = vunpack.c.h.b16 %v490
          %v832 = vunpack.c.l.b16 %v491
          %v833 = vunpack.c.h.b16 %v491
          %v834 = vunpack.c.l.b16 %v492
          %v835 = vunpack.c.h.b16 %v492
          %v836 = vunpack.c.l.b16 %v493
          %v837 = vunpack.c.h.b16 %v493
          %v838 = vunpack.c.l.b16 %v494
          %v839 = vunpack.c.h.b16 %v494
          %v840 = vunpack.c.l.b16 %v495
          %v841 = vunpack.c.h.b16 %v495
          %v842 = vunpack.c.l.b16 %v496
          %v843 = vunpack.c.h.b16 %v496
          %v844 = vunpack.c.l.b16 %v497
          %v845 = vunpack.c.h.b16 %v497
          %v846 = vunpack.c.l.b16 %v498
          %v847 = vunpack.c.h.b16 %v498
          %v848 = vunpack.c.l.b16 %v499
          %v849 = vunpack.c.h.b16 %v499
          %v850 = vunpack.c.l.b16 %v500
          %v851 = vunpack.c.h.b16 %v500
          %v852 = vunpack.c.l.b16 %v501
          %v853 = vunpack.c.h.b16 %v501
          %v854 = vunpack.c.l.b16 %v502
          %v855 = vunpack.c.h.b16 %v502
          %v856 = vunpack.c.l.b16 %v503
          %v857 = vunpack.c.h.b16 %v503
          %v858 = vunpack.c.l.b16 %v504
          %v859 = vunpack.c.h.b16 %v504
          %v860 = vunpack.c.l.b16 %v505
          %v861 = vunpack.c.h.b16 %v505
          %v862 = vunpack.c.l.b16 %v506
          %v863 = vunpack.c.h.b16 %v506
          %v864 = vunpack.c.l.b16 %v507
          %v865 = vunpack.c.h.b16 %v507
          %v866 = vunpack.c.l.b16 %v508
          %v867 = vunpack.c.h.b16 %v508
          %v868 = vunpack.c.l.b16 %v509
          %v869 = vunpack.c.h.b16 %v509
          %v870 = vunpack.c.l.b16 %v510
          %v871 = vunpack.c.h.b16 %v510
          %v872 = vunpack.c.l.b16 %v511
          %v873 = vunpack.c.h.b16 %v511
          %v874 = vunpack.c.l.b16 %v512
          %v875 = vunpack.c.h.b16 %v512
          %v876 = vunpack.c.l.b16 %v513
          %v877 = vunpack.c.h.b16 %v513
          %v878 = vunpack.c.l.b16 %v514
          %v879 = vunpack.c.h.b16 %v514
          %v880 = vunpack.c.l.b16 %v515
          %v881 = vunpack.c.h.b16 %v515
          %v882 = vunpack.c.l.b16 %v516
          %v883 = vunpack.c.h.b16 %v516
          %v884 = vunpack.c.l.b16 %v517
          %v885 = vunpack.c.h.b16 %v517
          %v886 = vunpack.c.l.b16 %v518
          %v887 = vunpack.c.h.b16 %v518
          %v888 = vunpack.c.l.b16 %v519
          %v889 = vunpack.c.h.b16 %v519
          %v890 = vunpack.c.l.b16 %v520
          %v891 = vunpack.c.h.b16 %v520
          %v892 = vunpack.c.l.b16 %v521
          %v893 = vunpack.c.h.b16 %v521
          %v894 = vunpack.c.l.b16 %v522
          %v895 = vunpack.c.h.b16 %v522
          %v896 = vunpack.c.l.b16 %v523
          %v897 = vunpack.c.h.b16 %v523
          %v898 = vunpack.c.l.b16 %v524
          %v899 = vunpack.c.h.b16 %v524
          %v900 = vunpack.c.l.b16 %v525
          %v901 = vunpack.c.h.b16 %v525
          %v902 = vunpack.c.l.b16 %v526
          %v903 = vunpack.c.h.b16 %v526
          %v904 = vunpack.c.l.b16 %v527
          %v905 = vunpack.c.h.b16 %v527
          %v906 = vunpack.c.l.b16 %v528
          %v907 = vunpack.c.h.b16 %v528
          %v908 = vunpack.c.l.b16 %v529
          %v909 = vunpack.c.h.b16 %v529
          %v910 = vunpack.c.l.b16 %v530
          %v911 = vunpack.c.h.b16 %v530
          %v912 = vunpack.c.l.b16 %v531
          %v913 = vunpack.c.h.b16 %v531
          %v914 = vunpack.c.l.b16 %v532
          %v915 = vunpack.c.h.b16 %v532
          %v916 = vunpack.c.l.b16 %v533
          %v917 = vunpack.c.h.b16 %v533
          %v918 = vpack.c.b16 %v666, %v662
          %v919 = vpack.c.b16 %v667, %v663
          %v920 = vpack.c.b16 %v668, %v664
          %v921 = vpack.c.b16 %v669, %v665
          %v922 = vpack.c.b16 %v674, %v670
          %v923 = vpack.c.b16 %v675, %v671
          %v924 = vpack.c.b16 %v676, %v672
          %v925 = vpack.c.b16 %v677, %v673
          %v926 = vpack.c.b16 %v682, %v678
          %v927 = vpack.c.b16 %v683, %v679
          %v928 = vpack.c.b16 %v684, %v680
          %v929 = vpack.c.b16 %v685, %v681
          %v930 = vpack.c.b16 %v690, %v686
          %v931 = vpack.c.b16 %v691, %v687
          %v932 = vpack.c.b16 %v692, %v688
          %v933 = vpack.c.b16 %v693, %v689
          %v934 = vpack.c.b16 %v698, %v694
          %v935 = vpack.c.b16 %v699, %v695
          %v936 = vpack.c.b16 %v700, %v696
          %v937 = vpack.c.b16 %v701, %v697
          %v938 = vpack.c.b16 %v706, %v702
          %v939 = vpack.c.b16 %v707, %v703
          %v940 = vpack.c.b16 %v708, %v704
          %v941 = vpack.c.b16 %v709, %v705
          %v942 = vpack.c.b16 %v714, %v710
          %v943 = vpack.c.b16 %v715, %v711
          %v944 = vpack.c.b16 %v716, %v712
          %v945 = vpack.c.b16 %v717, %v713
          %v946 = vpack.c.b16 %v722, %v718
          %v947 = vpack.c.b16 %v723, %v719
          %v948 = vpack.c.b16 %v724, %v720
          %v949 = vpack.c.b16 %v725, %v721
          %v950 = vpack.c.b16 %v730, %v726
          %v951 = vpack.c.b16 %v731, %v727
          %v952 = vpack.c.b16 %v732, %v728
          %v953 = vpack.c.b16 %v733, %v729
          %v954 = vpack.c.b16 %v738, %v734
          %v955 = vpack.c.b16 %v739, %v735
          %v956 = vpack.c.b16 %v740, %v736
          %v957 = vpack.c.b16 %v741, %v737
          %v958 = vpack.c.b16 %v746, %v742
          %v959 = vpack.c.b16 %v747, %v743
          %v960 = vpack.c.b16 %v748, %v744
          %v961 = vpack.c.b16 %v749, %v745
          %v962 = vpack.c.b16 %v754, %v750
          %v963 = vpack.c.b16 %v755, %v751
          %v964 = vpack.c.b16 %v756, %v752
          %v965 = vpack.c.b16 %v757, %v753
          %v966 = vpack.c.b16 %v762, %v758
          %v967 = vpack.c.b16 %v763, %v759
          %v968 = vpack.c.b16 %v764, %v760
          %v969 = vpack.c.b16 %v765, %v761
          %v970 = vpack.c.b16 %v770, %v766
          %v971 = vpack.c.b16 %v771, %v767
          %v972 = vpack.c.b16 %v772, %v768
          %v973 = vpack.c.b16 %v773, %v769
          %v974 = vpack.c.b16 %v778, %v774
          %v975 = vpack.c.b16 %v779, %v775
          %v976 = vpack.c.b16 %v780, %v776
          %v977 = vpack.c.b16 %v781, %v777
          %v978 = vpack.c.b16 %v786, %v782
          %v979 = vpack.c.b16 %v787, %v783
          %v980 = vpack.c.b16 %v788, %v784
          %v981 = vpack.c.b16 %v789, %v785
          %v982 = vpack.c.b16 %v794, %v790
          %v983 = vpack.c.b16 %v795, %v791
          %v984 = vpack.c.b16 %v796, %v792
          %v985 = vpack.c.b16 %v797, %v793
          %v986 = vpack.c.b16 %v802, %v798
          %v987 = vpack.c.b16 %v803, %v799
          %v988 = vpack.c.b16 %v804, %v800
          %v989 = vpack.c.b16 %v805, %v801
          %v990 = vpack.c.b16 %v810, %v806
          %v991 = vpack.c.b16 %v811, %v807
          %v992 = vpack.c.b16 %v812, %v808
          %v993 = vpack.c.b16 %v813, %v809
          %v994 = vpack.c.b16 %v818, %v814
          %v995 = vpack.c.b16 %v819, %v815
          %v996 = vpack.c.b16 %v820, %v816
          %v997 = vpack.c.b16 %v821, %v817
          %v998 = vpack.c.b16 %v826, %v822
          %v999 = vpack.c.b16 %v827, %v823
          %v1000 = vpack.c.b16 %v828, %v824
          %v1001 = vpack.c.b16 %v829, %v825
          %v1002 = vpack.c.b16 %v834, %v830
          %v1003 = vpack.c.b16 %v835, %v831
          %v1004 = vpack.c.b16 %v836, %v832
          %v1005 = vpack.c.b16 %v837, %v833
          %v1006 = vpack.c.b16 %v842, %v838
          %v1007 = vpack.c.b16 %v843, %v839
          %v1008 = vpack.c.b16 %v844, %v840
          %v1009 = vpack.c.b16 %v845, %v841
          %v1010 = vpack.c.b16 %v850, %v846
          %v1011 = vpack.c.b16 %v851, %v847
          %v1012 = vpack.c.b16 %v852, %v848
          %v1013 = vpack.c.b16 %v853, %v849
          %v1014 = vpack.c.b16 %v858, %v854
          %v1015 = vpack.c.b16 %v859, %v855
          %v1016 = vpack.c.b16 %v860, %v856
          %v1017 = vpack.c.b16 %v861, %v857
          %v1018 = vpack.c.b16 %v866, %v862
          %v1019 = vpack.c.b16 %v867, %v863
          %v1020 = vpack.c.b16 %v868, %v864
          %v1021 = vpack.c.b16 %v869, %v865
          %v1022 = vpack.c.b16 %v874, %v870
          %v1023 = vpack.c.b16 %v875, %v871
          %v1024 = vpack.c.b16 %v876, %v872
          %v1025 = vpack.c.b16 %v877, %v873
          %v1026 = vpack.c.b16 %v882, %v878
          %v1027 = vpack.c.b16 %v883, %v879
          %v1028 = vpack.c.b16 %v884, %v880
          %v1029 = vpack.c.b16 %v885, %v881
          %v1030 = vpack.c.b16 %v890, %v886
          %v1031 = vpack.c.b16 %v891, %v887
          %v1032 = vpack.c.b16 %v892, %v888
          %v1033 = vpack.c.b16 %v893, %v889
          %v1034 = vpack.c.b16 %v898, %v894
          %v1035 = vpack.c.b16 %v899, %v895
          %v1036 = vpack.c.b16 %v900, %v896
          %v1037 = vpack.c.b16 %v901, %v897
          %v1038 = vpack.c.b16 %v906, %v902
          %v1039 = vpack.c.b16 %v907, %v903
          %v1040 = vpack.c.b16 %v908, %v904
          %v1041 = vpack.c.b16 %v909, %v905
          %v1042 = vpack.c.b16 %v914, %v910
          %v1043 = vpack.c.b16 %v915, %v911
          %v1044 = vpack.c.b16 %v916, %v912
          %v1045 = vpack.c.b16 %v917, %v913
          %1174 = vmatprep.subr.bf16.mxu0 %v947
          %1175 = vmatpush1.bf16.msra.mxu0 %v946
          %1176 = vmatprep.subr.bf16.mxu0 %v943
          %1177 = vmatpush1.bf16.msra.mxu0 %v942
          %1178 = vmatprep.subr.bf16.mxu0 %v939
          %1179 = vmatpush1.bf16.msra.mxu0 %v938
          %1180 = vmatprep.subr.bf16.mxu0 %v935
          %1181 = vmatpush1.bf16.msra.mxu0 %v934
          %1182 = vmatprep.subr.bf16.mxu0 %v931
          %1183 = vmatpush1.bf16.msra.mxu0 %v930
          %1184 = vmatprep.subr.bf16.mxu0 %v927
          %1185 = vmatpush1.bf16.msra.mxu0 %v926
          %1186 = vmatprep.subr.bf16.mxu0 %v923
          %1187 = vmatpush1.bf16.msra.mxu0 %v922
          %1188 = vmatprep.subr.bf16.mxu0 %v919
          %1189 = vmatpush1.bf16.msra.mxu0 %v918
          %1190 = vmatprep.subr.bf16.mxu0 %v979
          %1191 = vmatpush2.bf16.msra.mxu0 %v978
          %1192 = vmatprep.subr.bf16.mxu0 %v975
          %1193 = vmatpush2.bf16.msra.mxu0 %v974
          %1194 = vmatprep.subr.bf16.mxu0 %v971
          %1195 = vmatpush2.bf16.msra.mxu0 %v970
          %1196 = vmatprep.subr.bf16.mxu0 %v967
          %1197 = vmatpush2.bf16.msra.mxu0 %v966
          %1198 = vmatprep.subr.bf16.mxu0 %v963
          %1199 = vmatpush2.bf16.msra.mxu0 %v962
          %1200 = vmatprep.subr.bf16.mxu0 %v959
          %1201 = vmatpush2.bf16.msra.mxu0 %v958
          %1202 = vmatprep.subr.bf16.mxu0 %v955
          %1203 = vmatpush2.bf16.msra.mxu0 %v954
          %1204 = vmatprep.subr.bf16.mxu0 %v951
          %1205 = vmatpush2.bf16.msra.mxu0 %v950
          %1206 = vmatprep.mubr.bf16.mxu0 %v395
          %1207 = vmatmul.mubr.bf16.gmra.mxu0 %v394
          %v1208 = vpop.f32.mrf.mxu0
          %v1209 = vadd.f32 0.0, %v1208
          %v1210 = vpop.f32.mrf.mxu0
          %v1211 = vadd.f32 0.0, %v1210
          %v1212 = vpop.f32.mrf.mxu0
          %v1213 = vpop.f32.mrf.mxu0
          %1214 = vdwg.mxu0
          %1215 = vmatprep.subr.bf16.mxu0 %v1011
          %1216 = vmatpush1.bf16.msra.mxu0 %v1010
          %1217 = vmatprep.subr.bf16.mxu0 %v1007
          %1218 = vmatpush1.bf16.msra.mxu0 %v1006
          %1219 = vmatprep.subr.bf16.mxu0 %v1003
          %1220 = vmatpush1.bf16.msra.mxu0 %v1002
          %1221 = vmatprep.subr.bf16.mxu0 %v999
          %1222 = vmatpush1.bf16.msra.mxu0 %v998
          %1223 = vmatprep.subr.bf16.mxu0 %v995
          %1224 = vmatpush1.bf16.msra.mxu0 %v994
          %1225 = vmatprep.subr.bf16.mxu0 %v991
          %1226 = vmatpush1.bf16.msra.mxu0 %v990
          %1227 = vmatprep.subr.bf16.mxu0 %v987
          %1228 = vmatpush1.bf16.msra.mxu0 %v986
          %1229 = vmatprep.subr.bf16.mxu0 %v983
          %1230 = vmatpush1.bf16.msra.mxu0 %v982
          %1231 = vmatprep.subr.bf16.mxu0 %v1043
          %1232 = vmatpush2.bf16.msra.mxu0 %v1042
          %1233 = vmatprep.subr.bf16.mxu0 %v1039
          %1234 = vmatpush2.bf16.msra.mxu0 %v1038
          %1235 = vmatprep.subr.bf16.mxu0 %v1035
          %1236 = vmatpush2.bf16.msra.mxu0 %v1034
          %1237 = vmatprep.subr.bf16.mxu0 %v1031
          %1238 = vmatpush2.bf16.msra.mxu0 %v1030
          %1239 = vmatprep.subr.bf16.mxu0 %v1027
          %1240 = vmatpush2.bf16.msra.mxu0 %v1026
          %1241 = vmatprep.subr.bf16.mxu0 %v1023
          %1242 = vmatpush2.bf16.msra.mxu0 %v1022
          %1243 = vmatprep.subr.bf16.mxu0 %v1019
          %1244 = vmatpush2.bf16.msra.mxu0 %v1018
          %1245 = vmatprep.subr.bf16.mxu0 %v1015
          %1246 = vmatpush2.bf16.msra.mxu0 %v1014
          %1247 = vmatprep.mubr.bf16.mxu0 %v397
          %1248 = vmatmul.mubr.bf16.gmra.mxu0 %v396
          %v1249 = vpop.f32.mrf.mxu0
          %v1250 = vadd.f32 %v1209, %v1249
          %v1251 = vpop.f32.mrf.mxu0
          %v1252 = vadd.f32 %v1211, %v1251
          %v1253 = vpop.f32.mrf.mxu0
          %v1254 = vpop.f32.mrf.mxu0
          %1255 = vdwg.mxu0
          %1256 = vmatprep.subr.bf16.mxu0 %v949
          %1257 = vmatpush1.bf16.msra.mxu0 %v948
          %1258 = vmatprep.subr.bf16.mxu0 %v945
          %1259 = vmatpush1.bf16.msra.mxu0 %v944
          %1260 = vmatprep.subr.bf16.mxu0 %v941
          %1261 = vmatpush1.bf16.msra.mxu0 %v940
          %1262 = vmatprep.subr.bf16.mxu0 %v937
          %1263 = vmatpush1.bf16.msra.mxu0 %v936
          %1264 = vmatprep.subr.bf16.mxu0 %v933
          %1265 = vmatpush1.bf16.msra.mxu0 %v932
          %1266 = vmatprep.subr.bf16.mxu0 %v929
          %1267 = vmatpush1.bf16.msra.mxu0 %v928
          %1268 = vmatprep.subr.bf16.mxu0 %v925
          %1269 = vmatpush1.bf16.msra.mxu0 %v924
          %1270 = vmatprep.subr.bf16.mxu0 %v921
          %1271 = vmatpush1.bf16.msra.mxu0 %v920
          %1272 = vmatprep.subr.bf16.mxu0 %v981
          %1273 = vmatpush2.bf16.msra.mxu0 %v980
          %1274 = vmatprep.subr.bf16.mxu0 %v977
          %1275 = vmatpush2.bf16.msra.mxu0 %v976
          %1276 = vmatprep.subr.bf16.mxu0 %v973
          %1277 = vmatpush2.bf16.msra.mxu0 %v972
          %1278 = vmatprep.subr.bf16.mxu0 %v969
          %1279 = vmatpush2.bf16.msra.mxu0 %v968
          %1280 = vmatprep.subr.bf16.mxu0 %v965
          %1281 = vmatpush2.bf16.msra.mxu0 %v964
          %1282 = vmatprep.subr.bf16.mxu0 %v961
          %1283 = vmatpush2.bf16.msra.mxu0 %v960
          %1284 = vmatprep.subr.bf16.mxu0 %v957
          %1285 = vmatpush2.bf16.msra.mxu0 %v956
          %1286 = vmatprep.subr.bf16.mxu0 %v953
          %1287 = vmatpush2.bf16.msra.mxu0 %v952
          %1288 = vmatprep.mubr.bf16.mxu0 %v395
          %1289 = vmatmul.mubr.bf16.gmra.mxu0 %v394
          %v1290 = vpop.f32.mrf.mxu0
          %v1291 = vadd.f32 0.0, %v1290
          %v1292 = vpop.f32.mrf.mxu0
          %v1293 = vadd.f32 0.0, %v1292
          %v1294 = vpop.f32.mrf.mxu0
          %v1295 = vpop.f32.mrf.mxu0
          %1296 = vdwg.mxu0
          %1297 = vmatprep.subr.bf16.mxu0 %v1013
          %1298 = vmatpush1.bf16.msra.mxu0 %v1012
          %1299 = vmatprep.subr.bf16.mxu0 %v1009
          %1300 = vmatpush1.bf16.msra.mxu0 %v1008
          %1301 = vmatprep.subr.bf16.mxu0 %v1005
          %1302 = vmatpush1.bf16.msra.mxu0 %v1004
          %1303 = vmatprep.subr.bf16.mxu0 %v1001
          %1304 = vmatpush1.bf16.msra.mxu0 %v1000
          %1305 = vmatprep.subr.bf16.mxu0 %v997
          %1306 = vmatpush1.bf16.msra.mxu0 %v996
          %1307 = vmatprep.subr.bf16.mxu0 %v993
          %1308 = vmatpush1.bf16.msra.mxu0 %v992
          %1309 = vmatprep.subr.bf16.mxu0 %v989
          %1310 = vmatpush1.bf16.msra.mxu0 %v988
          %1311 = vmatprep.subr.bf16.mxu0 %v985
          %1312 = vmatpush1.bf16.msra.mxu0 %v984
          %1313 = vmatprep.subr.bf16.mxu0 %v1045
          %1314 = vmatpush2.bf16.msra.mxu0 %v1044
          %1315 = vmatprep.subr.bf16.mxu0 %v1041
          %1316 = vmatpush2.bf16.msra.mxu0 %v1040
          %1317 = vmatprep.subr.bf16.mxu0 %v1037
          %1318 = vmatpush2.bf16.msra.mxu0 %v1036
          %1319 = vmatprep.subr.bf16.mxu0 %v1033
          %1320 = vmatpush2.bf16.msra.mxu0 %v1032
          %1321 = vmatprep.subr.bf16.mxu0 %v1029
          %1322 = vmatpush2.bf16.msra.mxu0 %v1028
          %1323 = vmatprep.subr.bf16.mxu0 %v1025
          %1324 = vmatpush2.bf16.msra.mxu0 %v1024
          %1325 = vmatprep.subr.bf16.mxu0 %v1021
          %1326 = vmatpush2.bf16.msra.mxu0 %v1020
          %1327 = vmatprep.subr.bf16.mxu0 %v1017
          %1328 = vmatpush2.bf16.msra.mxu0 %v1016
          %1329 = vmatprep.mubr.bf16.mxu0 %v397
          %1330 = vmatmul.mubr.bf16.gmra.mxu0 %v396
          %v1331 = vpop.f32.mrf.mxu0
          %v1332 = vadd.f32 %v1291, %v1331
          %v1333 = vpop.f32.mrf.mxu0
          %v1334 = vadd.f32 %v1293, %v1333
          %v1335 = vpop.f32.mrf.mxu0
          %v1336 = vpop.f32.mrf.mxu0
          %1337 = vdwg.mxu0
          %1338 = vst [vmem:[#allocation2] sm:$0xff] %v1250
          %1339 = vst [vmem:[#allocation2 + $0x8] sm:$0xff] %v1252
          %1340 = vst [vmem:[#allocation2 + $0x10] sm:$0xff] %v1332
          %1341 = vst [vmem:[#allocation2 + $0x18] sm:$0xff] %v1334
          %v1342 = vld [vmem:[%s5] sm:$0xff]
          %v1343 = vld [vmem:[%s5 + $0x8] sm:$0xff]
          %v1344 = vld [vmem:[%s5 + $0x10] sm:$0xff]
          %v1345 = vld [vmem:[%s5 + $0x18] sm:$0xff]
          %v1346 = vld [vmem:[%s5 + $0x20] sm:$0xff]
          %v1347 = vld [vmem:[%s5 + $0x28] sm:$0xff]
          %v1348 = vld [vmem:[%s5 + $0x30] sm:$0xff]
          %v1349 = vld [vmem:[%s5 + $0x38] sm:$0xff]
          %v1350 = vld [vmem:[%s5 + $0x40] sm:$0xff]
          %v1351 = vld [vmem:[%s5 + $0x48] sm:$0xff]
          %v1352 = vld [vmem:[%s5 + $0x50] sm:$0xff]
          %v1353 = vld [vmem:[%s5 + $0x58] sm:$0xff]
          %v1354 = vld [vmem:[%s5 + $0x60] sm:$0xff]
          %v1355 = vld [vmem:[%s5 + $0x68] sm:$0xff]
          %v1356 = vld [vmem:[%s5 + $0x70] sm:$0xff]
          %v1357 = vld [vmem:[%s5 + $0x78] sm:$0xff]
          %v1358 = vld [vmem:[%s5 + $0x80] sm:$0xff]
          %v1359 = vld [vmem:[%s5 + $0x88] sm:$0xff]
          %v1360 = vld [vmem:[%s5 + $0x90] sm:$0xff]
          %v1361 = vld [vmem:[%s5 + $0x98] sm:$0xff]
          %v1362 = vld [vmem:[%s5 + $0xa0] sm:$0xff]
          %v1363 = vld [vmem:[%s5 + $0xa8] sm:$0xff]
          %v1364 = vld [vmem:[%s5 + $0xb0] sm:$0xff]
          %v1365 = vld [vmem:[%s5 + $0xb8] sm:$0xff]
          %v1366 = vld [vmem:[%s5 + $0xc0] sm:$0xff]
          %v1367 = vld [vmem:[%s5 + $0xc8] sm:$0xff]
          %v1368 = vld [vmem:[%s5 + $0xd0] sm:$0xff]
          %v1369 = vld [vmem:[%s5 + $0xd8] sm:$0xff]
          %v1370 = vld [vmem:[%s5 + $0xe0] sm:$0xff]
          %v1371 = vld [vmem:[%s5 + $0xe8] sm:$0xff]
          %v1372 = vld [vmem:[%s5 + $0xf0] sm:$0xff]
          %v1373 = vld [vmem:[%s5 + $0xf8] sm:$0xff]
          %v1374 = vld [vmem:[%s5 + $0x100] sm:$0xff]
          %v1375 = vld [vmem:[%s5 + $0x108] sm:$0xff]
          %v1376 = vld [vmem:[%s5 + $0x110] sm:$0xff]
          %v1377 = vld [vmem:[%s5 + $0x118] sm:$0xff]
          %v1378 = vld [vmem:[%s5 + $0x120] sm:$0xff]
          %v1379 = vld [vmem:[%s5 + $0x128] sm:$0xff]
          %v1380 = vld [vmem:[%s5 + $0x130] sm:$0xff]
          %v1381 = vld [vmem:[%s5 + $0x138] sm:$0xff]
          %v1382 = vld [vmem:[%s5 + $0x140] sm:$0xff]
          %v1383 = vld [vmem:[%s5 + $0x148] sm:$0xff]
          %v1384 = vld [vmem:[%s5 + $0x150] sm:$0xff]
          %v1385 = vld [vmem:[%s5 + $0x158] sm:$0xff]
          %v1386 = vld [vmem:[%s5 + $0x160] sm:$0xff]
          %v1387 = vld [vmem:[%s5 + $0x168] sm:$0xff]
          %v1388 = vld [vmem:[%s5 + $0x170] sm:$0xff]
          %v1389 = vld [vmem:[%s5 + $0x178] sm:$0xff]
          %v1390 = vld [vmem:[%s5 + $0x180] sm:$0xff]
          %v1391 = vld [vmem:[%s5 + $0x188] sm:$0xff]
          %v1392 = vld [vmem:[%s5 + $0x190] sm:$0xff]
          %v1393 = vld [vmem:[%s5 + $0x198] sm:$0xff]
          %v1394 = vld [vmem:[%s5 + $0x1a0] sm:$0xff]
          %v1395 = vld [vmem:[%s5 + $0x1a8] sm:$0xff]
          %v1396 = vld [vmem:[%s5 + $0x1b0] sm:$0xff]
          %v1397 = vld [vmem:[%s5 + $0x1b8] sm:$0xff]
          %v1398 = vld [vmem:[%s5 + $0x1c0] sm:$0xff]
          %v1399 = vld [vmem:[%s5 + $0x1c8] sm:$0xff]
          %v1400 = vld [vmem:[%s5 + $0x1d0] sm:$0xff]
          %v1401 = vld [vmem:[%s5 + $0x1d8] sm:$0xff]
          %v1402 = vld [vmem:[%s5 + $0x1e0] sm:$0xff]
          %v1403 = vld [vmem:[%s5 + $0x1e8] sm:$0xff]
          %v1404 = vld [vmem:[%s5 + $0x1f0] sm:$0xff]
          %v1405 = vld [vmem:[%s5 + $0x1f8] sm:$0xff]
          %v1406 = vld [vmem:[%s5 + $0x200] sm:$0xff]
          %v1407 = vld [vmem:[%s5 + $0x208] sm:$0xff]
          %v1408 = vld [vmem:[%s5 + $0x210] sm:$0xff]
          %v1409 = vld [vmem:[%s5 + $0x218] sm:$0xff]
          %v1410 = vld [vmem:[%s5 + $0x220] sm:$0xff]
          %v1411 = vld [vmem:[%s5 + $0x228] sm:$0xff]
          %v1412 = vld [vmem:[%s5 + $0x230] sm:$0xff]
          %v1413 = vld [vmem:[%s5 + $0x238] sm:$0xff]
          %v1414 = vld [vmem:[%s5 + $0x240] sm:$0xff]
          %v1415 = vld [vmem:[%s5 + $0x248] sm:$0xff]
          %v1416 = vld [vmem:[%s5 + $0x250] sm:$0xff]
          %v1417 = vld [vmem:[%s5 + $0x258] sm:$0xff]
          %v1418 = vld [vmem:[%s5 + $0x260] sm:$0xff]
          %v1419 = vld [vmem:[%s5 + $0x268] sm:$0xff]
          %v1420 = vld [vmem:[%s5 + $0x270] sm:$0xff]
          %v1421 = vld [vmem:[%s5 + $0x278] sm:$0xff]
          %v1422 = vld [vmem:[%s5 + $0x280] sm:$0xff]
          %v1423 = vld [vmem:[%s5 + $0x288] sm:$0xff]
          %v1424 = vld [vmem:[%s5 + $0x290] sm:$0xff]
          %v1425 = vld [vmem:[%s5 + $0x298] sm:$0xff]
          %v1426 = vld [vmem:[%s5 + $0x2a0] sm:$0xff]
          %v1427 = vld [vmem:[%s5 + $0x2a8] sm:$0xff]
          %v1428 = vld [vmem:[%s5 + $0x2b0] sm:$0xff]
          %v1429 = vld [vmem:[%s5 + $0x2b8] sm:$0xff]
          %v1430 = vld [vmem:[%s5 + $0x2c0] sm:$0xff]
          %v1431 = vld [vmem:[%s5 + $0x2c8] sm:$0xff]
          %v1432 = vld [vmem:[%s5 + $0x2d0] sm:$0xff]
          %v1433 = vld [vmem:[%s5 + $0x2d8] sm:$0xff]
          %v1434 = vld [vmem:[%s5 + $0x2e0] sm:$0xff]
          %v1435 = vld [vmem:[%s5 + $0x2e8] sm:$0xff]
          %v1436 = vld [vmem:[%s5 + $0x2f0] sm:$0xff]
          %v1437 = vld [vmem:[%s5 + $0x2f8] sm:$0xff]
          %v1438 = vld [vmem:[%s5 + $0x300] sm:$0xff]
          %v1439 = vld [vmem:[%s5 + $0x308] sm:$0xff]
          %v1440 = vld [vmem:[%s5 + $0x310] sm:$0xff]
          %v1441 = vld [vmem:[%s5 + $0x318] sm:$0xff]
          %v1442 = vld [vmem:[%s5 + $0x320] sm:$0xff]
          %v1443 = vld [vmem:[%s5 + $0x328] sm:$0xff]
          %v1444 = vld [vmem:[%s5 + $0x330] sm:$0xff]
          %v1445 = vld [vmem:[%s5 + $0x338] sm:$0xff]
          %v1446 = vld [vmem:[%s5 + $0x340] sm:$0xff]
          %v1447 = vld [vmem:[%s5 + $0x348] sm:$0xff]
          %v1448 = vld [vmem:[%s5 + $0x350] sm:$0xff]
          %v1449 = vld [vmem:[%s5 + $0x358] sm:$0xff]
          %v1450 = vld [vmem:[%s5 + $0x360] sm:$0xff]
          %v1451 = vld [vmem:[%s5 + $0x368] sm:$0xff]
          %v1452 = vld [vmem:[%s5 + $0x370] sm:$0xff]
          %v1453 = vld [vmem:[%s5 + $0x378] sm:$0xff]
          %v1454 = vld [vmem:[%s5 + $0x380] sm:$0xff]
          %v1455 = vld [vmem:[%s5 + $0x388] sm:$0xff]
          %v1456 = vld [vmem:[%s5 + $0x390] sm:$0xff]
          %v1457 = vld [vmem:[%s5 + $0x398] sm:$0xff]
          %v1458 = vld [vmem:[%s5 + $0x3a0] sm:$0xff]
          %v1459 = vld [vmem:[%s5 + $0x3a8] sm:$0xff]
          %v1460 = vld [vmem:[%s5 + $0x3b0] sm:$0xff]
          %v1461 = vld [vmem:[%s5 + $0x3b8] sm:$0xff]
          %v1462 = vld [vmem:[%s5 + $0x3c0] sm:$0xff]
          %v1463 = vld [vmem:[%s5 + $0x3c8] sm:$0xff]
          %v1464 = vld [vmem:[%s5 + $0x3d0] sm:$0xff]
          %v1465 = vld [vmem:[%s5 + $0x3d8] sm:$0xff]
          %v1466 = vld [vmem:[%s5 + $0x3e0] sm:$0xff]
          %v1467 = vld [vmem:[%s5 + $0x3e8] sm:$0xff]
          %v1468 = vld [vmem:[%s5 + $0x3f0] sm:$0xff]
          %v1469 = vld [vmem:[%s5 + $0x3f8] sm:$0xff]
          %v1598 = vunpack.c.l.b16 %v1342
          %v1599 = vunpack.c.h.b16 %v1342
          %v1600 = vunpack.c.l.b16 %v1343
          %v1601 = vunpack.c.h.b16 %v1343
          %v1602 = vunpack.c.l.b16 %v1344
          %v1603 = vunpack.c.h.b16 %v1344
          %v1604 = vunpack.c.l.b16 %v1345
          %v1605 = vunpack.c.h.b16 %v1345
          %v1606 = vunpack.c.l.b16 %v1346
          %v1607 = vunpack.c.h.b16 %v1346
          %v1608 = vunpack.c.l.b16 %v1347
          %v1609 = vunpack.c.h.b16 %v1347
          %v1610 = vunpack.c.l.b16 %v1348
          %v1611 = vunpack.c.h.b16 %v1348
          %v1612 = vunpack.c.l.b16 %v1349
          %v1613 = vunpack.c.h.b16 %v1349
          %v1614 = vunpack.c.l.b16 %v1350
          %v1615 = vunpack.c.h.b16 %v1350
          %v1616 = vunpack.c.l.b16 %v1351
          %v1617 = vunpack.c.h.b16 %v1351
          %v1618 = vunpack.c.l.b16 %v1352
          %v1619 = vunpack.c.h.b16 %v1352
          %v1620 = vunpack.c.l.b16 %v1353
          %v1621 = vunpack.c.h.b16 %v1353
          %v1622 = vunpack.c.l.b16 %v1354
          %v1623 = vunpack.c.h.b16 %v1354
          %v1624 = vunpack.c.l.b16 %v1355
          %v1625 = vunpack.c.h.b16 %v1355
          %v1626 = vunpack.c.l.b16 %v1356
          %v1627 = vunpack.c.h.b16 %v1356
          %v1628 = vunpack.c.l.b16 %v1357
          %v1629 = vunpack.c.h.b16 %v1357
          %v1630 = vunpack.c.l.b16 %v1358
          %v1631 = vunpack.c.h.b16 %v1358
          %v1632 = vunpack.c.l.b16 %v1359
          %v1633 = vunpack.c.h.b16 %v1359
          %v1634 = vunpack.c.l.b16 %v1360
          %v1635 = vunpack.c.h.b16 %v1360
          %v1636 = vunpack.c.l.b16 %v1361
          %v1637 = vunpack.c.h.b16 %v1361
          %v1638 = vunpack.c.l.b16 %v1362
          %v1639 = vunpack.c.h.b16 %v1362
          %v1640 = vunpack.c.l.b16 %v1363
          %v1641 = vunpack.c.h.b16 %v1363
          %v1642 = vunpack.c.l.b16 %v1364
          %v1643 = vunpack.c.h.b16 %v1364
          %v1644 = vunpack.c.l.b16 %v1365
          %v1645 = vunpack.c.h.b16 %v1365
          %v1646 = vunpack.c.l.b16 %v1366
          %v1647 = vunpack.c.h.b16 %v1366
          %v1648 = vunpack.c.l.b16 %v1367
          %v1649 = vunpack.c.h.b16 %v1367
          %v1650 = vunpack.c.l.b16 %v1368
          %v1651 = vunpack.c.h.b16 %v1368
          %v1652 = vunpack.c.l.b16 %v1369
          %v1653 = vunpack.c.h.b16 %v1369
          %v1654 = vunpack.c.l.b16 %v1370
          %v1655 = vunpack.c.h.b16 %v1370
          %v1656 = vunpack.c.l.b16 %v1371
          %v1657 = vunpack.c.h.b16 %v1371
          %v1658 = vunpack.c.l.b16 %v1372
          %v1659 = vunpack.c.h.b16 %v1372
          %v1660 = vunpack.c.l.b16 %v1373
          %v1661 = vunpack.c.h.b16 %v1373
          %v1662 = vunpack.c.l.b16 %v1374
          %v1663 = vunpack.c.h.b16 %v1374
          %v1664 = vunpack.c.l.b16 %v1375
          %v1665 = vunpack.c.h.b16 %v1375
          %v1666 = vunpack.c.l.b16 %v1376
          %v1667 = vunpack.c.h.b16 %v1376
          %v1668 = vunpack.c.l.b16 %v1377
          %v1669 = vunpack.c.h.b16 %v1377
          %v1670 = vunpack.c.l.b16 %v1378
          %v1671 = vunpack.c.h.b16 %v1378
          %v1672 = vunpack.c.l.b16 %v1379
          %v1673 = vunpack.c.h.b16 %v1379
          %v1674 = vunpack.c.l.b16 %v1380
          %v1675 = vunpack.c.h.b16 %v1380
          %v1676 = vunpack.c.l.b16 %v1381
          %v1677 = vunpack.c.h.b16 %v1381
          %v1678 = vunpack.c.l.b16 %v1382
          %v1679 = vunpack.c.h.b16 %v1382
          %v1680 = vunpack.c.l.b16 %v1383
          %v1681 = vunpack.c.h.b16 %v1383
          %v1682 = vunpack.c.l.b16 %v1384
          %v1683 = vunpack.c.h.b16 %v1384
          %v1684 = vunpack.c.l.b16 %v1385
          %v1685 = vunpack.c.h.b16 %v1385
          %v1686 = vunpack.c.l.b16 %v1386
          %v1687 = vunpack.c.h.b16 %v1386
          %v1688 = vunpack.c.l.b16 %v1387
          %v1689 = vunpack.c.h.b16 %v1387
          %v1690 = vunpack.c.l.b16 %v1388
          %v1691 = vunpack.c.h.b16 %v1388
          %v1692 = vunpack.c.l.b16 %v1389
          %v1693 = vunpack.c.h.b16 %v1389
          %v1694 = vunpack.c.l.b16 %v1390
          %v1695 = vunpack.c.h.b16 %v1390
          %v1696 = vunpack.c.l.b16 %v1391
          %v1697 = vunpack.c.h.b16 %v1391
          %v1698 = vunpack.c.l.b16 %v1392
          %v1699 = vunpack.c.h.b16 %v1392
          %v1700 = vunpack.c.l.b16 %v1393
          %v1701 = vunpack.c.h.b16 %v1393
          %v1702 = vunpack.c.l.b16 %v1394
          %v1703 = vunpack.c.h.b16 %v1394
          %v1704 = vunpack.c.l.b16 %v1395
          %v1705 = vunpack.c.h.b16 %v1395
          %v1706 = vunpack.c.l.b16 %v1396
          %v1707 = vunpack.c.h.b16 %v1396
          %v1708 = vunpack.c.l.b16 %v1397
          %v1709 = vunpack.c.h.b16 %v1397
          %v1710 = vunpack.c.l.b16 %v1398
          %v1711 = vunpack.c.h.b16 %v1398
          %v1712 = vunpack.c.l.b16 %v1399
          %v1713 = vunpack.c.h.b16 %v1399
          %v1714 = vunpack.c.l.b16 %v1400
          %v1715 = vunpack.c.h.b16 %v1400
          %v1716 = vunpack.c.l.b16 %v1401
          %v1717 = vunpack.c.h.b16 %v1401
          %v1718 = vunpack.c.l.b16 %v1402
          %v1719 = vunpack.c.h.b16 %v1402
          %v1720 = vunpack.c.l.b16 %v1403
          %v1721 = vunpack.c.h.b16 %v1403
          %v1722 = vunpack.c.l.b16 %v1404
          %v1723 = vunpack.c.h.b16 %v1404
          %v1724 = vunpack.c.l.b16 %v1405
          %v1725 = vunpack.c.h.b16 %v1405
          %v1726 = vunpack.c.l.b16 %v1406
          %v1727 = vunpack.c.h.b16 %v1406
          %v1728 = vunpack.c.l.b16 %v1407
          %v1729 = vunpack.c.h.b16 %v1407
          %v1730 = vunpack.c.l.b16 %v1408
          %v1731 = vunpack.c.h.b16 %v1408
          %v1732 = vunpack.c.l.b16 %v1409
          %v1733 = vunpack.c.h.b16 %v1409
          %v1734 = vunpack.c.l.b16 %v1410
          %v1735 = vunpack.c.h.b16 %v1410
          %v1736 = vunpack.c.l.b16 %v1411
          %v1737 = vunpack.c.h.b16 %v1411
          %v1738 = vunpack.c.l.b16 %v1412
          %v1739 = vunpack.c.h.b16 %v1412
          %v1740 = vunpack.c.l.b16 %v1413
          %v1741 = vunpack.c.h.b16 %v1413
          %v1742 = vunpack.c.l.b16 %v1414
          %v1743 = vunpack.c.h.b16 %v1414
          %v1744 = vunpack.c.l.b16 %v1415
          %v1745 = vunpack.c.h.b16 %v1415
          %v1746 = vunpack.c.l.b16 %v1416
          %v1747 = vunpack.c.h.b16 %v1416
          %v1748 = vunpack.c.l.b16 %v1417
          %v1749 = vunpack.c.h.b16 %v1417
          %v1750 = vunpack.c.l.b16 %v1418
          %v1751 = vunpack.c.h.b16 %v1418
          %v1752 = vunpack.c.l.b16 %v1419
          %v1753 = vunpack.c.h.b16 %v1419
          %v1754 = vunpack.c.l.b16 %v1420
          %v1755 = vunpack.c.h.b16 %v1420
          %v1756 = vunpack.c.l.b16 %v1421
          %v1757 = vunpack.c.h.b16 %v1421
          %v1758 = vunpack.c.l.b16 %v1422
          %v1759 = vunpack.c.h.b16 %v1422
          %v1760 = vunpack.c.l.b16 %v1423
          %v1761 = vunpack.c.h.b16 %v1423
          %v1762 = vunpack.c.l.b16 %v1424
          %v1763 = vunpack.c.h.b16 %v1424
          %v1764 = vunpack.c.l.b16 %v1425
          %v1765 = vunpack.c.h.b16 %v1425
          %v1766 = vunpack.c.l.b16 %v1426
          %v1767 = vunpack.c.h.b16 %v1426
          %v1768 = vunpack.c.l.b16 %v1427
          %v1769 = vunpack.c.h.b16 %v1427
          %v1770 = vunpack.c.l.b16 %v1428
          %v1771 = vunpack.c.h.b16 %v1428
          %v1772 = vunpack.c.l.b16 %v1429
          %v1773 = vunpack.c.h.b16 %v1429
          %v1774 = vunpack.c.l.b16 %v1430
          %v1775 = vunpack.c.h.b16 %v1430
          %v1776 = vunpack.c.l.b16 %v1431
          %v1777 = vunpack.c.h.b16 %v1431
          %v1778 = vunpack.c.l.b16 %v1432
          %v1779 = vunpack.c.h.b16 %v1432
          %v1780 = vunpack.c.l.b16 %v1433
          %v1781 = vunpack.c.h.b16 %v1433
          %v1782 = vunpack.c.l.b16 %v1434
          %v1783 = vunpack.c.h.b16 %v1434
          %v1784 = vunpack.c.l.b16 %v1435
          %v1785 = vunpack.c.h.b16 %v1435
          %v1786 = vunpack.c.l.b16 %v1436
          %v1787 = vunpack.c.h.b16 %v1436
          %v1788 = vunpack.c.l.b16 %v1437
          %v1789 = vunpack.c.h.b16 %v1437
          %v1790 = vunpack.c.l.b16 %v1438
          %v1791 = vunpack.c.h.b16 %v1438
          %v1792 = vunpack.c.l.b16 %v1439
          %v1793 = vunpack.c.h.b16 %v1439
          %v1794 = vunpack.c.l.b16 %v1440
          %v1795 = vunpack.c.h.b16 %v1440
          %v1796 = vunpack.c.l.b16 %v1441
          %v1797 = vunpack.c.h.b16 %v1441
          %v1798 = vunpack.c.l.b16 %v1442
          %v1799 = vunpack.c.h.b16 %v1442
          %v1800 = vunpack.c.l.b16 %v1443
          %v1801 = vunpack.c.h.b16 %v1443
          %v1802 = vunpack.c.l.b16 %v1444
          %v1803 = vunpack.c.h.b16 %v1444
          %v1804 = vunpack.c.l.b16 %v1445
          %v1805 = vunpack.c.h.b16 %v1445
          %v1806 = vunpack.c.l.b16 %v1446
          %v1807 = vunpack.c.h.b16 %v1446
          %v1808 = vunpack.c.l.b16 %v1447
          %v1809 = vunpack.c.h.b16 %v1447
          %v1810 = vunpack.c.l.b16 %v1448
          %v1811 = vunpack.c.h.b16 %v1448
          %v1812 = vunpack.c.l.b16 %v1449
          %v1813 = vunpack.c.h.b16 %v1449
          %v1814 = vunpack.c.l.b16 %v1450
          %v1815 = vunpack.c.h.b16 %v1450
          %v1816 = vunpack.c.l.b16 %v1451
          %v1817 = vunpack.c.h.b16 %v1451
          %v1818 = vunpack.c.l.b16 %v1452
          %v1819 = vunpack.c.h.b16 %v1452
          %v1820 = vunpack.c.l.b16 %v1453
          %v1821 = vunpack.c.h.b16 %v1453
          %v1822 = vunpack.c.l.b16 %v1454
          %v1823 = vunpack.c.h.b16 %v1454
          %v1824 = vunpack.c.l.b16 %v1455
          %v1825 = vunpack.c.h.b16 %v1455
          %v1826 = vunpack.c.l.b16 %v1456
          %v1827 = vunpack.c.h.b16 %v1456
          %v1828 = vunpack.c.l.b16 %v1457
          %v1829 = vunpack.c.h.b16 %v1457
          %v1830 = vunpack.c.l.b16 %v1458
          %v1831 = vunpack.c.h.b16 %v1458
          %v1832 = vunpack.c.l.b16 %v1459
          %v1833 = vunpack.c.h.b16 %v1459
          %v1834 = vunpack.c.l.b16 %v1460
          %v1835 = vunpack.c.h.b16 %v1460
          %v1836 = vunpack.c.l.b16 %v1461
          %v1837 = vunpack.c.h.b16 %v1461
          %v1838 = vunpack.c.l.b16 %v1462
          %v1839 = vunpack.c.h.b16 %v1462
          %v1840 = vunpack.c.l.b16 %v1463
          %v1841 = vunpack.c.h.b16 %v1463
          %v1842 = vunpack.c.l.b16 %v1464
          %v1843 = vunpack.c.h.b16 %v1464
          %v1844 = vunpack.c.l.b16 %v1465
          %v1845 = vunpack.c.h.b16 %v1465
          %v1846 = vunpack.c.l.b16 %v1466
          %v1847 = vunpack.c.h.b16 %v1466
          %v1848 = vunpack.c.l.b16 %v1467
          %v1849 = vunpack.c.h.b16 %v1467
          %v1850 = vunpack.c.l.b16 %v1468
          %v1851 = vunpack.c.h.b16 %v1468
          %v1852 = vunpack.c.l.b16 %v1469
          %v1853 = vunpack.c.h.b16 %v1469
          %v1854 = vpack.c.b16 %v1602, %v1598
          %v1855 = vpack.c.b16 %v1603, %v1599
          %v1856 = vpack.c.b16 %v1604, %v1600
          %v1857 = vpack.c.b16 %v1605, %v1601
          %v1858 = vpack.c.b16 %v1610, %v1606
          %v1859 = vpack.c.b16 %v1611, %v1607
          %v1860 = vpack.c.b16 %v1612, %v1608
          %v1861 = vpack.c.b16 %v1613, %v1609
          %v1862 = vpack.c.b16 %v1618, %v1614
          %v1863 = vpack.c.b16 %v1619, %v1615
          %v1864 = vpack.c.b16 %v1620, %v1616
          %v1865 = vpack.c.b16 %v1621, %v1617
          %v1866 = vpack.c.b16 %v1626, %v1622
          %v1867 = vpack.c.b16 %v1627, %v1623
          %v1868 = vpack.c.b16 %v1628, %v1624
          %v1869 = vpack.c.b16 %v1629, %v1625
          %v1870 = vpack.c.b16 %v1634, %v1630
          %v1871 = vpack.c.b16 %v1635, %v1631
          %v1872 = vpack.c.b16 %v1636, %v1632
          %v1873 = vpack.c.b16 %v1637, %v1633
          %v1874 = vpack.c.b16 %v1642, %v1638
          %v1875 = vpack.c.b16 %v1643, %v1639
          %v1876 = vpack.c.b16 %v1644, %v1640
          %v1877 = vpack.c.b16 %v1645, %v1641
          %v1878 = vpack.c.b16 %v1650, %v1646
          %v1879 = vpack.c.b16 %v1651, %v1647
          %v1880 = vpack.c.b16 %v1652, %v1648
          %v1881 = vpack.c.b16 %v1653, %v1649
          %v1882 = vpack.c.b16 %v1658, %v1654
          %v1883 = vpack.c.b16 %v1659, %v1655
          %v1884 = vpack.c.b16 %v1660, %v1656
          %v1885 = vpack.c.b16 %v1661, %v1657
          %v1886 = vpack.c.b16 %v1666, %v1662
          %v1887 = vpack.c.b16 %v1667, %v1663
          %v1888 = vpack.c.b16 %v1668, %v1664
          %v1889 = vpack.c.b16 %v1669, %v1665
          %v1890 = vpack.c.b16 %v1674, %v1670
          %v1891 = vpack.c.b16 %v1675, %v1671
          %v1892 = vpack.c.b16 %v1676, %v1672
          %v1893 = vpack.c.b16 %v1677, %v1673
          %v1894 = vpack.c.b16 %v1682, %v1678
          %v1895 = vpack.c.b16 %v1683, %v1679
          %v1896 = vpack.c.b16 %v1684, %v1680
          %v1897 = vpack.c.b16 %v1685, %v1681
          %v1898 = vpack.c.b16 %v1690, %v1686
          %v1899 = vpack.c.b16 %v1691, %v1687
          %v1900 = vpack.c.b16 %v1692, %v1688
          %v1901 = vpack.c.b16 %v1693, %v1689
          %v1902 = vpack.c.b16 %v1698, %v1694
          %v1903 = vpack.c.b16 %v1699, %v1695
          %v1904 = vpack.c.b16 %v1700, %v1696
          %v1905 = vpack.c.b16 %v1701, %v1697
          %v1906 = vpack.c.b16 %v1706, %v1702
          %v1907 = vpack.c.b16 %v1707, %v1703
          %v1908 = vpack.c.b16 %v1708, %v1704
          %v1909 = vpack.c.b16 %v1709, %v1705
          %v1910 = vpack.c.b16 %v1714, %v1710
          %v1911 = vpack.c.b16 %v1715, %v1711
          %v1912 = vpack.c.b16 %v1716, %v1712
          %v1913 = vpack.c.b16 %v1717, %v1713
          %v1914 = vpack.c.b16 %v1722, %v1718
          %v1915 = vpack.c.b16 %v1723, %v1719
          %v1916 = vpack.c.b16 %v1724, %v1720
          %v1917 = vpack.c.b16 %v1725, %v1721
          %v1918 = vpack.c.b16 %v1730, %v1726
          %v1919 = vpack.c.b16 %v1731, %v1727
          %v1920 = vpack.c.b16 %v1732, %v1728
          %v1921 = vpack.c.b16 %v1733, %v1729
          %v1922 = vpack.c.b16 %v1738, %v1734
          %v1923 = vpack.c.b16 %v1739, %v1735
          %v1924 = vpack.c.b16 %v1740, %v1736
          %v1925 = vpack.c.b16 %v1741, %v1737
          %v1926 = vpack.c.b16 %v1746, %v1742
          %v1927 = vpack.c.b16 %v1747, %v1743
          %v1928 = vpack.c.b16 %v1748, %v1744
          %v1929 = vpack.c.b16 %v1749, %v1745
          %v1930 = vpack.c.b16 %v1754, %v1750
          %v1931 = vpack.c.b16 %v1755, %v1751
          %v1932 = vpack.c.b16 %v1756, %v1752
          %v1933 = vpack.c.b16 %v1757, %v1753
          %v1934 = vpack.c.b16 %v1762, %v1758
          %v1935 = vpack.c.b16 %v1763, %v1759
          %v1936 = vpack.c.b16 %v1764, %v1760
          %v1937 = vpack.c.b16 %v1765, %v1761
          %v1938 = vpack.c.b16 %v1770, %v1766
          %v1939 = vpack.c.b16 %v1771, %v1767
          %v1940 = vpack.c.b16 %v1772, %v1768
          %v1941 = vpack.c.b16 %v1773, %v1769
          %v1942 = vpack.c.b16 %v1778, %v1774
          %v1943 = vpack.c.b16 %v1779, %v1775
          %v1944 = vpack.c.b16 %v1780, %v1776
          %v1945 = vpack.c.b16 %v1781, %v1777
          %v1946 = vpack.c.b16 %v1786, %v1782
          %v1947 = vpack.c.b16 %v1787, %v1783
          %v1948 = vpack.c.b16 %v1788, %v1784
          %v1949 = vpack.c.b16 %v1789, %v1785
          %v1950 = vpack.c.b16 %v1794, %v1790
          %v1951 = vpack.c.b16 %v1795, %v1791
          %v1952 = vpack.c.b16 %v1796, %v1792
          %v1953 = vpack.c.b16 %v1797, %v1793
          %v1954 = vpack.c.b16 %v1802, %v1798
          %v1955 = vpack.c.b16 %v1803, %v1799
          %v1956 = vpack.c.b16 %v1804, %v1800
          %v1957 = vpack.c.b16 %v1805, %v1801
          %v1958 = vpack.c.b16 %v1810, %v1806
          %v1959 = vpack.c.b16 %v1811, %v1807
          %v1960 = vpack.c.b16 %v1812, %v1808
          %v1961 = vpack.c.b16 %v1813, %v1809
          %v1962 = vpack.c.b16 %v1818, %v1814
          %v1963 = vpack.c.b16 %v1819, %v1815
          %v1964 = vpack.c.b16 %v1820, %v1816
          %v1965 = vpack.c.b16 %v1821, %v1817
          %v1966 = vpack.c.b16 %v1826, %v1822
          %v1967 = vpack.c.b16 %v1827, %v1823
          %v1968 = vpack.c.b16 %v1828, %v1824
          %v1969 = vpack.c.b16 %v1829, %v1825
          %v1970 = vpack.c.b16 %v1834, %v1830
          %v1971 = vpack.c.b16 %v1835, %v1831
          %v1972 = vpack.c.b16 %v1836, %v1832
          %v1973 = vpack.c.b16 %v1837, %v1833
          %v1974 = vpack.c.b16 %v1842, %v1838
          %v1975 = vpack.c.b16 %v1843, %v1839
          %v1976 = vpack.c.b16 %v1844, %v1840
          %v1977 = vpack.c.b16 %v1845, %v1841
          %v1978 = vpack.c.b16 %v1850, %v1846
          %v1979 = vpack.c.b16 %v1851, %v1847
          %v1980 = vpack.c.b16 %v1852, %v1848
          %v1981 = vpack.c.b16 %v1853, %v1849
          %2110 = vmatprep.subr.bf16.mxu0 %v1883
          %2111 = vmatpush1.bf16.msra.mxu0 %v1882
          %2112 = vmatprep.subr.bf16.mxu0 %v1879
          %2113 = vmatpush1.bf16.msra.mxu0 %v1878
          %2114 = vmatprep.subr.bf16.mxu0 %v1875
          %2115 = vmatpush1.bf16.msra.mxu0 %v1874
          %2116 = vmatprep.subr.bf16.mxu0 %v1871
          %2117 = vmatpush1.bf16.msra.mxu0 %v1870
          %2118 = vmatprep.subr.bf16.mxu0 %v1867
          %2119 = vmatpush1.bf16.msra.mxu0 %v1866
          %2120 = vmatprep.subr.bf16.mxu0 %v1863
          %2121 = vmatpush1.bf16.msra.mxu0 %v1862
          %2122 = vmatprep.subr.bf16.mxu0 %v1859
          %2123 = vmatpush1.bf16.msra.mxu0 %v1858
          %2124 = vmatprep.subr.bf16.mxu0 %v1855
          %2125 = vmatpush1.bf16.msra.mxu0 %v1854
          %2126 = vmatprep.subr.bf16.mxu0 %v1915
          %2127 = vmatpush2.bf16.msra.mxu0 %v1914
          %2128 = vmatprep.subr.bf16.mxu0 %v1911
          %2129 = vmatpush2.bf16.msra.mxu0 %v1910
          %2130 = vmatprep.subr.bf16.mxu0 %v1907
          %2131 = vmatpush2.bf16.msra.mxu0 %v1906
          %2132 = vmatprep.subr.bf16.mxu0 %v1903
          %2133 = vmatpush2.bf16.msra.mxu0 %v1902
          %2134 = vmatprep.subr.bf16.mxu0 %v1899
          %2135 = vmatpush2.bf16.msra.mxu0 %v1898
          %2136 = vmatprep.subr.bf16.mxu0 %v1895
          %2137 = vmatpush2.bf16.msra.mxu0 %v1894
          %2138 = vmatprep.subr.bf16.mxu0 %v1891
          %2139 = vmatpush2.bf16.msra.mxu0 %v1890
          %2140 = vmatprep.subr.bf16.mxu0 %v1887
          %2141 = vmatpush2.bf16.msra.mxu0 %v1886
          %2142 = vmatprep.mubr.bf16.mxu0 %v403
          %2143 = vmatmul.mubr.bf16.gmra.mxu0 %v402
          %v2144 = vpop.f32.mrf.mxu0
          %v2145 = vadd.f32 0.0, %v2144
          %v2146 = vpop.f32.mrf.mxu0
          %v2147 = vadd.f32 0.0, %v2146
          %v2148 = vpop.f32.mrf.mxu0
          %v2149 = vpop.f32.mrf.mxu0
          %2150 = vdwg.mxu0
          %2151 = vmatprep.subr.bf16.mxu0 %v1947
          %2152 = vmatpush1.bf16.msra.mxu0 %v1946
          %2153 = vmatprep.subr.bf16.mxu0 %v1943
          %2154 = vmatpush1.bf16.msra.mxu0 %v1942
          %2155 = vmatprep.subr.bf16.mxu0 %v1939
          %2156 = vmatpush1.bf16.msra.mxu0 %v1938
          %2157 = vmatprep.subr.bf16.mxu0 %v1935
          %2158 = vmatpush1.bf16.msra.mxu0 %v1934
          %2159 = vmatprep.subr.bf16.mxu0 %v1931
          %2160 = vmatpush1.bf16.msra.mxu0 %v1930
          %2161 = vmatprep.subr.bf16.mxu0 %v1927
          %2162 = vmatpush1.bf16.msra.mxu0 %v1926
          %2163 = vmatprep.subr.bf16.mxu0 %v1923
          %2164 = vmatpush1.bf16.msra.mxu0 %v1922
          %2165 = vmatprep.subr.bf16.mxu0 %v1919
          %2166 = vmatpush1.bf16.msra.mxu0 %v1918
          %2167 = vmatprep.subr.bf16.mxu0 %v1979
          %2168 = vmatpush2.bf16.msra.mxu0 %v1978
          %2169 = vmatprep.subr.bf16.mxu0 %v1975
          %2170 = vmatpush2.bf16.msra.mxu0 %v1974
          %2171 = vmatprep.subr.bf16.mxu0 %v1971
          %2172 = vmatpush2.bf16.msra.mxu0 %v1970
          %2173 = vmatprep.subr.bf16.mxu0 %v1967
          %2174 = vmatpush2.bf16.msra.mxu0 %v1966
          %2175 = vmatprep.subr.bf16.mxu0 %v1963
          %2176 = vmatpush2.bf16.msra.mxu0 %v1962
          %2177 = vmatprep.subr.bf16.mxu0 %v1959
          %2178 = vmatpush2.bf16.msra.mxu0 %v1958
          %2179 = vmatprep.subr.bf16.mxu0 %v1955
          %2180 = vmatpush2.bf16.msra.mxu0 %v1954
          %2181 = vmatprep.subr.bf16.mxu0 %v1951
          %2182 = vmatpush2.bf16.msra.mxu0 %v1950
          %2183 = vmatprep.mubr.bf16.mxu0 %v405
          %2184 = vmatmul.mubr.bf16.gmra.mxu0 %v404
          %v2185 = vpop.f32.mrf.mxu0
          %v2186 = vadd.f32 %v2145, %v2185
          %v2187 = vpop.f32.mrf.mxu0
          %v2188 = vadd.f32 %v2147, %v2187
          %v2189 = vpop.f32.mrf.mxu0
          %v2190 = vpop.f32.mrf.mxu0
          %2191 = vdwg.mxu0
          %2192 = vmatprep.subr.bf16.mxu0 %v1885
          %2193 = vmatpush1.bf16.msra.mxu0 %v1884
          %2194 = vmatprep.subr.bf16.mxu0 %v1881
          %2195 = vmatpush1.bf16.msra.mxu0 %v1880
          %2196 = vmatprep.subr.bf16.mxu0 %v1877
          %2197 = vmatpush1.bf16.msra.mxu0 %v1876
          %2198 = vmatprep.subr.bf16.mxu0 %v1873
          %2199 = vmatpush1.bf16.msra.mxu0 %v1872
          %2200 = vmatprep.subr.bf16.mxu0 %v1869
          %2201 = vmatpush1.bf16.msra.mxu0 %v1868
          %2202 = vmatprep.subr.bf16.mxu0 %v1865
          %2203 = vmatpush1.bf16.msra.mxu0 %v1864
          %2204 = vmatprep.subr.bf16.mxu0 %v1861
          %2205 = vmatpush1.bf16.msra.mxu0 %v1860
          %2206 = vmatprep.subr.bf16.mxu0 %v1857
          %2207 = vmatpush1.bf16.msra.mxu0 %v1856
          %2208 = vmatprep.subr.bf16.mxu0 %v1917
          %2209 = vmatpush2.bf16.msra.mxu0 %v1916
          %2210 = vmatprep.subr.bf16.mxu0 %v1913
          %2211 = vmatpush2.bf16.msra.mxu0 %v1912
          %2212 = vmatprep.subr.bf16.mxu0 %v1909
          %2213 = vmatpush2.bf16.msra.mxu0 %v1908
          %2214 = vmatprep.subr.bf16.mxu0 %v1905
          %2215 = vmatpush2.bf16.msra.mxu0 %v1904
          %2216 = vmatprep.subr.bf16.mxu0 %v1901
          %2217 = vmatpush2.bf16.msra.mxu0 %v1900
          %2218 = vmatprep.subr.bf16.mxu0 %v1897
          %2219 = vmatpush2.bf16.msra.mxu0 %v1896
          %2220 = vmatprep.subr.bf16.mxu0 %v1893
          %2221 = vmatpush2.bf16.msra.mxu0 %v1892
          %2222 = vmatprep.subr.bf16.mxu0 %v1889
          %2223 = vmatpush2.bf16.msra.mxu0 %v1888
          %2224 = vmatprep.mubr.bf16.mxu0 %v403
          %2225 = vmatmul.mubr.bf16.gmra.mxu0 %v402
          %v2226 = vpop.f32.mrf.mxu0
          %v2227 = vadd.f32 0.0, %v2226
          %v2228 = vpop.f32.mrf.mxu0
          %v2229 = vadd.f32 0.0, %v2228
          %v2230 = vpop.f32.mrf.mxu0
          %v2231 = vpop.f32.mrf.mxu0
          %2232 = vdwg.mxu0
          %2233 = vmatprep.subr.bf16.mxu0 %v1949
          %2234 = vmatpush1.bf16.msra.mxu0 %v1948
          %2235 = vmatprep.subr.bf16.mxu0 %v1945
          %2236 = vmatpush1.bf16.msra.mxu0 %v1944
          %2237 = vmatprep.subr.bf16.mxu0 %v1941
          %2238 = vmatpush1.bf16.msra.mxu0 %v1940
          %2239 = vmatprep.subr.bf16.mxu0 %v1937
          %2240 = vmatpush1.bf16.msra.mxu0 %v1936
          %2241 = vmatprep.subr.bf16.mxu0 %v1933
          %2242 = vmatpush1.bf16.msra.mxu0 %v1932
          %2243 = vmatprep.subr.bf16.mxu0 %v1929
          %2244 = vmatpush1.bf16.msra.mxu0 %v1928
          %2245 = vmatprep.subr.bf16.mxu0 %v1925
          %2246 = vmatpush1.bf16.msra.mxu0 %v1924
          %2247 = vmatprep.subr.bf16.mxu0 %v1921
          %2248 = vmatpush1.bf16.msra.mxu0 %v1920
          %2249 = vmatprep.subr.bf16.mxu0 %v1981
          %2250 = vmatpush2.bf16.msra.mxu0 %v1980
          %2251 = vmatprep.subr.bf16.mxu0 %v1977
          %2252 = vmatpush2.bf16.msra.mxu0 %v1976
          %2253 = vmatprep.subr.bf16.mxu0 %v1973
          %2254 = vmatpush2.bf16.msra.mxu0 %v1972
          %2255 = vmatprep.subr.bf16.mxu0 %v1969
          %2256 = vmatpush2.bf16.msra.mxu0 %v1968
          %2257 = vmatprep.subr.bf16.mxu0 %v1965
          %2258 = vmatpush2.bf16.msra.mxu0 %v1964
          %2259 = vmatprep.subr.bf16.mxu0 %v1961
          %2260 = vmatpush2.bf16.msra.mxu0 %v1960
          %2261 = vmatprep.subr.bf16.mxu0 %v1957
          %2262 = vmatpush2.bf16.msra.mxu0 %v1956
          %2263 = vmatprep.subr.bf16.mxu0 %v1953
          %2264 = vmatpush2.bf16.msra.mxu0 %v1952
          %2265 = vmatprep.mubr.bf16.mxu0 %v405
          %2266 = vmatmul.mubr.bf16.gmra.mxu0 %v404
          %v2267 = vpop.f32.mrf.mxu0
          %v2268 = vadd.f32 %v2227, %v2267
          %v2269 = vpop.f32.mrf.mxu0
          %v2270 = vadd.f32 %v2229, %v2269
          %v2271 = vpop.f32.mrf.mxu0
          %v2272 = vpop.f32.mrf.mxu0
          %2273 = vdwg.mxu0
          %v2274 = vpack.c.bf16 %v2186, %v2186
          %v2275 = vpack.c.bf16 %v2188, %v2188
          %v2276 = vpack.c.bf16 %v2268, %v2268
          %v2277 = vpack.c.bf16 %v2270, %v2270
          %v2282 = vunpack.c.l.b16 %v2274
          %v2283 = vunpack.c.l.b16 %v2275
          %v2284 = vunpack.c.l.b16 %v2276
          %v2285 = vunpack.c.l.b16 %v2277
          %v2286 = vpack.c.b16 %v2283, %v2282
          %v2287 = vpack.c.b16 %v2285, %v2284
          %2290 = vst [vmem:[#allocation3] sm:$0xff] %v2286
          %2291 = vst [vmem:[#allocation3 + $0x8] sm:$0xff] %v2287
        $region52: #{multi_head_attention.1} parent=47 // pred_fallthru
          _
        %v2292 = vld [vmem:[%s374] sm:$0xff]
        %v2293 = vld [vmem:[%s374 + $0x8] sm:$0xff]
        %v2294 = vld [vmem:[%s374 + $0x10] sm:$0xff]
        %v2295 = vld [vmem:[%s374 + $0x18] sm:$0xff]
        %v2296 = vpack.c.bf16 %v2292, %v2292
        %v2297 = vpack.c.bf16 %v2293, %v2293
        %v2298 = vpack.c.bf16 %v2294, %v2294
        %v2299 = vpack.c.bf16 %v2295, %v2295
        %v2300 = vld [vmem:[%s3] sm:$0xff]
        %v2301 = vld [vmem:[%s3 + $0x8] sm:$0xff]
        %v2302 = vld [vmem:[%s3 + $0x10] sm:$0xff]
        %v2303 = vld [vmem:[%s3 + $0x18] sm:$0xff]
        %v2304 = vld [vmem:[%s3 + $0x20] sm:$0xff]
        %v2305 = vld [vmem:[%s3 + $0x28] sm:$0xff]
        %v2306 = vld [vmem:[%s3 + $0x30] sm:$0xff]
        %v2307 = vld [vmem:[%s3 + $0x38] sm:$0xff]
        %v2308 = vld [vmem:[%s3 + $0x40] sm:$0xff]
        %v2309 = vld [vmem:[%s3 + $0x48] sm:$0xff]
        %v2310 = vld [vmem:[%s3 + $0x50] sm:$0xff]
        %v2311 = vld [vmem:[%s3 + $0x58] sm:$0xff]
        %v2312 = vld [vmem:[%s3 + $0x60] sm:$0xff]
        %v2313 = vld [vmem:[%s3 + $0x68] sm:$0xff]
        %v2314 = vld [vmem:[%s3 + $0x70] sm:$0xff]
        %v2315 = vld [vmem:[%s3 + $0x78] sm:$0xff]
        %v2316 = vld [vmem:[%s3 + $0x80] sm:$0xff]
        %v2317 = vld [vmem:[%s3 + $0x88] sm:$0xff]
        %v2318 = vld [vmem:[%s3 + $0x90] sm:$0xff]
        %v2319 = vld [vmem:[%s3 + $0x98] sm:$0xff]
        %v2320 = vld [vmem:[%s3 + $0xa0] sm:$0xff]
        %v2321 = vld [vmem:[%s3 + $0xa8] sm:$0xff]
        %v2322 = vld [vmem:[%s3 + $0xb0] sm:$0xff]
        %v2323 = vld [vmem:[%s3 + $0xb8] sm:$0xff]
        %v2324 = vld [vmem:[%s3 + $0xc0] sm:$0xff]
        %v2325 = vld [vmem:[%s3 + $0xc8] sm:$0xff]
        %v2326 = vld [vmem:[%s3 + $0xd0] sm:$0xff]
        %v2327 = vld [vmem:[%s3 + $0xd8] sm:$0xff]
        %v2328 = vld [vmem:[%s3 + $0xe0] sm:$0xff]
        %v2329 = vld [vmem:[%s3 + $0xe8] sm:$0xff]
        %v2330 = vld [vmem:[%s3 + $0xf0] sm:$0xff]
        %v2331 = vld [vmem:[%s3 + $0xf8] sm:$0xff]
        %v2332 = vld [vmem:[%s3 + $0x100] sm:$0xff]
        %v2333 = vld [vmem:[%s3 + $0x108] sm:$0xff]
        %v2334 = vld [vmem:[%s3 + $0x110] sm:$0xff]
        %v2335 = vld [vmem:[%s3 + $0x118] sm:$0xff]
        %v2336 = vld [vmem:[%s3 + $0x120] sm:$0xff]
        %v2337 = vld [vmem:[%s3 + $0x128] sm:$0xff]
        %v2338 = vld [vmem:[%s3 + $0x130] sm:$0xff]
        %v2339 = vld [vmem:[%s3 + $0x138] sm:$0xff]
        %v2340 = vld [vmem:[%s3 + $0x140] sm:$0xff]
        %v2341 = vld [vmem:[%s3 + $0x148] sm:$0xff]
        %v2342 = vld [vmem:[%s3 + $0x150] sm:$0xff]
        %v2343 = vld [vmem:[%s3 + $0x158] sm:$0xff]
        %v2344 = vld [vmem:[%s3 + $0x160] sm:$0xff]
        %v2345 = vld [vmem:[%s3 + $0x168] sm:$0xff]
        %v2346 = vld [vmem:[%s3 + $0x170] sm:$0xff]
        %v2347 = vld [vmem:[%s3 + $0x178] sm:$0xff]
        %v2348 = vld [vmem:[%s3 + $0x180] sm:$0xff]
        %v2349 = vld [vmem:[%s3 + $0x188] sm:$0xff]
        %v2350 = vld [vmem:[%s3 + $0x190] sm:$0xff]
        %v2351 = vld [vmem:[%s3 + $0x198] sm:$0xff]
        %v2352 = vld [vmem:[%s3 + $0x1a0] sm:$0xff]
        %v2353 = vld [vmem:[%s3 + $0x1a8] sm:$0xff]
        %v2354 = vld [vmem:[%s3 + $0x1b0] sm:$0xff]
        %v2355 = vld [vmem:[%s3 + $0x1b8] sm:$0xff]
        %v2356 = vld [vmem:[%s3 + $0x1c0] sm:$0xff]
        %v2357 = vld [vmem:[%s3 + $0x1c8] sm:$0xff]
        %v2358 = vld [vmem:[%s3 + $0x1d0] sm:$0xff]
        %v2359 = vld [vmem:[%s3 + $0x1d8] sm:$0xff]
        %v2360 = vld [vmem:[%s3 + $0x1e0] sm:$0xff]
        %v2361 = vld [vmem:[%s3 + $0x1e8] sm:$0xff]
        %v2362 = vld [vmem:[%s3 + $0x1f0] sm:$0xff]
        %v2363 = vld [vmem:[%s3 + $0x1f8] sm:$0xff]
        %v2364 = vld [vmem:[%s3 + $0x200] sm:$0xff]
        %v2365 = vld [vmem:[%s3 + $0x208] sm:$0xff]
        %v2366 = vld [vmem:[%s3 + $0x210] sm:$0xff]
        %v2367 = vld [vmem:[%s3 + $0x218] sm:$0xff]
        %v2368 = vld [vmem:[%s3 + $0x220] sm:$0xff]
        %v2369 = vld [vmem:[%s3 + $0x228] sm:$0xff]
        %v2370 = vld [vmem:[%s3 + $0x230] sm:$0xff]
        %v2371 = vld [vmem:[%s3 + $0x238] sm:$0xff]
        %v2372 = vld [vmem:[%s3 + $0x240] sm:$0xff]
        %v2373 = vld [vmem:[%s3 + $0x248] sm:$0xff]
        %v2374 = vld [vmem:[%s3 + $0x250] sm:$0xff]
        %v2375 = vld [vmem:[%s3 + $0x258] sm:$0xff]
        %v2376 = vld [vmem:[%s3 + $0x260] sm:$0xff]
        %v2377 = vld [vmem:[%s3 + $0x268] sm:$0xff]
        %v2378 = vld [vmem:[%s3 + $0x270] sm:$0xff]
        %v2379 = vld [vmem:[%s3 + $0x278] sm:$0xff]
        %v2380 = vld [vmem:[%s3 + $0x280] sm:$0xff]
        %v2381 = vld [vmem:[%s3 + $0x288] sm:$0xff]
        %v2382 = vld [vmem:[%s3 + $0x290] sm:$0xff]
        %v2383 = vld [vmem:[%s3 + $0x298] sm:$0xff]
        %v2384 = vld [vmem:[%s3 + $0x2a0] sm:$0xff]
        %v2385 = vld [vmem:[%s3 + $0x2a8] sm:$0xff]
        %v2386 = vld [vmem:[%s3 + $0x2b0] sm:$0xff]
        %v2387 = vld [vmem:[%s3 + $0x2b8] sm:$0xff]
        %v2388 = vld [vmem:[%s3 + $0x2c0] sm:$0xff]
        %v2389 = vld [vmem:[%s3 + $0x2c8] sm:$0xff]
        %v2390 = vld [vmem:[%s3 + $0x2d0] sm:$0xff]
        %v2391 = vld [vmem:[%s3 + $0x2d8] sm:$0xff]
        %v2392 = vld [vmem:[%s3 + $0x2e0] sm:$0xff]
        %v2393 = vld [vmem:[%s3 + $0x2e8] sm:$0xff]
        %v2394 = vld [vmem:[%s3 + $0x2f0] sm:$0xff]
        %v2395 = vld [vmem:[%s3 + $0x2f8] sm:$0xff]
        %v2396 = vld [vmem:[%s3 + $0x300] sm:$0xff]
        %v2397 = vld [vmem:[%s3 + $0x308] sm:$0xff]
        %v2398 = vld [vmem:[%s3 + $0x310] sm:$0xff]
        %v2399 = vld [vmem:[%s3 + $0x318] sm:$0xff]
        %v2400 = vld [vmem:[%s3 + $0x320] sm:$0xff]
        %v2401 = vld [vmem:[%s3 + $0x328] sm:$0xff]
        %v2402 = vld [vmem:[%s3 + $0x330] sm:$0xff]
        %v2403 = vld [vmem:[%s3 + $0x338] sm:$0xff]
        %v2404 = vld [vmem:[%s3 + $0x340] sm:$0xff]
        %v2405 = vld [vmem:[%s3 + $0x348] sm:$0xff]
        %v2406 = vld [vmem:[%s3 + $0x350] sm:$0xff]
        %v2407 = vld [vmem:[%s3 + $0x358] sm:$0xff]
        %v2408 = vld [vmem:[%s3 + $0x360] sm:$0xff]
        %v2409 = vld [vmem:[%s3 + $0x368] sm:$0xff]
        %v2410 = vld [vmem:[%s3 + $0x370] sm:$0xff]
        %v2411 = vld [vmem:[%s3 + $0x378] sm:$0xff]
        %v2412 = vld [vmem:[%s3 + $0x380] sm:$0xff]
        %v2413 = vld [vmem:[%s3 + $0x388] sm:$0xff]
        %v2414 = vld [vmem:[%s3 + $0x390] sm:$0xff]
        %v2415 = vld [vmem:[%s3 + $0x398] sm:$0xff]
        %v2416 = vld [vmem:[%s3 + $0x3a0] sm:$0xff]
        %v2417 = vld [vmem:[%s3 + $0x3a8] sm:$0xff]
        %v2418 = vld [vmem:[%s3 + $0x3b0] sm:$0xff]
        %v2419 = vld [vmem:[%s3 + $0x3b8] sm:$0xff]
        %v2420 = vld [vmem:[%s3 + $0x3c0] sm:$0xff]
        %v2421 = vld [vmem:[%s3 + $0x3c8] sm:$0xff]
        %v2422 = vld [vmem:[%s3 + $0x3d0] sm:$0xff]
        %v2423 = vld [vmem:[%s3 + $0x3d8] sm:$0xff]
        %v2424 = vld [vmem:[%s3 + $0x3e0] sm:$0xff]
        %v2425 = vld [vmem:[%s3 + $0x3e8] sm:$0xff]
        %v2426 = vld [vmem:[%s3 + $0x3f0] sm:$0xff]
        %v2427 = vld [vmem:[%s3 + $0x3f8] sm:$0xff]
        %v2556 = vunpack.c.l.b16 %v2300
        %v2557 = vunpack.c.h.b16 %v2300
        %v2558 = vunpack.c.l.b16 %v2301
        %v2559 = vunpack.c.h.b16 %v2301
        %v2560 = vunpack.c.l.b16 %v2302
        %v2561 = vunpack.c.h.b16 %v2302
        %v2562 = vunpack.c.l.b16 %v2303
        %v2563 = vunpack.c.h.b16 %v2303
        %v2564 = vunpack.c.l.b16 %v2304
        %v2565 = vunpack.c.h.b16 %v2304
        %v2566 = vunpack.c.l.b16 %v2305
        %v2567 = vunpack.c.h.b16 %v2305
        %v2568 = vunpack.c.l.b16 %v2306
        %v2569 = vunpack.c.h.b16 %v2306
        %v2570 = vunpack.c.l.b16 %v2307
        %v2571 = vunpack.c.h.b16 %v2307
        %v2572 = vunpack.c.l.b16 %v2308
        %v2573 = vunpack.c.h.b16 %v2308
        %v2574 = vunpack.c.l.b16 %v2309
        %v2575 = vunpack.c.h.b16 %v2309
        %v2576 = vunpack.c.l.b16 %v2310
        %v2577 = vunpack.c.h.b16 %v2310
        %v2578 = vunpack.c.l.b16 %v2311
        %v2579 = vunpack.c.h.b16 %v2311
        %v2580 = vunpack.c.l.b16 %v2312
        %v2581 = vunpack.c.h.b16 %v2312
        %v2582 = vunpack.c.l.b16 %v2313
        %v2583 = vunpack.c.h.b16 %v2313
        %v2584 = vunpack.c.l.b16 %v2314
        %v2585 = vunpack.c.h.b16 %v2314
        %v2586 = vunpack.c.l.b16 %v2315
        %v2587 = vunpack.c.h.b16 %v2315
        %v2588 = vunpack.c.l.b16 %v2316
        %v2589 = vunpack.c.h.b16 %v2316
        %v2590 = vunpack.c.l.b16 %v2317
        %v2591 = vunpack.c.h.b16 %v2317
        %v2592 = vunpack.c.l.b16 %v2318
        %v2593 = vunpack.c.h.b16 %v2318
        %v2594 = vunpack.c.l.b16 %v2319
        %v2595 = vunpack.c.h.b16 %v2319
        %v2596 = vunpack.c.l.b16 %v2320
        %v2597 = vunpack.c.h.b16 %v2320
        %v2598 = vunpack.c.l.b16 %v2321
        %v2599 = vunpack.c.h.b16 %v2321
        %v2600 = vunpack.c.l.b16 %v2322
        %v2601 = vunpack.c.h.b16 %v2322
        %v2602 = vunpack.c.l.b16 %v2323
        %v2603 = vunpack.c.h.b16 %v2323
        %v2604 = vunpack.c.l.b16 %v2324
        %v2605 = vunpack.c.h.b16 %v2324
        %v2606 = vunpack.c.l.b16 %v2325
        %v2607 = vunpack.c.h.b16 %v2325
        %v2608 = vunpack.c.l.b16 %v2326
        %v2609 = vunpack.c.h.b16 %v2326
        %v2610 = vunpack.c.l.b16 %v2327
        %v2611 = vunpack.c.h.b16 %v2327
        %v2612 = vunpack.c.l.b16 %v2328
        %v2613 = vunpack.c.h.b16 %v2328
        %v2614 = vunpack.c.l.b16 %v2329
        %v2615 = vunpack.c.h.b16 %v2329
        %v2616 = vunpack.c.l.b16 %v2330
        %v2617 = vunpack.c.h.b16 %v2330
        %v2618 = vunpack.c.l.b16 %v2331
        %v2619 = vunpack.c.h.b16 %v2331
        %v2620 = vunpack.c.l.b16 %v2332
        %v2621 = vunpack.c.h.b16 %v2332
        %v2622 = vunpack.c.l.b16 %v2333
        %v2623 = vunpack.c.h.b16 %v2333
        %v2624 = vunpack.c.l.b16 %v2334
        %v2625 = vunpack.c.h.b16 %v2334
        %v2626 = vunpack.c.l.b16 %v2335
        %v2627 = vunpack.c.h.b16 %v2335
        %v2628 = vunpack.c.l.b16 %v2336
        %v2629 = vunpack.c.h.b16 %v2336
        %v2630 = vunpack.c.l.b16 %v2337
        %v2631 = vunpack.c.h.b16 %v2337
        %v2632 = vunpack.c.l.b16 %v2338
        %v2633 = vunpack.c.h.b16 %v2338
        %v2634 = vunpack.c.l.b16 %v2339
        %v2635 = vunpack.c.h.b16 %v2339
        %v2636 = vunpack.c.l.b16 %v2340
        %v2637 = vunpack.c.h.b16 %v2340
        %v2638 = vunpack.c.l.b16 %v2341
        %v2639 = vunpack.c.h.b16 %v2341
        %v2640 = vunpack.c.l.b16 %v2342
        %v2641 = vunpack.c.h.b16 %v2342
        %v2642 = vunpack.c.l.b16 %v2343
        %v2643 = vunpack.c.h.b16 %v2343
        %v2644 = vunpack.c.l.b16 %v2344
        %v2645 = vunpack.c.h.b16 %v2344
        %v2646 = vunpack.c.l.b16 %v2345
        %v2647 = vunpack.c.h.b16 %v2345
        %v2648 = vunpack.c.l.b16 %v2346
        %v2649 = vunpack.c.h.b16 %v2346
        %v2650 = vunpack.c.l.b16 %v2347
        %v2651 = vunpack.c.h.b16 %v2347
        %v2652 = vunpack.c.l.b16 %v2348
        %v2653 = vunpack.c.h.b16 %v2348
        %v2654 = vunpack.c.l.b16 %v2349
        %v2655 = vunpack.c.h.b16 %v2349
        %v2656 = vunpack.c.l.b16 %v2350
        %v2657 = vunpack.c.h.b16 %v2350
        %v2658 = vunpack.c.l.b16 %v2351
        %v2659 = vunpack.c.h.b16 %v2351
        %v2660 = vunpack.c.l.b16 %v2352
        %v2661 = vunpack.c.h.b16 %v2352
        %v2662 = vunpack.c.l.b16 %v2353
        %v2663 = vunpack.c.h.b16 %v2353
        %v2664 = vunpack.c.l.b16 %v2354
        %v2665 = vunpack.c.h.b16 %v2354
        %v2666 = vunpack.c.l.b16 %v2355
        %v2667 = vunpack.c.h.b16 %v2355
        %v2668 = vunpack.c.l.b16 %v2356
        %v2669 = vunpack.c.h.b16 %v2356
        %v2670 = vunpack.c.l.b16 %v2357
        %v2671 = vunpack.c.h.b16 %v2357
        %v2672 = vunpack.c.l.b16 %v2358
        %v2673 = vunpack.c.h.b16 %v2358
        %v2674 = vunpack.c.l.b16 %v2359
        %v2675 = vunpack.c.h.b16 %v2359
        %v2676 = vunpack.c.l.b16 %v2360
        %v2677 = vunpack.c.h.b16 %v2360
        %v2678 = vunpack.c.l.b16 %v2361
        %v2679 = vunpack.c.h.b16 %v2361
        %v2680 = vunpack.c.l.b16 %v2362
        %v2681 = vunpack.c.h.b16 %v2362
        %v2682 = vunpack.c.l.b16 %v2363
        %v2683 = vunpack.c.h.b16 %v2363
        %v2684 = vunpack.c.l.b16 %v2364
        %v2685 = vunpack.c.h.b16 %v2364
        %v2686 = vunpack.c.l.b16 %v2365
        %v2687 = vunpack.c.h.b16 %v2365
        %v2688 = vunpack.c.l.b16 %v2366
        %v2689 = vunpack.c.h.b16 %v2366
        %v2690 = vunpack.c.l.b16 %v2367
        %v2691 = vunpack.c.h.b16 %v2367
        %v2692 = vunpack.c.l.b16 %v2368
        %v2693 = vunpack.c.h.b16 %v2368
        %v2694 = vunpack.c.l.b16 %v2369
        %v2695 = vunpack.c.h.b16 %v2369
        %v2696 = vunpack.c.l.b16 %v2370
        %v2697 = vunpack.c.h.b16 %v2370
        %v2698 = vunpack.c.l.b16 %v2371
        %v2699 = vunpack.c.h.b16 %v2371
        %v2700 = vunpack.c.l.b16 %v2372
        %v2701 = vunpack.c.h.b16 %v2372
        %v2702 = vunpack.c.l.b16 %v2373
        %v2703 = vunpack.c.h.b16 %v2373
        %v2704 = vunpack.c.l.b16 %v2374
        %v2705 = vunpack.c.h.b16 %v2374
        %v2706 = vunpack.c.l.b16 %v2375
        %v2707 = vunpack.c.h.b16 %v2375
        %v2708 = vunpack.c.l.b16 %v2376
        %v2709 = vunpack.c.h.b16 %v2376
        %v2710 = vunpack.c.l.b16 %v2377
        %v2711 = vunpack.c.h.b16 %v2377
        %v2712 = vunpack.c.l.b16 %v2378
        %v2713 = vunpack.c.h.b16 %v2378
        %v2714 = vunpack.c.l.b16 %v2379
        %v2715 = vunpack.c.h.b16 %v2379
        %v2716 = vunpack.c.l.b16 %v2380
        %v2717 = vunpack.c.h.b16 %v2380
        %v2718 = vunpack.c.l.b16 %v2381
        %v2719 = vunpack.c.h.b16 %v2381
        %v2720 = vunpack.c.l.b16 %v2382
        %v2721 = vunpack.c.h.b16 %v2382
        %v2722 = vunpack.c.l.b16 %v2383
        %v2723 = vunpack.c.h.b16 %v2383
        %v2724 = vunpack.c.l.b16 %v2384
        %v2725 = vunpack.c.h.b16 %v2384
        %v2726 = vunpack.c.l.b16 %v2385
        %v2727 = vunpack.c.h.b16 %v2385
        %v2728 = vunpack.c.l.b16 %v2386
        %v2729 = vunpack.c.h.b16 %v2386
        %v2730 = vunpack.c.l.b16 %v2387
        %v2731 = vunpack.c.h.b16 %v2387
        %v2732 = vunpack.c.l.b16 %v2388
        %v2733 = vunpack.c.h.b16 %v2388
        %v2734 = vunpack.c.l.b16 %v2389
        %v2735 = vunpack.c.h.b16 %v2389
        %v2736 = vunpack.c.l.b16 %v2390
        %v2737 = vunpack.c.h.b16 %v2390
        %v2738 = vunpack.c.l.b16 %v2391
        %v2739 = vunpack.c.h.b16 %v2391
        %v2740 = vunpack.c.l.b16 %v2392
        %v2741 = vunpack.c.h.b16 %v2392
        %v2742 = vunpack.c.l.b16 %v2393
        %v2743 = vunpack.c.h.b16 %v2393
        %v2744 = vunpack.c.l.b16 %v2394
        %v2745 = vunpack.c.h.b16 %v2394
        %v2746 = vunpack.c.l.b16 %v2395
        %v2747 = vunpack.c.h.b16 %v2395
        %v2748 = vunpack.c.l.b16 %v2396
        %v2749 = vunpack.c.h.b16 %v2396
        %v2750 = vunpack.c.l.b16 %v2397
        %v2751 = vunpack.c.h.b16 %v2397
        %v2752 = vunpack.c.l.b16 %v2398
        %v2753 = vunpack.c.h.b16 %v2398
        %v2754 = vunpack.c.l.b16 %v2399
        %v2755 = vunpack.c.h.b16 %v2399
        %v2756 = vunpack.c.l.b16 %v2400
        %v2757 = vunpack.c.h.b16 %v2400
        %v2758 = vunpack.c.l.b16 %v2401
        %v2759 = vunpack.c.h.b16 %v2401
        %v2760 = vunpack.c.l.b16 %v2402
        %v2761 = vunpack.c.h.b16 %v2402
        %v2762 = vunpack.c.l.b16 %v2403
        %v2763 = vunpack.c.h.b16 %v2403
        %v2764 = vunpack.c.l.b16 %v2404
        %v2765 = vunpack.c.h.b16 %v2404
        %v2766 = vunpack.c.l.b16 %v2405
        %v2767 = vunpack.c.h.b16 %v2405
        %v2768 = vunpack.c.l.b16 %v2406
        %v2769 = vunpack.c.h.b16 %v2406
        %v2770 = vunpack.c.l.b16 %v2407
        %v2771 = vunpack.c.h.b16 %v2407
        %v2772 = vunpack.c.l.b16 %v2408
        %v2773 = vunpack.c.h.b16 %v2408
        %v2774 = vunpack.c.l.b16 %v2409
        %v2775 = vunpack.c.h.b16 %v2409
        %v2776 = vunpack.c.l.b16 %v2410
        %v2777 = vunpack.c.h.b16 %v2410
        %v2778 = vunpack.c.l.b16 %v2411
        %v2779 = vunpack.c.h.b16 %v2411
        %v2780 = vunpack.c.l.b16 %v2412
        %v2781 = vunpack.c.h.b16 %v2412
        %v2782 = vunpack.c.l.b16 %v2413
        %v2783 = vunpack.c.h.b16 %v2413
        %v2784 = vunpack.c.l.b16 %v2414
        %v2785 = vunpack.c.h.b16 %v2414
        %v2786 = vunpack.c.l.b16 %v2415
        %v2787 = vunpack.c.h.b16 %v2415
        %v2788 = vunpack.c.l.b16 %v2416
        %v2789 = vunpack.c.h.b16 %v2416
        %v2790 = vunpack.c.l.b16 %v2417
        %v2791 = vunpack.c.h.b16 %v2417
        %v2792 = vunpack.c.l.b16 %v2418
        %v2793 = vunpack.c.h.b16 %v2418
        %v2794 = vunpack.c.l.b16 %v2419
        %v2795 = vunpack.c.h.b16 %v2419
        %v2796 = vunpack.c.l.b16 %v2420
        %v2797 = vunpack.c.h.b16 %v2420
        %v2798 = vunpack.c.l.b16 %v2421
        %v2799 = vunpack.c.h.b16 %v2421
        %v2800 = vunpack.c.l.b16 %v2422
        %v2801 = vunpack.c.h.b16 %v2422
        %v2802 = vunpack.c.l.b16 %v2423
        %v2803 = vunpack.c.h.b16 %v2423
        %v2804 = vunpack.c.l.b16 %v2424
        %v2805 = vunpack.c.h.b16 %v2424
        %v2806 = vunpack.c.l.b16 %v2425
        %v2807 = vunpack.c.h.b16 %v2425
        %v2808 = vunpack.c.l.b16 %v2426
        %v2809 = vunpack.c.h.b16 %v2426
        %v2810 = vunpack.c.l.b16 %v2427
        %v2811 = vunpack.c.h.b16 %v2427
        %v2812 = vpack.c.b16 %v2560, %v2556
        %v2813 = vpack.c.b16 %v2561, %v2557
        %v2814 = vpack.c.b16 %v2562, %v2558
        %v2815 = vpack.c.b16 %v2563, %v2559
        %v2816 = vpack.c.b16 %v2568, %v2564
        %v2817 = vpack.c.b16 %v2569, %v2565
        %v2818 = vpack.c.b16 %v2570, %v2566
        %v2819 = vpack.c.b16 %v2571, %v2567
        %v2820 = vpack.c.b16 %v2576, %v2572
        %v2821 = vpack.c.b16 %v2577, %v2573
        %v2822 = vpack.c.b16 %v2578, %v2574
        %v2823 = vpack.c.b16 %v2579, %v2575
        %v2824 = vpack.c.b16 %v2584, %v2580
        %v2825 = vpack.c.b16 %v2585, %v2581
        %v2826 = vpack.c.b16 %v2586, %v2582
        %v2827 = vpack.c.b16 %v2587, %v2583
        %v2828 = vpack.c.b16 %v2592, %v2588
        %v2829 = vpack.c.b16 %v2593, %v2589
        %v2830 = vpack.c.b16 %v2594, %v2590
        %v2831 = vpack.c.b16 %v2595, %v2591
        %v2832 = vpack.c.b16 %v2600, %v2596
        %v2833 = vpack.c.b16 %v2601, %v2597
        %v2834 = vpack.c.b16 %v2602, %v2598
        %v2835 = vpack.c.b16 %v2603, %v2599
        %v2836 = vpack.c.b16 %v2608, %v2604
        %v2837 = vpack.c.b16 %v2609, %v2605
        %v2838 = vpack.c.b16 %v2610, %v2606
        %v2839 = vpack.c.b16 %v2611, %v2607
        %v2840 = vpack.c.b16 %v2616, %v2612
        %v2841 = vpack.c.b16 %v2617, %v2613
        %v2842 = vpack.c.b16 %v2618, %v2614
        %v2843 = vpack.c.b16 %v2619, %v2615
        %v2844 = vpack.c.b16 %v2624, %v2620
        %v2845 = vpack.c.b16 %v2625, %v2621
        %v2846 = vpack.c.b16 %v2626, %v2622
        %v2847 = vpack.c.b16 %v2627, %v2623
        %v2848 = vpack.c.b16 %v2632, %v2628
        %v2849 = vpack.c.b16 %v2633, %v2629
        %v2850 = vpack.c.b16 %v2634, %v2630
        %v2851 = vpack.c.b16 %v2635, %v2631
        %v2852 = vpack.c.b16 %v2640, %v2636
        %v2853 = vpack.c.b16 %v2641, %v2637
        %v2854 = vpack.c.b16 %v2642, %v2638
        %v2855 = vpack.c.b16 %v2643, %v2639
        %v2856 = vpack.c.b16 %v2648, %v2644
        %v2857 = vpack.c.b16 %v2649, %v2645
        %v2858 = vpack.c.b16 %v2650, %v2646
        %v2859 = vpack.c.b16 %v2651, %v2647
        %v2860 = vpack.c.b16 %v2656, %v2652
        %v2861 = vpack.c.b16 %v2657, %v2653
        %v2862 = vpack.c.b16 %v2658, %v2654
        %v2863 = vpack.c.b16 %v2659, %v2655
        %v2864 = vpack.c.b16 %v2664, %v2660
        %v2865 = vpack.c.b16 %v2665, %v2661
        %v2866 = vpack.c.b16 %v2666, %v2662
        %v2867 = vpack.c.b16 %v2667, %v2663
        %v2868 = vpack.c.b16 %v2672, %v2668
        %v2869 = vpack.c.b16 %v2673, %v2669
        %v2870 = vpack.c.b16 %v2674, %v2670
        %v2871 = vpack.c.b16 %v2675, %v2671
        %v2872 = vpack.c.b16 %v2680, %v2676
        %v2873 = vpack.c.b16 %v2681, %v2677
        %v2874 = vpack.c.b16 %v2682, %v2678
        %v2875 = vpack.c.b16 %v2683, %v2679
        %v2876 = vpack.c.b16 %v2688, %v2684
        %v2877 = vpack.c.b16 %v2689, %v2685
        %v2878 = vpack.c.b16 %v2690, %v2686
        %v2879 = vpack.c.b16 %v2691, %v2687
        %v2880 = vpack.c.b16 %v2696, %v2692
        %v2881 = vpack.c.b16 %v2697, %v2693
        %v2882 = vpack.c.b16 %v2698, %v2694
        %v2883 = vpack.c.b16 %v2699, %v2695
        %v2884 = vpack.c.b16 %v2704, %v2700
        %v2885 = vpack.c.b16 %v2705, %v2701
        %v2886 = vpack.c.b16 %v2706, %v2702
        %v2887 = vpack.c.b16 %v2707, %v2703
        %v2888 = vpack.c.b16 %v2712, %v2708
        %v2889 = vpack.c.b16 %v2713, %v2709
        %v2890 = vpack.c.b16 %v2714, %v2710
        %v2891 = vpack.c.b16 %v2715, %v2711
        %v2892 = vpack.c.b16 %v2720, %v2716
        %v2893 = vpack.c.b16 %v2721, %v2717
        %v2894 = vpack.c.b16 %v2722, %v2718
        %v2895 = vpack.c.b16 %v2723, %v2719
        %v2896 = vpack.c.b16 %v2728, %v2724
        %v2897 = vpack.c.b16 %v2729, %v2725
        %v2898 = vpack.c.b16 %v2730, %v2726
        %v2899 = vpack.c.b16 %v2731, %v2727
        %v2900 = vpack.c.b16 %v2736, %v2732
        %v2901 = vpack.c.b16 %v2737, %v2733
        %v2902 = vpack.c.b16 %v2738, %v2734
        %v2903 = vpack.c.b16 %v2739, %v2735
        %v2904 = vpack.c.b16 %v2744, %v2740
        %v2905 = vpack.c.b16 %v2745, %v2741
        %v2906 = vpack.c.b16 %v2746, %v2742
        %v2907 = vpack.c.b16 %v2747, %v2743
        %v2908 = vpack.c.b16 %v2752, %v2748
        %v2909 = vpack.c.b16 %v2753, %v2749
        %v2910 = vpack.c.b16 %v2754, %v2750
        %v2911 = vpack.c.b16 %v2755, %v2751
        %v2912 = vpack.c.b16 %v2760, %v2756
        %v2913 = vpack.c.b16 %v2761, %v2757
        %v2914 = vpack.c.b16 %v2762, %v2758
        %v2915 = vpack.c.b16 %v2763, %v2759
        %v2916 = vpack.c.b16 %v2768, %v2764
        %v2917 = vpack.c.b16 %v2769, %v2765
        %v2918 = vpack.c.b16 %v2770, %v2766
        %v2919 = vpack.c.b16 %v2771, %v2767
        %v2920 = vpack.c.b16 %v2776, %v2772
        %v2921 = vpack.c.b16 %v2777, %v2773
        %v2922 = vpack.c.b16 %v2778, %v2774
        %v2923 = vpack.c.b16 %v2779, %v2775
        %v2924 = vpack.c.b16 %v2784, %v2780
        %v2925 = vpack.c.b16 %v2785, %v2781
        %v2926 = vpack.c.b16 %v2786, %v2782
        %v2927 = vpack.c.b16 %v2787, %v2783
        %v2928 = vpack.c.b16 %v2792, %v2788
        %v2929 = vpack.c.b16 %v2793, %v2789
        %v2930 = vpack.c.b16 %v2794, %v2790
        %v2931 = vpack.c.b16 %v2795, %v2791
        %v2932 = vpack.c.b16 %v2800, %v2796
        %v2933 = vpack.c.b16 %v2801, %v2797
        %v2934 = vpack.c.b16 %v2802, %v2798
        %v2935 = vpack.c.b16 %v2803, %v2799
        %v2936 = vpack.c.b16 %v2808, %v2804
        %v2937 = vpack.c.b16 %v2809, %v2805
        %v2938 = vpack.c.b16 %v2810, %v2806
        %v2939 = vpack.c.b16 %v2811, %v2807
        %3068 = vmatprep.subr.bf16.mxu0 %v2841
        %3069 = vmatpush1.bf16.msra.mxu0 %v2840
        %3070 = vmatprep.subr.bf16.mxu0 %v2837
        %3071 = vmatpush1.bf16.msra.mxu0 %v2836
        %3072 = vmatprep.subr.bf16.mxu0 %v2833
        %3073 = vmatpush1.bf16.msra.mxu0 %v2832
        %3074 = vmatprep.subr.bf16.mxu0 %v2829
        %3075 = vmatpush1.bf16.msra.mxu0 %v2828
        %3076 = vmatprep.subr.bf16.mxu0 %v2825
        %3077 = vmatpush1.bf16.msra.mxu0 %v2824
        %3078 = vmatprep.subr.bf16.mxu0 %v2821
        %3079 = vmatpush1.bf16.msra.mxu0 %v2820
        %3080 = vmatprep.subr.bf16.mxu0 %v2817
        %3081 = vmatpush1.bf16.msra.mxu0 %v2816
        %3082 = vmatprep.subr.bf16.mxu0 %v2813
        %3083 = vmatpush1.bf16.msra.mxu0 %v2812
        %3084 = vmatprep.subr.bf16.mxu0 %v2873
        %3085 = vmatpush2.bf16.msra.mxu0 %v2872
        %3086 = vmatprep.subr.bf16.mxu0 %v2869
        %3087 = vmatpush2.bf16.msra.mxu0 %v2868
        %3088 = vmatprep.subr.bf16.mxu0 %v2865
        %3089 = vmatpush2.bf16.msra.mxu0 %v2864
        %3090 = vmatprep.subr.bf16.mxu0 %v2861
        %3091 = vmatpush2.bf16.msra.mxu0 %v2860
        %3092 = vmatprep.subr.bf16.mxu0 %v2857
        %3093 = vmatpush2.bf16.msra.mxu0 %v2856
        %3094 = vmatprep.subr.bf16.mxu0 %v2853
        %3095 = vmatpush2.bf16.msra.mxu0 %v2852
        %3096 = vmatprep.subr.bf16.mxu0 %v2849
        %3097 = vmatpush2.bf16.msra.mxu0 %v2848
        %3098 = vmatprep.subr.bf16.mxu0 %v2845
        %3099 = vmatpush2.bf16.msra.mxu0 %v2844
        %3100 = vmatprep.mubr.bf16.mxu0 %v2297
        %3101 = vmatmul.mubr.bf16.gmra.mxu0 %v2296
        %v3102 = vpop.f32.mrf.mxu0
        %v3103 = vadd.f32 0.0, %v3102
        %v3104 = vpop.f32.mrf.mxu0
        %v3105 = vadd.f32 0.0, %v3104
        %v3106 = vpop.f32.mrf.mxu0
        %v3107 = vpop.f32.mrf.mxu0
        %3108 = vdwg.mxu0
        %3109 = vmatprep.subr.bf16.mxu0 %v2905
        %3110 = vmatpush1.bf16.msra.mxu0 %v2904
        %3111 = vmatprep.subr.bf16.mxu0 %v2901
        %3112 = vmatpush1.bf16.msra.mxu0 %v2900
        %3113 = vmatprep.subr.bf16.mxu0 %v2897
        %3114 = vmatpush1.bf16.msra.mxu0 %v2896
        %3115 = vmatprep.subr.bf16.mxu0 %v2893
        %3116 = vmatpush1.bf16.msra.mxu0 %v2892
        %3117 = vmatprep.subr.bf16.mxu0 %v2889
        %3118 = vmatpush1.bf16.msra.mxu0 %v2888
        %3119 = vmatprep.subr.bf16.mxu0 %v2885
        %3120 = vmatpush1.bf16.msra.mxu0 %v2884
        %3121 = vmatprep.subr.bf16.mxu0 %v2881
        %3122 = vmatpush1.bf16.msra.mxu0 %v2880
        %3123 = vmatprep.subr.bf16.mxu0 %v2877
        %3124 = vmatpush1.bf16.msra.mxu0 %v2876
        %3125 = vmatprep.subr.bf16.mxu0 %v2937
        %3126 = vmatpush2.bf16.msra.mxu0 %v2936
        %3127 = vmatprep.subr.bf16.mxu0 %v2933
        %3128 = vmatpush2.bf16.msra.mxu0 %v2932
        %3129 = vmatprep.subr.bf16.mxu0 %v2929
        %3130 = vmatpush2.bf16.msra.mxu0 %v2928
        %3131 = vmatprep.subr.bf16.mxu0 %v2925
        %3132 = vmatpush2.bf16.msra.mxu0 %v2924
        %3133 = vmatprep.subr.bf16.mxu0 %v2921
        %3134 = vmatpush2.bf16.msra.mxu0 %v2920
        %3135 = vmatprep.subr.bf16.mxu0 %v2917
        %3136 = vmatpush2.bf16.msra.mxu0 %v2916
        %3137 = vmatprep.subr.bf16.mxu0 %v2913
        %3138 = vmatpush2.bf16.msra.mxu0 %v2912
        %3139 = vmatprep.subr.bf16.mxu0 %v2909
        %3140 = vmatpush2.bf16.msra.mxu0 %v2908
        %3141 = vmatprep.mubr.bf16.mxu0 %v2299
        %3142 = vmatmul.mubr.bf16.gmra.mxu0 %v2298
        %v3143 = vpop.f32.mrf.mxu0
        %v3144 = vadd.f32 %v3103, %v3143
        %v3145 = vpop.f32.mrf.mxu0
        %v3146 = vadd.f32 %v3105, %v3145
        %v3147 = vpop.f32.mrf.mxu0
        %v3148 = vpop.f32.mrf.mxu0
        %3149 = vdwg.mxu0
        %3150 = vmatprep.subr.bf16.mxu0 %v2843
        %3151 = vmatpush1.bf16.msra.mxu0 %v2842
        %3152 = vmatprep.subr.bf16.mxu0 %v2839
        %3153 = vmatpush1.bf16.msra.mxu0 %v2838
        %3154 = vmatprep.subr.bf16.mxu0 %v2835
        %3155 = vmatpush1.bf16.msra.mxu0 %v2834
        %3156 = vmatprep.subr.bf16.mxu0 %v2831
        %3157 = vmatpush1.bf16.msra.mxu0 %v2830
        %3158 = vmatprep.subr.bf16.mxu0 %v2827
        %3159 = vmatpush1.bf16.msra.mxu0 %v2826
        %3160 = vmatprep.subr.bf16.mxu0 %v2823
        %3161 = vmatpush1.bf16.msra.mxu0 %v2822
        %3162 = vmatprep.subr.bf16.mxu0 %v2819
        %3163 = vmatpush1.bf16.msra.mxu0 %v2818
        %3164 = vmatprep.subr.bf16.mxu0 %v2815
        %3165 = vmatpush1.bf16.msra.mxu0 %v2814
        %3166 = vmatprep.subr.bf16.mxu0 %v2875
        %3167 = vmatpush2.bf16.msra.mxu0 %v2874
        %3168 = vmatprep.subr.bf16.mxu0 %v2871
        %3169 = vmatpush2.bf16.msra.mxu0 %v2870
        %3170 = vmatprep.subr.bf16.mxu0 %v2867
        %3171 = vmatpush2.bf16.msra.mxu0 %v2866
        %3172 = vmatprep.subr.bf16.mxu0 %v2863
        %3173 = vmatpush2.bf16.msra.mxu0 %v2862
        %3174 = vmatprep.subr.bf16.mxu0 %v2859
        %3175 = vmatpush2.bf16.msra.mxu0 %v2858
        %3176 = vmatprep.subr.bf16.mxu0 %v2855
        %3177 = vmatpush2.bf16.msra.mxu0 %v2854
        %3178 = vmatprep.subr.bf16.mxu0 %v2851
        %3179 = vmatpush2.bf16.msra.mxu0 %v2850
        %3180 = vmatprep.subr.bf16.mxu0 %v2847
        %3181 = vmatpush2.bf16.msra.mxu0 %v2846
        %3182 = vmatprep.mubr.bf16.mxu0 %v2297
        %3183 = vmatmul.mubr.bf16.gmra.mxu0 %v2296
        %v3184 = vpop.f32.mrf.mxu0
        %v3185 = vadd.f32 0.0, %v3184
        %v3186 = vpop.f32.mrf.mxu0
        %v3187 = vadd.f32 0.0, %v3186
        %v3188 = vpop.f32.mrf.mxu0
        %v3189 = vpop.f32.mrf.mxu0
        %3190 = vdwg.mxu0
        %3191 = vmatprep.subr.bf16.mxu0 %v2907
        %3192 = vmatpush1.bf16.msra.mxu0 %v2906
        %3193 = vmatprep.subr.bf16.mxu0 %v2903
        %3194 = vmatpush1.bf16.msra.mxu0 %v2902
        %3195 = vmatprep.subr.bf16.mxu0 %v2899
        %3196 = vmatpush1.bf16.msra.mxu0 %v2898
        %3197 = vmatprep.subr.bf16.mxu0 %v2895
        %3198 = vmatpush1.bf16.msra.mxu0 %v2894
        %3199 = vmatprep.subr.bf16.mxu0 %v2891
        %3200 = vmatpush1.bf16.msra.mxu0 %v2890
        %3201 = vmatprep.subr.bf16.mxu0 %v2887
        %3202 = vmatpush1.bf16.msra.mxu0 %v2886
        %3203 = vmatprep.subr.bf16.mxu0 %v2883
        %3204 = vmatpush1.bf16.msra.mxu0 %v2882
        %3205 = vmatprep.subr.bf16.mxu0 %v2879
        %3206 = vmatpush1.bf16.msra.mxu0 %v2878
        %3207 = vmatprep.subr.bf16.mxu0 %v2939
        %3208 = vmatpush2.bf16.msra.mxu0 %v2938
        %3209 = vmatprep.subr.bf16.mxu0 %v2935
        %3210 = vmatpush2.bf16.msra.mxu0 %v2934
        %3211 = vmatprep.subr.bf16.mxu0 %v2931
        %3212 = vmatpush2.bf16.msra.mxu0 %v2930
        %3213 = vmatprep.subr.bf16.mxu0 %v2927
        %3214 = vmatpush2.bf16.msra.mxu0 %v2926
        %3215 = vmatprep.subr.bf16.mxu0 %v2923
        %3216 = vmatpush2.bf16.msra.mxu0 %v2922
        %3217 = vmatprep.subr.bf16.mxu0 %v2919
        %3218 = vmatpush2.bf16.msra.mxu0 %v2918
        %3219 = vmatprep.subr.bf16.mxu0 %v2915
        %3220 = vmatpush2.bf16.msra.mxu0 %v2914
        %3221 = vmatprep.subr.bf16.mxu0 %v2911
        %3222 = vmatpush2.bf16.msra.mxu0 %v2910
        %3223 = vmatprep.mubr.bf16.mxu0 %v2299
        %3224 = vmatmul.mubr.bf16.gmra.mxu0 %v2298
        %v3225 = vpop.f32.mrf.mxu0
        %v3226 = vadd.f32 %v3185, %v3225
        %v3227 = vpop.f32.mrf.mxu0
        %v3228 = vadd.f32 %v3187, %v3227
        %v3229 = vpop.f32.mrf.mxu0
        %v3230 = vpop.f32.mrf.mxu0
        %3231 = vdwg.mxu0
        %v3232 = vmul.f32 %v3144, 0.125
        %v3233 = vmul.f32 %v3146, 0.125
        %v3234 = vmul.f32 %v3226, 0.125
        %v3235 = vmul.f32 %v3228, 0.125
        %v3236 = vld [vmem:[#allocation2] sm:$0xff]
        %v3237 = vld [vmem:[#allocation2 + $0x8] sm:$0xff]
        %v3238 = vld [vmem:[#allocation2 + $0x10] sm:$0xff]
        %v3239 = vld [vmem:[#allocation2 + $0x18] sm:$0xff]
        %v3240 = vld [vmem:[#allocation3] sm:$0xff]
        %v3241 = vld [vmem:[#allocation3 + $0x8] sm:$0xff]
        %v3242 = vld [vmem:[%s6] sm:$0xff]
        %v3243 = vld [vmem:[%s6 + $0x8] sm:$0xff]
        %v3244 = vld [vmem:[%s6 + $0x10] sm:$0xff]
        %v3245 = vld [vmem:[%s6 + $0x18] sm:$0xff]
        %v3246 = vld [vmem:[%s6 + $0x20] sm:$0xff]
        %v3247 = vld [vmem:[%s6 + $0x28] sm:$0xff]
        %v3248 = vld [vmem:[%s6 + $0x30] sm:$0xff]
        %v3249 = vld [vmem:[%s6 + $0x38] sm:$0xff]
        %v3250 = vld [vmem:[%s6 + $0x40] sm:$0xff]
        %v3251 = vld [vmem:[%s6 + $0x48] sm:$0xff]
        %v3252 = vld [vmem:[%s6 + $0x50] sm:$0xff]
        %v3253 = vld [vmem:[%s6 + $0x58] sm:$0xff]
        %v3254 = vld [vmem:[%s6 + $0x60] sm:$0xff]
        %v3255 = vld [vmem:[%s6 + $0x68] sm:$0xff]
        %v3256 = vld [vmem:[%s6 + $0x70] sm:$0xff]
        %v3257 = vld [vmem:[%s6 + $0x78] sm:$0xff]
        %v3258 = vld [vmem:[%s6 + $0x80] sm:$0xff]
        %v3259 = vld [vmem:[%s6 + $0x88] sm:$0xff]
        %v3260 = vld [vmem:[%s6 + $0x90] sm:$0xff]
        %v3261 = vld [vmem:[%s6 + $0x98] sm:$0xff]
        %v3262 = vld [vmem:[%s6 + $0xa0] sm:$0xff]
        %v3263 = vld [vmem:[%s6 + $0xa8] sm:$0xff]
        %v3264 = vld [vmem:[%s6 + $0xb0] sm:$0xff]
        %v3265 = vld [vmem:[%s6 + $0xb8] sm:$0xff]
        %v3266 = vld [vmem:[%s6 + $0xc0] sm:$0xff]
        %v3267 = vld [vmem:[%s6 + $0xc8] sm:$0xff]
        %v3268 = vld [vmem:[%s6 + $0xd0] sm:$0xff]
        %v3269 = vld [vmem:[%s6 + $0xd8] sm:$0xff]
        %v3270 = vld [vmem:[%s6 + $0xe0] sm:$0xff]
        %v3271 = vld [vmem:[%s6 + $0xe8] sm:$0xff]
        %v3272 = vld [vmem:[%s6 + $0xf0] sm:$0xff]
        %v3273 = vld [vmem:[%s6 + $0xf8] sm:$0xff]
        %v3274 = vld [vmem:[%s6 + $0x100] sm:$0xff]
        %v3275 = vld [vmem:[%s6 + $0x108] sm:$0xff]
        %v3276 = vld [vmem:[%s6 + $0x110] sm:$0xff]
        %v3277 = vld [vmem:[%s6 + $0x118] sm:$0xff]
        %v3278 = vld [vmem:[%s6 + $0x120] sm:$0xff]
        %v3279 = vld [vmem:[%s6 + $0x128] sm:$0xff]
        %v3280 = vld [vmem:[%s6 + $0x130] sm:$0xff]
        %v3281 = vld [vmem:[%s6 + $0x138] sm:$0xff]
        %v3282 = vld [vmem:[%s6 + $0x140] sm:$0xff]
        %v3283 = vld [vmem:[%s6 + $0x148] sm:$0xff]
        %v3284 = vld [vmem:[%s6 + $0x150] sm:$0xff]
        %v3285 = vld [vmem:[%s6 + $0x158] sm:$0xff]
        %v3286 = vld [vmem:[%s6 + $0x160] sm:$0xff]
        %v3287 = vld [vmem:[%s6 + $0x168] sm:$0xff]
        %v3288 = vld [vmem:[%s6 + $0x170] sm:$0xff]
        %v3289 = vld [vmem:[%s6 + $0x178] sm:$0xff]
        %v3290 = vld [vmem:[%s6 + $0x180] sm:$0xff]
        %v3291 = vld [vmem:[%s6 + $0x188] sm:$0xff]
        %v3292 = vld [vmem:[%s6 + $0x190] sm:$0xff]
        %v3293 = vld [vmem:[%s6 + $0x198] sm:$0xff]
        %v3294 = vld [vmem:[%s6 + $0x1a0] sm:$0xff]
        %v3295 = vld [vmem:[%s6 + $0x1a8] sm:$0xff]
        %v3296 = vld [vmem:[%s6 + $0x1b0] sm:$0xff]
        %v3297 = vld [vmem:[%s6 + $0x1b8] sm:$0xff]
        %v3298 = vld [vmem:[%s6 + $0x1c0] sm:$0xff]
        %v3299 = vld [vmem:[%s6 + $0x1c8] sm:$0xff]
        %v3300 = vld [vmem:[%s6 + $0x1d0] sm:$0xff]
        %v3301 = vld [vmem:[%s6 + $0x1d8] sm:$0xff]
        %v3302 = vld [vmem:[%s6 + $0x1e0] sm:$0xff]
        %v3303 = vld [vmem:[%s6 + $0x1e8] sm:$0xff]
        %v3304 = vld [vmem:[%s6 + $0x1f0] sm:$0xff]
        %v3305 = vld [vmem:[%s6 + $0x1f8] sm:$0xff]
        %v3306 = vld [vmem:[%s6 + $0x200] sm:$0xff]
        %v3307 = vld [vmem:[%s6 + $0x208] sm:$0xff]
        %v3308 = vld [vmem:[%s6 + $0x210] sm:$0xff]
        %v3309 = vld [vmem:[%s6 + $0x218] sm:$0xff]
        %v3310 = vld [vmem:[%s6 + $0x220] sm:$0xff]
        %v3311 = vld [vmem:[%s6 + $0x228] sm:$0xff]
        %v3312 = vld [vmem:[%s6 + $0x230] sm:$0xff]
        %v3313 = vld [vmem:[%s6 + $0x238] sm:$0xff]
        %v3314 = vld [vmem:[%s6 + $0x240] sm:$0xff]
        %v3315 = vld [vmem:[%s6 + $0x248] sm:$0xff]
        %v3316 = vld [vmem:[%s6 + $0x250] sm:$0xff]
        %v3317 = vld [vmem:[%s6 + $0x258] sm:$0xff]
        %v3318 = vld [vmem:[%s6 + $0x260] sm:$0xff]
        %v3319 = vld [vmem:[%s6 + $0x268] sm:$0xff]
        %v3320 = vld [vmem:[%s6 + $0x270] sm:$0xff]
        %v3321 = vld [vmem:[%s6 + $0x278] sm:$0xff]
        %v3322 = vld [vmem:[%s6 + $0x280] sm:$0xff]
        %v3323 = vld [vmem:[%s6 + $0x288] sm:$0xff]
        %v3324 = vld [vmem:[%s6 + $0x290] sm:$0xff]
        %v3325 = vld [vmem:[%s6 + $0x298] sm:$0xff]
        %v3326 = vld [vmem:[%s6 + $0x2a0] sm:$0xff]
        %v3327 = vld [vmem:[%s6 + $0x2a8] sm:$0xff]
        %v3328 = vld [vmem:[%s6 + $0x2b0] sm:$0xff]
        %v3329 = vld [vmem:[%s6 + $0x2b8] sm:$0xff]
        %v3330 = vld [vmem:[%s6 + $0x2c0] sm:$0xff]
        %v3331 = vld [vmem:[%s6 + $0x2c8] sm:$0xff]
        %v3332 = vld [vmem:[%s6 + $0x2d0] sm:$0xff]
        %v3333 = vld [vmem:[%s6 + $0x2d8] sm:$0xff]
        %v3334 = vld [vmem:[%s6 + $0x2e0] sm:$0xff]
        %v3335 = vld [vmem:[%s6 + $0x2e8] sm:$0xff]
        %v3336 = vld [vmem:[%s6 + $0x2f0] sm:$0xff]
        %v3337 = vld [vmem:[%s6 + $0x2f8] sm:$0xff]
        %v3338 = vld [vmem:[%s6 + $0x300] sm:$0xff]
        %v3339 = vld [vmem:[%s6 + $0x308] sm:$0xff]
        %v3340 = vld [vmem:[%s6 + $0x310] sm:$0xff]
        %v3341 = vld [vmem:[%s6 + $0x318] sm:$0xff]
        %v3342 = vld [vmem:[%s6 + $0x320] sm:$0xff]
        %v3343 = vld [vmem:[%s6 + $0x328] sm:$0xff]
        %v3344 = vld [vmem:[%s6 + $0x330] sm:$0xff]
        %v3345 = vld [vmem:[%s6 + $0x338] sm:$0xff]
        %v3346 = vld [vmem:[%s6 + $0x340] sm:$0xff]
        %v3347 = vld [vmem:[%s6 + $0x348] sm:$0xff]
        %v3348 = vld [vmem:[%s6 + $0x350] sm:$0xff]
        %v3349 = vld [vmem:[%s6 + $0x358] sm:$0xff]
        %v3350 = vld [vmem:[%s6 + $0x360] sm:$0xff]
        %v3351 = vld [vmem:[%s6 + $0x368] sm:$0xff]
        %v3352 = vld [vmem:[%s6 + $0x370] sm:$0xff]
        %v3353 = vld [vmem:[%s6 + $0x378] sm:$0xff]
        %v3354 = vld [vmem:[%s6 + $0x380] sm:$0xff]
        %v3355 = vld [vmem:[%s6 + $0x388] sm:$0xff]
        %v3356 = vld [vmem:[%s6 + $0x390] sm:$0xff]
        %v3357 = vld [vmem:[%s6 + $0x398] sm:$0xff]
        %v3358 = vld [vmem:[%s6 + $0x3a0] sm:$0xff]
        %v3359 = vld [vmem:[%s6 + $0x3a8] sm:$0xff]
        %v3360 = vld [vmem:[%s6 + $0x3b0] sm:$0xff]
        %v3361 = vld [vmem:[%s6 + $0x3b8] sm:$0xff]
        %v3362 = vld [vmem:[%s6 + $0x3c0] sm:$0xff]
        %v3363 = vld [vmem:[%s6 + $0x3c8] sm:$0xff]
        %v3364 = vld [vmem:[%s6 + $0x3d0] sm:$0xff]
        %v3365 = vld [vmem:[%s6 + $0x3d8] sm:$0xff]
        %v3366 = vld [vmem:[%s6 + $0x3e0] sm:$0xff]
        %v3367 = vld [vmem:[%s6 + $0x3e8] sm:$0xff]
        %v3368 = vld [vmem:[%s6 + $0x3f0] sm:$0xff]
        %v3369 = vld [vmem:[%s6 + $0x3f8] sm:$0xff]
        %vm3370 = vcmask 523264
        %v3372 = vsel %vm3370, %v3232, 0
        %v3375 = vsel %vm3370, %v3236, 0
        %3377 = vmatprep.subr.mxu0 0.0
        %3378 = vmatpush1.xpose.msra.mxu0 0.0
        %3379 = vmatprep.subr.mxu0 0.0
        %3380 = vmatpush1.xpose.msra.mxu0 0.0
        %3381 = vmatprep.subr.mxu0 0.0
        %3382 = vmatpush1.xpose.msra.mxu0 0.0
        %3383 = vmatprep.subr.mxu0 0.0
        %3384 = vmatpush1.xpose.msra.mxu0 0.0
        %3385 = vmatprep.subr.mxu0 0.0
        %3386 = vmatpush1.xpose.msra.mxu0 0.0
        %3387 = vmatprep.subr.mxu0 0.0
        %3388 = vmatpush1.xpose.msra.mxu0 0.0
        %3389 = vmatprep.subr.mxu0 0.0
        %3390 = vmatpush1.xpose.msra.mxu0 0.0
        %3391 = vmatprep.subr.mxu0 0.0
        %3392 = vmatpush1.xpose.msra.mxu0 0.0
        %3393 = vmatprep.subr.mxu0 0.0
        %3394 = vmatpush1.xpose.msra.mxu0 0.0
        %3395 = vmatprep.subr.mxu0 0.0
        %3396 = vmatpush1.xpose.msra.mxu0 0.0
        %3397 = vmatprep.subr.mxu0 0.0
        %3398 = vmatpush1.xpose.msra.mxu0 0.0
        %3399 = vmatprep.subr.mxu0 0.0
        %3400 = vmatpush1.xpose.msra.mxu0 0.0
        %3401 = vmatprep.subr.mxu0 0.0
        %3402 = vmatpush1.xpose.msra.mxu0 0.0
        %3403 = vmatprep.subr.mxu0 0.0
        %3404 = vmatpush1.xpose.msra.mxu0 0.0
        %3405 = vmatprep.subr.mxu0 0.0
        %3406 = vmatpush1.xpose.msra.mxu0 0.0
        %3407 = vmatprep.subr.mxu0 0.0
        %3408 = vmatpush1.xpose.msra.mxu0 %v3375
        %3409 = vmatprep.subr.mxu0 0.0
        %3410 = vmatpush2.xpose.msra.mxu0 0.0
        %3411 = vmatprep.subr.mxu0 0.0
        %3412 = vmatpush2.xpose.msra.mxu0 0.0
        %3413 = vmatprep.subr.mxu0 0.0
        %3414 = vmatpush2.xpose.msra.mxu0 0.0
        %3415 = vmatprep.subr.mxu0 0.0
        %3416 = vmatpush2.xpose.msra.mxu0 0.0
        %3417 = vmatprep.subr.mxu0 0.0
        %3418 = vmatpush2.xpose.msra.mxu0 0.0
        %3419 = vmatprep.subr.mxu0 0.0
        %3420 = vmatpush2.xpose.msra.mxu0 0.0
        %3421 = vmatprep.subr.mxu0 0.0
        %3422 = vmatpush2.xpose.msra.mxu0 0.0
        %3423 = vmatprep.subr.mxu0 0.0
        %3424 = vmatpush2.xpose.msra.mxu0 0.0
        %3425 = vmatprep.subr.mxu0 0.0
        %3426 = vmatpush2.xpose.msra.mxu0 0.0
        %3427 = vmatprep.subr.mxu0 0.0
        %3428 = vmatpush2.xpose.msra.mxu0 0.0
        %3429 = vmatprep.subr.mxu0 0.0
        %3430 = vmatpush2.xpose.msra.mxu0 0.0
        %3431 = vmatprep.subr.mxu0 0.0
        %3432 = vmatpush2.xpose.msra.mxu0 0.0
        %3433 = vmatprep.subr.mxu0 0.0
        %3434 = vmatpush2.xpose.msra.mxu0 0.0
        %3435 = vmatprep.subr.mxu0 0.0
        %3436 = vmatpush2.xpose.msra.mxu0 0.0
        %3437 = vmatprep.subr.mxu0 0.0
        %3438 = vmatpush2.xpose.msra.mxu0 0.0
        %3439 = vmatprep.subr.mxu0 0.0
        %3440 = vmatpush2.xpose.msra.mxu0 0.0
        %3441 = vmatprep.mubr.f32.mxu0 0.0
        %3442 = vmatmul.mubr.f32.gmra.mxu0 %v3372
        %v3443 = vpop.f32.mrf.mxu0
        %v3444 = vadd.f32 0.0, %v3443
        %v3445 = vpop.f32.mrf.mxu0
        %3446 = vdwg.mxu0
        %vm3447 = vcmask 64512
        %v3448 = vsel %vm3447, %v3444, -inf
        %3449 = vmax.xlane.f32.xlu0 %v3448
        %v3450 = vpop.xlane.xlu0 %3449
        %v3451 = vsub.f32 %v3444, %v3450
        %v3452 = vmul.f32 %v3451, 1.442695
        %v3453 = vpow.pop %v3452
        %v3454 = vsel %vm3447, %v3453, 0.0
        %3455 = vadd.xlane.f32.xlu0 %v3454
        %v3456 = vpop.xlane.xlu0 %3455
        %v3457 = vrcp.pop %v3456
        %v3458 = vmul.f32 %v3453, %v3457
        %3459 = vst.msk [vmem:[%s365] sm:$0xff] %vm3447, %v3458
        %v3460 = vpack.c.bf16 %v3458, %v3458
        %v3462 = vsel %vm3447, %v3460, 0
        %vm3464 = vcmask 1043456
        %v3466 = vsel %vm3464, %v3240, 0
        %3468 = vmatprep.subr.bf16.mxu0 0
        %3469 = vmatpush1.bf16.msra.mxu0 0
        %3470 = vmatprep.subr.bf16.mxu0 0
        %3471 = vmatpush1.bf16.msra.mxu0 0
        %3472 = vmatprep.subr.bf16.mxu0 0
        %3473 = vmatpush1.bf16.msra.mxu0 0
        %3474 = vmatprep.subr.bf16.mxu0 0
        %3475 = vmatpush1.bf16.msra.mxu0 0
        %3476 = vmatprep.subr.bf16.mxu0 0
        %3477 = vmatpush1.bf16.msra.mxu0 0
        %3478 = vmatprep.subr.bf16.mxu0 0
        %3479 = vmatpush1.bf16.msra.mxu0 0
        %3480 = vmatprep.subr.bf16.mxu0 0
        %3481 = vmatpush1.bf16.msra.mxu0 0
        %3482 = vmatprep.subr.bf16.mxu0 0
        %3483 = vmatpush1.bf16.msra.mxu0 %v3466
        %3484 = vmatprep.subr.bf16.mxu0 0
        %3485 = vmatpush2.bf16.msra.mxu0 0
        %3486 = vmatprep.subr.bf16.mxu0 0
        %3487 = vmatpush2.bf16.msra.mxu0 0
        %3488 = vmatprep.subr.bf16.mxu0 0
        %3489 = vmatpush2.bf16.msra.mxu0 0
        %3490 = vmatprep.subr.bf16.mxu0 0
        %3491 = vmatpush2.bf16.msra.mxu0 0
        %3492 = vmatprep.subr.bf16.mxu0 0
        %3493 = vmatpush2.bf16.msra.mxu0 0
        %3494 = vmatprep.subr.bf16.mxu0 0
        %3495 = vmatpush2.bf16.msra.mxu0 0
        %3496 = vmatprep.subr.bf16.mxu0 0
        %3497 = vmatpush2.bf16.msra.mxu0 0
        %3498 = vmatprep.subr.bf16.mxu0 0
        %3499 = vmatpush2.bf16.msra.mxu0 0
        %3500 = vmatprep.mubr.bf16.mxu0 0
        %3501 = vmatmul.mubr.bf16.gmra.mxu0 %v3462
        %v3502 = vpop.f32.mrf.mxu0
        %v3503 = vadd.f32 0.0, %v3502
        %v3504 = vpop.f32.mrf.mxu0
        %v3505 = vpop.f32.mrf.mxu0
        %v3506 = vpop.f32.mrf.mxu0
        %3507 = vdwg.mxu0
        %v3508 = vpack.c.bf16 %v3503, %v3503
        %v3525 = vunpack.c.l.b16 %v3242
        %v3526 = vunpack.c.h.b16 %v3242
        %v3527 = vunpack.c.l.b16 %v3243
        %v3528 = vunpack.c.h.b16 %v3243
        %v3529 = vunpack.c.l.b16 %v3244
        %v3530 = vunpack.c.h.b16 %v3244
        %v3531 = vunpack.c.l.b16 %v3245
        %v3532 = vunpack.c.h.b16 %v3245
        %v3533 = vunpack.c.l.b16 %v3246
        %v3534 = vunpack.c.h.b16 %v3246
        %v3535 = vunpack.c.l.b16 %v3247
        %v3536 = vunpack.c.h.b16 %v3247
        %v3537 = vunpack.c.l.b16 %v3248
        %v3538 = vunpack.c.h.b16 %v3248
        %v3539 = vunpack.c.l.b16 %v3249
        %v3540 = vunpack.c.h.b16 %v3249
        %v3541 = vunpack.c.l.b16 %v3250
        %v3542 = vunpack.c.h.b16 %v3250
        %v3543 = vunpack.c.l.b16 %v3251
        %v3544 = vunpack.c.h.b16 %v3251
        %v3545 = vunpack.c.l.b16 %v3252
        %v3546 = vunpack.c.h.b16 %v3252
        %v3547 = vunpack.c.l.b16 %v3253
        %v3548 = vunpack.c.h.b16 %v3253
        %v3549 = vunpack.c.l.b16 %v3254
        %v3550 = vunpack.c.h.b16 %v3254
        %v3551 = vunpack.c.l.b16 %v3255
        %v3552 = vunpack.c.h.b16 %v3255
        %v3553 = vunpack.c.l.b16 %v3256
        %v3554 = vunpack.c.h.b16 %v3256
        %v3555 = vunpack.c.l.b16 %v3257
        %v3556 = vunpack.c.h.b16 %v3257
        %v3557 = vpack.c.b16 %v3529, %v3525
        %v3558 = vpack.c.b16 %v3530, %v3526
        %v3559 = vpack.c.b16 %v3531, %v3527
        %v3560 = vpack.c.b16 %v3532, %v3528
        %v3561 = vpack.c.b16 %v3537, %v3533
        %v3562 = vpack.c.b16 %v3538, %v3534
        %v3563 = vpack.c.b16 %v3539, %v3535
        %v3564 = vpack.c.b16 %v3540, %v3536
        %v3565 = vpack.c.b16 %v3545, %v3541
        %v3566 = vpack.c.b16 %v3546, %v3542
        %v3567 = vpack.c.b16 %v3547, %v3543
        %v3568 = vpack.c.b16 %v3548, %v3544
        %v3569 = vpack.c.b16 %v3553, %v3549
        %v3570 = vpack.c.b16 %v3554, %v3550
        %v3571 = vpack.c.b16 %v3555, %v3551
        %v3572 = vpack.c.b16 %v3556, %v3552
        %v3590 = vsel %vm3370, %v3508, 0
        %3592 = vmatprep.subr.bf16.mxu0 0
        %3593 = vmatpush1.bf16.msra.mxu0 0
        %3594 = vmatprep.subr.bf16.mxu0 0
        %3595 = vmatpush1.bf16.msra.mxu0 0
        %3596 = vmatprep.subr.bf16.mxu0 0
        %3597 = vmatpush1.bf16.msra.mxu0 0
        %3598 = vmatprep.subr.bf16.mxu0 0
        %3599 = vmatpush1.bf16.msra.mxu0 0
        %3600 = vmatprep.subr.bf16.mxu0 %v3570
        %3601 = vmatpush1.bf16.msra.mxu0 %v3569
        %3602 = vmatprep.subr.bf16.mxu0 %v3566
        %3603 = vmatpush1.bf16.msra.mxu0 %v3565
        %3604 = vmatprep.subr.bf16.mxu0 %v3562
        %3605 = vmatpush1.bf16.msra.mxu0 %v3561
        %3606 = vmatprep.subr.bf16.mxu0 %v3558
        %3607 = vmatpush1.bf16.msra.mxu0 %v3557
        %3608 = vmatprep.subr.bf16.mxu0 0
        %3609 = vmatpush2.bf16.msra.mxu0 0
        %3610 = vmatprep.subr.bf16.mxu0 0
        %3611 = vmatpush2.bf16.msra.mxu0 0
        %3612 = vmatprep.subr.bf16.mxu0 0
        %3613 = vmatpush2.bf16.msra.mxu0 0
        %3614 = vmatprep.subr.bf16.mxu0 0
        %3615 = vmatpush2.bf16.msra.mxu0 0
        %3616 = vmatprep.subr.bf16.mxu0 0
        %3617 = vmatpush2.bf16.msra.mxu0 0
        %3618 = vmatprep.subr.bf16.mxu0 0
        %3619 = vmatpush2.bf16.msra.mxu0 0
        %3620 = vmatprep.subr.bf16.mxu0 0
        %3621 = vmatpush2.bf16.msra.mxu0 0
        %3622 = vmatprep.subr.bf16.mxu0 0
        %3623 = vmatpush2.bf16.msra.mxu0 0
        %3624 = vmatprep.mubr.bf16.mxu0 0
        %3625 = vmatmul.mubr.bf16.gmra.mxu0 %v3590
        %v3626 = vpop.f32.mrf.mxu0
        %v3627 = vadd.f32 0.0, %v3626
        %v3628 = vpop.f32.mrf.mxu0
        %v3629 = vadd.f32 0.0, %v3628
        %v3630 = vpop.f32.mrf.mxu0
        %v3631 = vpop.f32.mrf.mxu0
        %3632 = vdwg.mxu0
        %3633 = vmatprep.subr.bf16.mxu0 0
        %3634 = vmatpush1.bf16.msra.mxu0 0
        %3635 = vmatprep.subr.bf16.mxu0 0
        %3636 = vmatpush1.bf16.msra.mxu0 0
        %3637 = vmatprep.subr.bf16.mxu0 0
        %3638 = vmatpush1.bf16.msra.mxu0 0
        %3639 = vmatprep.subr.bf16.mxu0 0
        %3640 = vmatpush1.bf16.msra.mxu0 0
        %3641 = vmatprep.subr.bf16.mxu0 %v3572
        %3642 = vmatpush1.bf16.msra.mxu0 %v3571
        %3643 = vmatprep.subr.bf16.mxu0 %v3568
        %3644 = vmatpush1.bf16.msra.mxu0 %v3567
        %3645 = vmatprep.subr.bf16.mxu0 %v3564
        %3646 = vmatpush1.bf16.msra.mxu0 %v3563
        %3647 = vmatprep.subr.bf16.mxu0 %v3560
        %3648 = vmatpush1.bf16.msra.mxu0 %v3559
        %3649 = vmatprep.subr.bf16.mxu0 0
        %3650 = vmatpush2.bf16.msra.mxu0 0
        %3651 = vmatprep.subr.bf16.mxu0 0
        %3652 = vmatpush2.bf16.msra.mxu0 0
        %3653 = vmatprep.subr.bf16.mxu0 0
        %3654 = vmatpush2.bf16.msra.mxu0 0
        %3655 = vmatprep.subr.bf16.mxu0 0
        %3656 = vmatpush2.bf16.msra.mxu0 0
        %3657 = vmatprep.subr.bf16.mxu0 0
        %3658 = vmatpush2.bf16.msra.mxu0 0
        %3659 = vmatprep.subr.bf16.mxu0 0
        %3660 = vmatpush2.bf16.msra.mxu0 0
        %3661 = vmatprep.subr.bf16.mxu0 0
        %3662 = vmatpush2.bf16.msra.mxu0 0
        %3663 = vmatprep.subr.bf16.mxu0 0
        %3664 = vmatpush2.bf16.msra.mxu0 0
        %3665 = vmatprep.mubr.bf16.mxu0 0
        %3666 = vmatmul.mubr.bf16.gmra.mxu0 %v3590
        %v3667 = vpop.f32.mrf.mxu0
        %v3668 = vadd.f32 0.0, %v3667
        %v3669 = vpop.f32.mrf.mxu0
        %v3670 = vadd.f32 0.0, %v3669
        %v3671 = vpop.f32.mrf.mxu0
        %v3672 = vpop.f32.mrf.mxu0
        %3673 = vdwg.mxu0
        %v3674 = vadd.f32 %v2292, %v3627
        %v3675 = vadd.f32 %v2293, %v3629
        %v3676 = vadd.f32 %v2294, %v3668
        %v3677 = vadd.f32 %v2295, %v3670
        %3678 = vrot.lane.b32.xlu0 %v3232, 64
        %v3679 = vpop.permute.xlu0 %3678
        %3680 = vrot.lane.b32.xlu0 %v3236, 64
        %v3681 = vpop.permute.xlu0 %3680
        %v3682 = vsel %vm3370, %v3679, 0
        %v3684 = vsel %vm3370, %v3681, 0
        %3686 = vmatprep.subr.mxu0 0.0
        %3687 = vmatpush1.xpose.msra.mxu0 0.0
        %3688 = vmatprep.subr.mxu0 0.0
        %3689 = vmatpush1.xpose.msra.mxu0 0.0
        %3690 = vmatprep.subr.mxu0 0.0
        %3691 = vmatpush1.xpose.msra.mxu0 0.0
        %3692 = vmatprep.subr.mxu0 0.0
        %3693 = vmatpush1.xpose.msra.mxu0 0.0
        %3694 = vmatprep.subr.mxu0 0.0
        %3695 = vmatpush1.xpose.msra.mxu0 0.0
        %3696 = vmatprep.subr.mxu0 0.0
        %3697 = vmatpush1.xpose.msra.mxu0 0.0
        %3698 = vmatprep.subr.mxu0 0.0
        %3699 = vmatpush1.xpose.msra.mxu0 0.0
        %3700 = vmatprep.subr.mxu0 0.0
        %3701 = vmatpush1.xpose.msra.mxu0 0.0
        %3702 = vmatprep.subr.mxu0 0.0
        %3703 = vmatpush1.xpose.msra.mxu0 0.0
        %3704 = vmatprep.subr.mxu0 0.0
        %3705 = vmatpush1.xpose.msra.mxu0 0.0
        %3706 = vmatprep.subr.mxu0 0.0
        %3707 = vmatpush1.xpose.msra.mxu0 0.0
        %3708 = vmatprep.subr.mxu0 0.0
        %3709 = vmatpush1.xpose.msra.mxu0 0.0
        %3710 = vmatprep.subr.mxu0 0.0
        %3711 = vmatpush1.xpose.msra.mxu0 0.0
        %3712 = vmatprep.subr.mxu0 0.0
        %3713 = vmatpush1.xpose.msra.mxu0 0.0
        %3714 = vmatprep.subr.mxu0 0.0
        %3715 = vmatpush1.xpose.msra.mxu0 0.0
        %3716 = vmatprep.subr.mxu0 0.0
        %3717 = vmatpush1.xpose.msra.mxu0 %v3684
        %3718 = vmatprep.subr.mxu0 0.0
        %3719 = vmatpush2.xpose.msra.mxu0 0.0
        %3720 = vmatprep.subr.mxu0 0.0
        %3721 = vmatpush2.xpose.msra.mxu0 0.0
        %3722 = vmatprep.subr.mxu0 0.0
        %3723 = vmatpush2.xpose.msra.mxu0 0.0
        %3724 = vmatprep.subr.mxu0 0.0
        %3725 = vmatpush2.xpose.msra.mxu0 0.0
        %3726 = vmatprep.subr.mxu0 0.0
        %3727 = vmatpush2.xpose.msra.mxu0 0.0
        %3728 = vmatprep.subr.mxu0 0.0
        %3729 = vmatpush2.xpose.msra.mxu0 0.0
        %3730 = vmatprep.subr.mxu0 0.0
        %3731 = vmatpush2.xpose.msra.mxu0 0.0
        %3732 = vmatprep.subr.mxu0 0.0
        %3733 = vmatpush2.xpose.msra.mxu0 0.0
        %3734 = vmatprep.subr.mxu0 0.0
        %3735 = vmatpush2.xpose.msra.mxu0 0.0
        %3736 = vmatprep.subr.mxu0 0.0
        %3737 = vmatpush2.xpose.msra.mxu0 0.0
        %3738 = vmatprep.subr.mxu0 0.0
        %3739 = vmatpush2.xpose.msra.mxu0 0.0
        %3740 = vmatprep.subr.mxu0 0.0
        %3741 = vmatpush2.xpose.msra.mxu0 0.0
        %3742 = vmatprep.subr.mxu0 0.0
        %3743 = vmatpush2.xpose.msra.mxu0 0.0
        %3744 = vmatprep.subr.mxu0 0.0
        %3745 = vmatpush2.xpose.msra.mxu0 0.0
        %3746 = vmatprep.subr.mxu0 0.0
        %3747 = vmatpush2.xpose.msra.mxu0 0.0
        %3748 = vmatprep.subr.mxu0 0.0
        %3749 = vmatpush2.xpose.msra.mxu0 0.0
        %3750 = vmatprep.mubr.f32.mxu0 0.0
        %3751 = vmatmul.mubr.f32.gmra.mxu0 %v3682
        %v3752 = vpop.f32.mrf.mxu0
        %v3753 = vadd.f32 0.0, %v3752
        %v3754 = vpop.f32.mrf.mxu0
        %3755 = vdwg.mxu0
        %v3756 = vsel %vm3447, %v3753, -inf
        %3757 = vmax.xlane.f32.xlu0 %v3756
        %v3758 = vpop.xlane.xlu0 %3757
        %v3759 = vsub.f32 %v3753, %v3758
        %v3760 = vmul.f32 %v3759, 1.442695
        %v3761 = vpow.pop %v3760
        %v3762 = vsel %vm3447, %v3761, 0.0
        %3763 = vadd.xlane.f32.xlu0 %v3762
        %v3764 = vpop.xlane.xlu0 %3763
        %v3765 = vrcp.pop %v3764
        %v3766 = vmul.f32 %v3761, %v3765
        %s3767 = scalar_lea.vmem %s365, 8 [#allocation6]
        %3768 = vst.msk [vmem:[%s3767] sm:$0xff] %vm3447, %v3766
        %v3769 = vpack.c.bf16 %v3766, %v3766
        %v3771 = vunpack.c.l.b16 %v3240
        %v3772 = vpack.c.b16 %v3771, %v3771
        %3773 = vrot.lane.b32.xlu0 %v3772, 64
        %v3774 = vpop.permute.xlu0 %3773
        %v3776 = vsel %vm3447, %v3769, 0
        %v3779 = vsel %vm3464, %v3774, 0
        %3781 = vmatprep.subr.bf16.mxu0 0
        %3782 = vmatpush1.bf16.msra.mxu0 0
        %3783 = vmatprep.subr.bf16.mxu0 0
        %3784 = vmatpush1.bf16.msra.mxu0 0
        %3785 = vmatprep.subr.bf16.mxu0 0
        %3786 = vmatpush1.bf16.msra.mxu0 0
        %3787 = vmatprep.subr.bf16.mxu0 0
        %3788 = vmatpush1.bf16.msra.mxu0 0
        %3789 = vmatprep.subr.bf16.mxu0 0
        %3790 = vmatpush1.bf16.msra.mxu0 0
        %3791 = vmatprep.subr.bf16.mxu0 0
        %3792 = vmatpush1.bf16.msra.mxu0 0
        %3793 = vmatprep.subr.bf16.mxu0 0
        %3794 = vmatpush1.bf16.msra.mxu0 0
        %3795 = vmatprep.subr.bf16.mxu0 0
        %3796 = vmatpush1.bf16.msra.mxu0 %v3779
        %3797 = vmatprep.subr.bf16.mxu0 0
        %3798 = vmatpush2.bf16.msra.mxu0 0
        %3799 = vmatprep.subr.bf16.mxu0 0
        %3800 = vmatpush2.bf16.msra.mxu0 0
        %3801 = vmatprep.subr.bf16.mxu0 0
        %3802 = vmatpush2.bf16.msra.mxu0 0
        %3803 = vmatprep.subr.bf16.mxu0 0
        %3804 = vmatpush2.bf16.msra.mxu0 0
        %3805 = vmatprep.subr.bf16.mxu0 0
        %3806 = vmatpush2.bf16.msra.mxu0 0
        %3807 = vmatprep.subr.bf16.mxu0 0
        %3808 = vmatpush2.bf16.msra.mxu0 0
        %3809 = vmatprep.subr.bf16.mxu0 0
        %3810 = vmatpush2.bf16.msra.mxu0 0
        %3811 = vmatprep.subr.bf16.mxu0 0
        %3812 = vmatpush2.bf16.msra.mxu0 0
        %3813 = vmatprep.mubr.bf16.mxu0 0
        %3814 = vmatmul.mubr.bf16.gmra.mxu0 %v3776
        %v3815 = vpop.f32.mrf.mxu0
        %v3816 = vadd.f32 0.0, %v3815
        %v3817 = vpop.f32.mrf.mxu0
        %v3818 = vpop.f32.mrf.mxu0
        %v3819 = vpop.f32.mrf.mxu0
        %3820 = vdwg.mxu0
        %v3821 = vpack.c.bf16 %v3816, %v3816
        %v3838 = vunpack.c.l.b16 %v3258
        %v3839 = vunpack.c.h.b16 %v3258
        %v3840 = vunpack.c.l.b16 %v3259
        %v3841 = vunpack.c.h.b16 %v3259
        %v3842 = vunpack.c.l.b16 %v3260
        %v3843 = vunpack.c.h.b16 %v3260
        %v3844 = vunpack.c.l.b16 %v3261
        %v3845 = vunpack.c.h.b16 %v3261
        %v3846 = vunpack.c.l.b16 %v3262
        %v3847 = vunpack.c.h.b16 %v3262
        %v3848 = vunpack.c.l.b16 %v3263
        %v3849 = vunpack.c.h.b16 %v3263
        %v3850 = vunpack.c.l.b16 %v3264
        %v3851 = vunpack.c.h.b16 %v3264
        %v3852 = vunpack.c.l.b16 %v3265
        %v3853 = vunpack.c.h.b16 %v3265
        %v3854 = vunpack.c.l.b16 %v3266
        %v3855 = vunpack.c.h.b16 %v3266
        %v3856 = vunpack.c.l.b16 %v3267
        %v3857 = vunpack.c.h.b16 %v3267
        %v3858 = vunpack.c.l.b16 %v3268
        %v3859 = vunpack.c.h.b16 %v3268
        %v3860 = vunpack.c.l.b16 %v3269
        %v3861 = vunpack.c.h.b16 %v3269
        %v3862 = vunpack.c.l.b16 %v3270
        %v3863 = vunpack.c.h.b16 %v3270
        %v3864 = vunpack.c.l.b16 %v3271
        %v3865 = vunpack.c.h.b16 %v3271
        %v3866 = vunpack.c.l.b16 %v3272
        %v3867 = vunpack.c.h.b16 %v3272
        %v3868 = vunpack.c.l.b16 %v3273
        %v3869 = vunpack.c.h.b16 %v3273
        %v3870 = vpack.c.b16 %v3842, %v3838
        %v3871 = vpack.c.b16 %v3843, %v3839
        %v3872 = vpack.c.b16 %v3844, %v3840
        %v3873 = vpack.c.b16 %v3845, %v3841
        %v3874 = vpack.c.b16 %v3850, %v3846
        %v3875 = vpack.c.b16 %v3851, %v3847
        %v3876 = vpack.c.b16 %v3852, %v3848
        %v3877 = vpack.c.b16 %v3853, %v3849
        %v3878 = vpack.c.b16 %v3858, %v3854
        %v3879 = vpack.c.b16 %v3859, %v3855
        %v3880 = vpack.c.b16 %v3860, %v3856
        %v3881 = vpack.c.b16 %v3861, %v3857
        %v3882 = vpack.c.b16 %v3866, %v3862
        %v3883 = vpack.c.b16 %v3867, %v3863
        %v3884 = vpack.c.b16 %v3868, %v3864
        %v3885 = vpack.c.b16 %v3869, %v3865
        %v3903 = vsel %vm3370, %v3821, 0
        %3905 = vmatprep.subr.bf16.mxu0 0
        %3906 = vmatpush1.bf16.msra.mxu0 0
        %3907 = vmatprep.subr.bf16.mxu0 0
        %3908 = vmatpush1.bf16.msra.mxu0 0
        %3909 = vmatprep.subr.bf16.mxu0 0
        %3910 = vmatpush1.bf16.msra.mxu0 0
        %3911 = vmatprep.subr.bf16.mxu0 0
        %3912 = vmatpush1.bf16.msra.mxu0 0
        %3913 = vmatprep.subr.bf16.mxu0 %v3883
        %3914 = vmatpush1.bf16.msra.mxu0 %v3882
        %3915 = vmatprep.subr.bf16.mxu0 %v3879
        %3916 = vmatpush1.bf16.msra.mxu0 %v3878
        %3917 = vmatprep.subr.bf16.mxu0 %v3875
        %3918 = vmatpush1.bf16.msra.mxu0 %v3874
        %3919 = vmatprep.subr.bf16.mxu0 %v3871
        %3920 = vmatpush1.bf16.msra.mxu0 %v3870
        %3921 = vmatprep.subr.bf16.mxu0 0
        %3922 = vmatpush2.bf16.msra.mxu0 0
        %3923 = vmatprep.subr.bf16.mxu0 0
        %3924 = vmatpush2.bf16.msra.mxu0 0
        %3925 = vmatprep.subr.bf16.mxu0 0
        %3926 = vmatpush2.bf16.msra.mxu0 0
        %3927 = vmatprep.subr.bf16.mxu0 0
        %3928 = vmatpush2.bf16.msra.mxu0 0
        %3929 = vmatprep.subr.bf16.mxu0 0
        %3930 = vmatpush2.bf16.msra.mxu0 0
        %3931 = vmatprep.subr.bf16.mxu0 0
        %3932 = vmatpush2.bf16.msra.mxu0 0
        %3933 = vmatprep.subr.bf16.mxu0 0
        %3934 = vmatpush2.bf16.msra.mxu0 0
        %3935 = vmatprep.subr.bf16.mxu0 0
        %3936 = vmatpush2.bf16.msra.mxu0 0
        %3937 = vmatprep.mubr.bf16.mxu0 0
        %3938 = vmatmul.mubr.bf16.gmra.mxu0 %v3903
        %v3939 = vpop.f32.mrf.mxu0
        %v3940 = vadd.f32 0.0, %v3939
        %v3941 = vpop.f32.mrf.mxu0
        %v3942 = vadd.f32 0.0, %v3941
        %v3943 = vpop.f32.mrf.mxu0
        %v3944 = vpop.f32.mrf.mxu0
        %3945 = vdwg.mxu0
        %3946 = vmatprep.subr.bf16.mxu0 0
        %3947 = vmatpush1.bf16.msra.mxu0 0
        %3948 = vmatprep.subr.bf16.mxu0 0
        %3949 = vmatpush1.bf16.msra.mxu0 0
        %3950 = vmatprep.subr.bf16.mxu0 0
        %3951 = vmatpush1.bf16.msra.mxu0 0
        %3952 = vmatprep.subr.bf16.mxu0 0
        %3953 = vmatpush1.bf16.msra.mxu0 0
        %3954 = vmatprep.subr.bf16.mxu0 %v3885
        %3955 = vmatpush1.bf16.msra.mxu0 %v3884
        %3956 = vmatprep.subr.bf16.mxu0 %v3881
        %3957 = vmatpush1.bf16.msra.mxu0 %v3880
        %3958 = vmatprep.subr.bf16.mxu0 %v3877
        %3959 = vmatpush1.bf16.msra.mxu0 %v3876
        %3960 = vmatprep.subr.bf16.mxu0 %v3873
        %3961 = vmatpush1.bf16.msra.mxu0 %v3872
        %3962 = vmatprep.subr.bf16.mxu0 0
        %3963 = vmatpush2.bf16.msra.mxu0 0
        %3964 = vmatprep.subr.bf16.mxu0 0
        %3965 = vmatpush2.bf16.msra.mxu0 0
        %3966 = vmatprep.subr.bf16.mxu0 0
        %3967 = vmatpush2.bf16.msra.mxu0 0
        %3968 = vmatprep.subr.bf16.mxu0 0
        %3969 = vmatpush2.bf16.msra.mxu0 0
        %3970 = vmatprep.subr.bf16.mxu0 0
        %3971 = vmatpush2.bf16.msra.mxu0 0
        %3972 = vmatprep.subr.bf16.mxu0 0
        %3973 = vmatpush2.bf16.msra.mxu0 0
        %3974 = vmatprep.subr.bf16.mxu0 0
        %3975 = vmatpush2.bf16.msra.mxu0 0
        %3976 = vmatprep.subr.bf16.mxu0 0
        %3977 = vmatpush2.bf16.msra.mxu0 0
        %3978 = vmatprep.mubr.bf16.mxu0 0
        %3979 = vmatmul.mubr.bf16.gmra.mxu0 %v3903
        %v3980 = vpop.f32.mrf.mxu0
        %v3981 = vadd.f32 0.0, %v3980
        %v3982 = vpop.f32.mrf.mxu0
        %v3983 = vadd.f32 0.0, %v3982
        %v3984 = vpop.f32.mrf.mxu0
        %v3985 = vpop.f32.mrf.mxu0
        %3986 = vdwg.mxu0
        %v3987 = vadd.f32 %v3674, %v3940
        %v3988 = vadd.f32 %v3675, %v3942
        %v3989 = vadd.f32 %v3676, %v3981
        %v3990 = vadd.f32 %v3677, %v3983
        %v3992 = vsel %vm3370, %v3233, 0
        %v3995 = vsel %vm3370, %v3237, 0
        %3997 = vmatprep.subr.mxu0 0.0
        %3998 = vmatpush1.xpose.msra.mxu0 0.0
        %3999 = vmatprep.subr.mxu0 0.0
        %4000 = vmatpush1.xpose.msra.mxu0 0.0
        %4001 = vmatprep.subr.mxu0 0.0
        %4002 = vmatpush1.xpose.msra.mxu0 0.0
        %4003 = vmatprep.subr.mxu0 0.0
        %4004 = vmatpush1.xpose.msra.mxu0 0.0
        %4005 = vmatprep.subr.mxu0 0.0
        %4006 = vmatpush1.xpose.msra.mxu0 0.0
        %4007 = vmatprep.subr.mxu0 0.0
        %4008 = vmatpush1.xpose.msra.mxu0 0.0
        %4009 = vmatprep.subr.mxu0 0.0
        %4010 = vmatpush1.xpose.msra.mxu0 0.0
        %4011 = vmatprep.subr.mxu0 0.0
        %4012 = vmatpush1.xpose.msra.mxu0 0.0
        %4013 = vmatprep.subr.mxu0 0.0
        %4014 = vmatpush1.xpose.msra.mxu0 0.0
        %4015 = vmatprep.subr.mxu0 0.0
        %4016 = vmatpush1.xpose.msra.mxu0 0.0
        %4017 = vmatprep.subr.mxu0 0.0
        %4018 = vmatpush1.xpose.msra.mxu0 0.0
        %4019 = vmatprep.subr.mxu0 0.0
        %4020 = vmatpush1.xpose.msra.mxu0 0.0
        %4021 = vmatprep.subr.mxu0 0.0
        %4022 = vmatpush1.xpose.msra.mxu0 0.0
        %4023 = vmatprep.subr.mxu0 0.0
        %4024 = vmatpush1.xpose.msra.mxu0 0.0
        %4025 = vmatprep.subr.mxu0 0.0
        %4026 = vmatpush1.xpose.msra.mxu0 0.0
        %4027 = vmatprep.subr.mxu0 0.0
        %4028 = vmatpush1.xpose.msra.mxu0 %v3995
        %4029 = vmatprep.subr.mxu0 0.0
        %4030 = vmatpush2.xpose.msra.mxu0 0.0
        %4031 = vmatprep.subr.mxu0 0.0
        %4032 = vmatpush2.xpose.msra.mxu0 0.0
        %4033 = vmatprep.subr.mxu0 0.0
        %4034 = vmatpush2.xpose.msra.mxu0 0.0
        %4035 = vmatprep.subr.mxu0 0.0
        %4036 = vmatpush2.xpose.msra.mxu0 0.0
        %4037 = vmatprep.subr.mxu0 0.0
        %4038 = vmatpush2.xpose.msra.mxu0 0.0
        %4039 = vmatprep.subr.mxu0 0.0
        %4040 = vmatpush2.xpose.msra.mxu0 0.0
        %4041 = vmatprep.subr.mxu0 0.0
        %4042 = vmatpush2.xpose.msra.mxu0 0.0
        %4043 = vmatprep.subr.mxu0 0.0
        %4044 = vmatpush2.xpose.msra.mxu0 0.0
        %4045 = vmatprep.subr.mxu0 0.0
        %4046 = vmatpush2.xpose.msra.mxu0 0.0
        %4047 = vmatprep.subr.mxu0 0.0
        %4048 = vmatpush2.xpose.msra.mxu0 0.0
        %4049 = vmatprep.subr.mxu0 0.0
        %4050 = vmatpush2.xpose.msra.mxu0 0.0
        %4051 = vmatprep.subr.mxu0 0.0
        %4052 = vmatpush2.xpose.msra.mxu0 0.0
        %4053 = vmatprep.subr.mxu0 0.0
        %4054 = vmatpush2.xpose.msra.mxu0 0.0
        %4055 = vmatprep.subr.mxu0 0.0
        %4056 = vmatpush2.xpose.msra.mxu0 0.0
        %4057 = vmatprep.subr.mxu0 0.0
        %4058 = vmatpush2.xpose.msra.mxu0 0.0
        %4059 = vmatprep.subr.mxu0 0.0
        %4060 = vmatpush2.xpose.msra.mxu0 0.0
        %4061 = vmatprep.mubr.f32.mxu0 0.0
        %4062 = vmatmul.mubr.f32.gmra.mxu0 %v3992
        %v4063 = vpop.f32.mrf.mxu0
        %v4064 = vadd.f32 0.0, %v4063
        %v4065 = vpop.f32.mrf.mxu0
        %4066 = vdwg.mxu0
        %v4067 = vsel %vm3447, %v4064, -inf
        %4068 = vmax.xlane.f32.xlu0 %v4067
        %v4069 = vpop.xlane.xlu0 %4068
        %v4070 = vsub.f32 %v4064, %v4069
        %v4071 = vmul.f32 %v4070, 1.442695
        %v4072 = vpow.pop %v4071
        %v4073 = vsel %vm3447, %v4072, 0.0
        %4074 = vadd.xlane.f32.xlu0 %v4073
        %v4075 = vpop.xlane.xlu0 %4074
        %v4076 = vrcp.pop %v4075
        %v4077 = vmul.f32 %v4072, %v4076
        %s4078 = scalar_lea.vmem %s365, 16 [#allocation6]
        %4079 = vst.msk [vmem:[%s4078] sm:$0xff] %vm3447, %v4077
        %v4080 = vpack.c.bf16 %v4077, %v4077
        %v4081 = vunpack.c.h.b16 %v3240
        %v4082 = vpack.c.b16 %v4081, %v4081
        %v4084 = vsel %vm3447, %v4080, 0
        %v4087 = vsel %vm3464, %v4082, 0
        %4089 = vmatprep.subr.bf16.mxu0 0
        %4090 = vmatpush1.bf16.msra.mxu0 0
        %4091 = vmatprep.subr.bf16.mxu0 0
        %4092 = vmatpush1.bf16.msra.mxu0 0
        %4093 = vmatprep.subr.bf16.mxu0 0
        %4094 = vmatpush1.bf16.msra.mxu0 0
        %4095 = vmatprep.subr.bf16.mxu0 0
        %4096 = vmatpush1.bf16.msra.mxu0 0
        %4097 = vmatprep.subr.bf16.mxu0 0
        %4098 = vmatpush1.bf16.msra.mxu0 0
        %4099 = vmatprep.subr.bf16.mxu0 0
        %4100 = vmatpush1.bf16.msra.mxu0 0
        %4101 = vmatprep.subr.bf16.mxu0 0
        %4102 = vmatpush1.bf16.msra.mxu0 0
        %4103 = vmatprep.subr.bf16.mxu0 0
        %4104 = vmatpush1.bf16.msra.mxu0 %v4087
        %4105 = vmatprep.subr.bf16.mxu0 0
        %4106 = vmatpush2.bf16.msra.mxu0 0
        %4107 = vmatprep.subr.bf16.mxu0 0
        %4108 = vmatpush2.bf16.msra.mxu0 0
        %4109 = vmatprep.subr.bf16.mxu0 0
        %4110 = vmatpush2.bf16.msra.mxu0 0
        %4111 = vmatprep.subr.bf16.mxu0 0
        %4112 = vmatpush2.bf16.msra.mxu0 0
        %4113 = vmatprep.subr.bf16.mxu0 0
        %4114 = vmatpush2.bf16.msra.mxu0 0
        %4115 = vmatprep.subr.bf16.mxu0 0
        %4116 = vmatpush2.bf16.msra.mxu0 0
        %4117 = vmatprep.subr.bf16.mxu0 0
        %4118 = vmatpush2.bf16.msra.mxu0 0
        %4119 = vmatprep.subr.bf16.mxu0 0
        %4120 = vmatpush2.bf16.msra.mxu0 0
        %4121 = vmatprep.mubr.bf16.mxu0 0
        %4122 = vmatmul.mubr.bf16.gmra.mxu0 %v4084
        %v4123 = vpop.f32.mrf.mxu0
        %v4124 = vadd.f32 0.0, %v4123
        %v4125 = vpop.f32.mrf.mxu0
        %v4126 = vpop.f32.mrf.mxu0
        %v4127 = vpop.f32.mrf.mxu0
        %4128 = vdwg.mxu0
        %v4129 = vpack.c.bf16 %v4124, %v4124
        %v4146 = vunpack.c.l.b16 %v3274
        %v4147 = vunpack.c.h.b16 %v3274
        %v4148 = vunpack.c.l.b16 %v3275
        %v4149 = vunpack.c.h.b16 %v3275
        %v4150 = vunpack.c.l.b16 %v3276
        %v4151 = vunpack.c.h.b16 %v3276
        %v4152 = vunpack.c.l.b16 %v3277
        %v4153 = vunpack.c.h.b16 %v3277
        %v4154 = vunpack.c.l.b16 %v3278
        %v4155 = vunpack.c.h.b16 %v3278
        %v4156 = vunpack.c.l.b16 %v3279
        %v4157 = vunpack.c.h.b16 %v3279
        %v4158 = vunpack.c.l.b16 %v3280
        %v4159 = vunpack.c.h.b16 %v3280
        %v4160 = vunpack.c.l.b16 %v3281
        %v4161 = vunpack.c.h.b16 %v3281
        %v4162 = vunpack.c.l.b16 %v3282
        %v4163 = vunpack.c.h.b16 %v3282
        %v4164 = vunpack.c.l.b16 %v3283
        %v4165 = vunpack.c.h.b16 %v3283
        %v4166 = vunpack.c.l.b16 %v3284
        %v4167 = vunpack.c.h.b16 %v3284
        %v4168 = vunpack.c.l.b16 %v3285
        %v4169 = vunpack.c.h.b16 %v3285
        %v4170 = vunpack.c.l.b16 %v3286
        %v4171 = vunpack.c.h.b16 %v3286
        %v4172 = vunpack.c.l.b16 %v3287
        %v4173 = vunpack.c.h.b16 %v3287
        %v4174 = vunpack.c.l.b16 %v3288
        %v4175 = vunpack.c.h.b16 %v3288
        %v4176 = vunpack.c.l.b16 %v3289
        %v4177 = vunpack.c.h.b16 %v3289
        %v4178 = vpack.c.b16 %v4150, %v4146
        %v4179 = vpack.c.b16 %v4151, %v4147
        %v4180 = vpack.c.b16 %v4152, %v4148
        %v4181 = vpack.c.b16 %v4153, %v4149
        %v4182 = vpack.c.b16 %v4158, %v4154
        %v4183 = vpack.c.b16 %v4159, %v4155
        %v4184 = vpack.c.b16 %v4160, %v4156
        %v4185 = vpack.c.b16 %v4161, %v4157
        %v4186 = vpack.c.b16 %v4166, %v4162
        %v4187 = vpack.c.b16 %v4167, %v4163
        %v4188 = vpack.c.b16 %v4168, %v4164
        %v4189 = vpack.c.b16 %v4169, %v4165
        %v4190 = vpack.c.b16 %v4174, %v4170
        %v4191 = vpack.c.b16 %v4175, %v4171
        %v4192 = vpack.c.b16 %v4176, %v4172
        %v4193 = vpack.c.b16 %v4177, %v4173
        %v4211 = vsel %vm3370, %v4129, 0
        %4213 = vmatprep.subr.bf16.mxu0 0
        %4214 = vmatpush1.bf16.msra.mxu0 0
        %4215 = vmatprep.subr.bf16.mxu0 0
        %4216 = vmatpush1.bf16.msra.mxu0 0
        %4217 = vmatprep.subr.bf16.mxu0 0
        %4218 = vmatpush1.bf16.msra.mxu0 0
        %4219 = vmatprep.subr.bf16.mxu0 0
        %4220 = vmatpush1.bf16.msra.mxu0 0
        %4221 = vmatprep.subr.bf16.mxu0 %v4191
        %4222 = vmatpush1.bf16.msra.mxu0 %v4190
        %4223 = vmatprep.subr.bf16.mxu0 %v4187
        %4224 = vmatpush1.bf16.msra.mxu0 %v4186
        %4225 = vmatprep.subr.bf16.mxu0 %v4183
        %4226 = vmatpush1.bf16.msra.mxu0 %v4182
        %4227 = vmatprep.subr.bf16.mxu0 %v4179
        %4228 = vmatpush1.bf16.msra.mxu0 %v4178
        %4229 = vmatprep.subr.bf16.mxu0 0
        %4230 = vmatpush2.bf16.msra.mxu0 0
        %4231 = vmatprep.subr.bf16.mxu0 0
        %4232 = vmatpush2.bf16.msra.mxu0 0
        %4233 = vmatprep.subr.bf16.mxu0 0
        %4234 = vmatpush2.bf16.msra.mxu0 0
        %4235 = vmatprep.subr.bf16.mxu0 0
        %4236 = vmatpush2.bf16.msra.mxu0 0
        %4237 = vmatprep.subr.bf16.mxu0 0
        %4238 = vmatpush2.bf16.msra.mxu0 0
        %4239 = vmatprep.subr.bf16.mxu0 0
        %4240 = vmatpush2.bf16.msra.mxu0 0
        %4241 = vmatprep.subr.bf16.mxu0 0
        %4242 = vmatpush2.bf16.msra.mxu0 0
        %4243 = vmatprep.subr.bf16.mxu0 0
        %4244 = vmatpush2.bf16.msra.mxu0 0
        %4245 = vmatprep.mubr.bf16.mxu0 0
        %4246 = vmatmul.mubr.bf16.gmra.mxu0 %v4211
        %v4247 = vpop.f32.mrf.mxu0
        %v4248 = vadd.f32 0.0, %v4247
        %v4249 = vpop.f32.mrf.mxu0
        %v4250 = vadd.f32 0.0, %v4249
        %v4251 = vpop.f32.mrf.mxu0
        %v4252 = vpop.f32.mrf.mxu0
        %4253 = vdwg.mxu0
        %4254 = vmatprep.subr.bf16.mxu0 0
        %4255 = vmatpush1.bf16.msra.mxu0 0
        %4256 = vmatprep.subr.bf16.mxu0 0
        %4257 = vmatpush1.bf16.msra.mxu0 0
        %4258 = vmatprep.subr.bf16.mxu0 0
        %4259 = vmatpush1.bf16.msra.mxu0 0
        %4260 = vmatprep.subr.bf16.mxu0 0
        %4261 = vmatpush1.bf16.msra.mxu0 0
        %4262 = vmatprep.subr.bf16.mxu0 %v4193
        %4263 = vmatpush1.bf16.msra.mxu0 %v4192
        %4264 = vmatprep.subr.bf16.mxu0 %v4189
        %4265 = vmatpush1.bf16.msra.mxu0 %v4188
        %4266 = vmatprep.subr.bf16.mxu0 %v4185
        %4267 = vmatpush1.bf16.msra.mxu0 %v4184
        %4268 = vmatprep.subr.bf16.mxu0 %v4181
        %4269 = vmatpush1.bf16.msra.mxu0 %v4180
        %4270 = vmatprep.subr.bf16.mxu0 0
        %4271 = vmatpush2.bf16.msra.mxu0 0
        %4272 = vmatprep.subr.bf16.mxu0 0
        %4273 = vmatpush2.bf16.msra.mxu0 0
        %4274 = vmatprep.subr.bf16.mxu0 0
        %4275 = vmatpush2.bf16.msra.mxu0 0
        %4276 = vmatprep.subr.bf16.mxu0 0
        %4277 = vmatpush2.bf16.msra.mxu0 0
        %4278 = vmatprep.subr.bf16.mxu0 0
        %4279 = vmatpush2.bf16.msra.mxu0 0
        %4280 = vmatprep.subr.bf16.mxu0 0
        %4281 = vmatpush2.bf16.msra.mxu0 0
        %4282 = vmatprep.subr.bf16.mxu0 0
        %4283 = vmatpush2.bf16.msra.mxu0 0
        %4284 = vmatprep.subr.bf16.mxu0 0
        %4285 = vmatpush2.bf16.msra.mxu0 0
        %4286 = vmatprep.mubr.bf16.mxu0 0
        %4287 = vmatmul.mubr.bf16.gmra.mxu0 %v4211
        %v4288 = vpop.f32.mrf.mxu0
        %v4289 = vadd.f32 0.0, %v4288
        %v4290 = vpop.f32.mrf.mxu0
        %v4291 = vadd.f32 0.0, %v4290
        %v4292 = vpop.f32.mrf.mxu0
        %v4293 = vpop.f32.mrf.mxu0
        %4294 = vdwg.mxu0
        %v4295 = vadd.f32 %v3987, %v4248
        %v4296 = vadd.f32 %v3988, %v4250
        %v4297 = vadd.f32 %v3989, %v4289
        %v4298 = vadd.f32 %v3990, %v4291
        %4299 = vrot.lane.b32.xlu0 %v3233, 64
        %v4300 = vpop.permute.xlu0 %4299
        %4301 = vrot.lane.b32.xlu0 %v3237, 64
        %v4302 = vpop.permute.xlu0 %4301
        %v4303 = vsel %vm3370, %v4300, 0
        %v4305 = vsel %vm3370, %v4302, 0
        %4307 = vmatprep.subr.mxu0 0.0
        %4308 = vmatpush1.xpose.msra.mxu0 0.0
        %4309 = vmatprep.subr.mxu0 0.0
        %4310 = vmatpush1.xpose.msra.mxu0 0.0
        %4311 = vmatprep.subr.mxu0 0.0
        %4312 = vmatpush1.xpose.msra.mxu0 0.0
        %4313 = vmatprep.subr.mxu0 0.0
        %4314 = vmatpush1.xpose.msra.mxu0 0.0
        %4315 = vmatprep.subr.mxu0 0.0
        %4316 = vmatpush1.xpose.msra.mxu0 0.0
        %4317 = vmatprep.subr.mxu0 0.0
        %4318 = vmatpush1.xpose.msra.mxu0 0.0
        %4319 = vmatprep.subr.mxu0 0.0
        %4320 = vmatpush1.xpose.msra.mxu0 0.0
        %4321 = vmatprep.subr.mxu0 0.0
        %4322 = vmatpush1.xpose.msra.mxu0 0.0
        %4323 = vmatprep.subr.mxu0 0.0
        %4324 = vmatpush1.xpose.msra.mxu0 0.0
        %4325 = vmatprep.subr.mxu0 0.0
        %4326 = vmatpush1.xpose.msra.mxu0 0.0
        %4327 = vmatprep.subr.mxu0 0.0
        %4328 = vmatpush1.xpose.msra.mxu0 0.0
        %4329 = vmatprep.subr.mxu0 0.0
        %4330 = vmatpush1.xpose.msra.mxu0 0.0
        %4331 = vmatprep.subr.mxu0 0.0
        %4332 = vmatpush1.xpose.msra.mxu0 0.0
        %4333 = vmatprep.subr.mxu0 0.0
        %4334 = vmatpush1.xpose.msra.mxu0 0.0
        %4335 = vmatprep.subr.mxu0 0.0
        %4336 = vmatpush1.xpose.msra.mxu0 0.0
        %4337 = vmatprep.subr.mxu0 0.0
        %4338 = vmatpush1.xpose.msra.mxu0 %v4305
        %4339 = vmatprep.subr.mxu0 0.0
        %4340 = vmatpush2.xpose.msra.mxu0 0.0
        %4341 = vmatprep.subr.mxu0 0.0
        %4342 = vmatpush2.xpose.msra.mxu0 0.0
        %4343 = vmatprep.subr.mxu0 0.0
        %4344 = vmatpush2.xpose.msra.mxu0 0.0
        %4345 = vmatprep.subr.mxu0 0.0
        %4346 = vmatpush2.xpose.msra.mxu0 0.0
        %4347 = vmatprep.subr.mxu0 0.0
        %4348 = vmatpush2.xpose.msra.mxu0 0.0
        %4349 = vmatprep.subr.mxu0 0.0
        %4350 = vmatpush2.xpose.msra.mxu0 0.0
        %4351 = vmatprep.subr.mxu0 0.0
        %4352 = vmatpush2.xpose.msra.mxu0 0.0
        %4353 = vmatprep.subr.mxu0 0.0
        %4354 = vmatpush2.xpose.msra.mxu0 0.0
        %4355 = vmatprep.subr.mxu0 0.0
        %4356 = vmatpush2.xpose.msra.mxu0 0.0
        %4357 = vmatprep.subr.mxu0 0.0
        %4358 = vmatpush2.xpose.msra.mxu0 0.0
        %4359 = vmatprep.subr.mxu0 0.0
        %4360 = vmatpush2.xpose.msra.mxu0 0.0
        %4361 = vmatprep.subr.mxu0 0.0
        %4362 = vmatpush2.xpose.msra.mxu0 0.0
        %4363 = vmatprep.subr.mxu0 0.0
        %4364 = vmatpush2.xpose.msra.mxu0 0.0
        %4365 = vmatprep.subr.mxu0 0.0
        %4366 = vmatpush2.xpose.msra.mxu0 0.0
        %4367 = vmatprep.subr.mxu0 0.0
        %4368 = vmatpush2.xpose.msra.mxu0 0.0
        %4369 = vmatprep.subr.mxu0 0.0
        %4370 = vmatpush2.xpose.msra.mxu0 0.0
        %4371 = vmatprep.mubr.f32.mxu0 0.0
        %4372 = vmatmul.mubr.f32.gmra.mxu0 %v4303
        %v4373 = vpop.f32.mrf.mxu0
        %v4374 = vadd.f32 0.0, %v4373
        %v4375 = vpop.f32.mrf.mxu0
        %4376 = vdwg.mxu0
        %v4377 = vsel %vm3447, %v4374, -inf
        %4378 = vmax.xlane.f32.xlu0 %v4377
        %v4379 = vpop.xlane.xlu0 %4378
        %v4380 = vsub.f32 %v4374, %v4379
        %v4381 = vmul.f32 %v4380, 1.442695
        %v4382 = vpow.pop %v4381
        %v4383 = vsel %vm3447, %v4382, 0.0
        %4384 = vadd.xlane.f32.xlu0 %v4383
        %v4385 = vpop.xlane.xlu0 %4384
        %v4386 = vrcp.pop %v4385
        %v4387 = vmul.f32 %v4382, %v4386
        %s4388 = scalar_lea.vmem %s365, 24 [#allocation6]
        %4389 = vst.msk [vmem:[%s4388] sm:$0xff] %vm3447, %v4387
        %v4390 = vpack.c.bf16 %v4387, %v4387
        %4391 = vrot.lane.b32.xlu0 %v4082, 64
        %v4392 = vpop.permute.xlu0 %4391
        %v4394 = vsel %vm3447, %v4390, 0
        %v4397 = vsel %vm3464, %v4392, 0
        %4399 = vmatprep.subr.bf16.mxu0 0
        %4400 = vmatpush1.bf16.msra.mxu0 0
        %4401 = vmatprep.subr.bf16.mxu0 0
        %4402 = vmatpush1.bf16.msra.mxu0 0
        %4403 = vmatprep.subr.bf16.mxu0 0
        %4404 = vmatpush1.bf16.msra.mxu0 0
        %4405 = vmatprep.subr.bf16.mxu0 0
        %4406 = vmatpush1.bf16.msra.mxu0 0
        %4407 = vmatprep.subr.bf16.mxu0 0
        %4408 = vmatpush1.bf16.msra.mxu0 0
        %4409 = vmatprep.subr.bf16.mxu0 0
        %4410 = vmatpush1.bf16.msra.mxu0 0
        %4411 = vmatprep.subr.bf16.mxu0 0
        %4412 = vmatpush1.bf16.msra.mxu0 0
        %4413 = vmatprep.subr.bf16.mxu0 0
        %4414 = vmatpush1.bf16.msra.mxu0 %v4397
        %4415 = vmatprep.subr.bf16.mxu0 0
        %4416 = vmatpush2.bf16.msra.mxu0 0
        %4417 = vmatprep.subr.bf16.mxu0 0
        %4418 = vmatpush2.bf16.msra.mxu0 0
        %4419 = vmatprep.subr.bf16.mxu0 0
        %4420 = vmatpush2.bf16.msra.mxu0 0
        %4421 = vmatprep.subr.bf16.mxu0 0
        %4422 = vmatpush2.bf16.msra.mxu0 0
        %4423 = vmatprep.subr.bf16.mxu0 0
        %4424 = vmatpush2.bf16.msra.mxu0 0
        %4425 = vmatprep.subr.bf16.mxu0 0
        %4426 = vmatpush2.bf16.msra.mxu0 0
        %4427 = vmatprep.subr.bf16.mxu0 0
        %4428 = vmatpush2.bf16.msra.mxu0 0
        %4429 = vmatprep.subr.bf16.mxu0 0
        %4430 = vmatpush2.bf16.msra.mxu0 0
        %4431 = vmatprep.mubr.bf16.mxu0 0
        %4432 = vmatmul.mubr.bf16.gmra.mxu0 %v4394
        %v4433 = vpop.f32.mrf.mxu0
        %v4434 = vadd.f32 0.0, %v4433
        %v4435 = vpop.f32.mrf.mxu0
        %v4436 = vpop.f32.mrf.mxu0
        %v4437 = vpop.f32.mrf.mxu0
        %4438 = vdwg.mxu0
        %v4439 = vpack.c.bf16 %v4434, %v4434
        %v4456 = vunpack.c.l.b16 %v3290
        %v4457 = vunpack.c.h.b16 %v3290
        %v4458 = vunpack.c.l.b16 %v3291
        %v4459 = vunpack.c.h.b16 %v3291
        %v4460 = vunpack.c.l.b16 %v3292
        %v4461 = vunpack.c.h.b16 %v3292
        %v4462 = vunpack.c.l.b16 %v3293
        %v4463 = vunpack.c.h.b16 %v3293
        %v4464 = vunpack.c.l.b16 %v3294
        %v4465 = vunpack.c.h.b16 %v3294
        %v4466 = vunpack.c.l.b16 %v3295
        %v4467 = vunpack.c.h.b16 %v3295
        %v4468 = vunpack.c.l.b16 %v3296
        %v4469 = vunpack.c.h.b16 %v3296
        %v4470 = vunpack.c.l.b16 %v3297
        %v4471 = vunpack.c.h.b16 %v3297
        %v4472 = vunpack.c.l.b16 %v3298
        %v4473 = vunpack.c.h.b16 %v3298
        %v4474 = vunpack.c.l.b16 %v3299
        %v4475 = vunpack.c.h.b16 %v3299
        %v4476 = vunpack.c.l.b16 %v3300
        %v4477 = vunpack.c.h.b16 %v3300
        %v4478 = vunpack.c.l.b16 %v3301
        %v4479 = vunpack.c.h.b16 %v3301
        %v4480 = vunpack.c.l.b16 %v3302
        %v4481 = vunpack.c.h.b16 %v3302
        %v4482 = vunpack.c.l.b16 %v3303
        %v4483 = vunpack.c.h.b16 %v3303
        %v4484 = vunpack.c.l.b16 %v3304
        %v4485 = vunpack.c.h.b16 %v3304
        %v4486 = vunpack.c.l.b16 %v3305
        %v4487 = vunpack.c.h.b16 %v3305
        %v4488 = vpack.c.b16 %v4460, %v4456
        %v4489 = vpack.c.b16 %v4461, %v4457
        %v4490 = vpack.c.b16 %v4462, %v4458
        %v4491 = vpack.c.b16 %v4463, %v4459
        %v4492 = vpack.c.b16 %v4468, %v4464
        %v4493 = vpack.c.b16 %v4469, %v4465
        %v4494 = vpack.c.b16 %v4470, %v4466
        %v4495 = vpack.c.b16 %v4471, %v4467
        %v4496 = vpack.c.b16 %v4476, %v4472
        %v4497 = vpack.c.b16 %v4477, %v4473
        %v4498 = vpack.c.b16 %v4478, %v4474
        %v4499 = vpack.c.b16 %v4479, %v4475
        %v4500 = vpack.c.b16 %v4484, %v4480
        %v4501 = vpack.c.b16 %v4485, %v4481
        %v4502 = vpack.c.b16 %v4486, %v4482
        %v4503 = vpack.c.b16 %v4487, %v4483
        %v4521 = vsel %vm3370, %v4439, 0
        %4523 = vmatprep.subr.bf16.mxu0 0
        %4524 = vmatpush1.bf16.msra.mxu0 0
        %4525 = vmatprep.subr.bf16.mxu0 0
        %4526 = vmatpush1.bf16.msra.mxu0 0
        %4527 = vmatprep.subr.bf16.mxu0 0
        %4528 = vmatpush1.bf16.msra.mxu0 0
        %4529 = vmatprep.subr.bf16.mxu0 0
        %4530 = vmatpush1.bf16.msra.mxu0 0
        %4531 = vmatprep.subr.bf16.mxu0 %v4501
        %4532 = vmatpush1.bf16.msra.mxu0 %v4500
        %4533 = vmatprep.subr.bf16.mxu0 %v4497
        %4534 = vmatpush1.bf16.msra.mxu0 %v4496
        %4535 = vmatprep.subr.bf16.mxu0 %v4493
        %4536 = vmatpush1.bf16.msra.mxu0 %v4492
        %4537 = vmatprep.subr.bf16.mxu0 %v4489
        %4538 = vmatpush1.bf16.msra.mxu0 %v4488
        %4539 = vmatprep.subr.bf16.mxu0 0
        %4540 = vmatpush2.bf16.msra.mxu0 0
        %4541 = vmatprep.subr.bf16.mxu0 0
        %4542 = vmatpush2.bf16.msra.mxu0 0
        %4543 = vmatprep.subr.bf16.mxu0 0
        %4544 = vmatpush2.bf16.msra.mxu0 0
        %4545 = vmatprep.subr.bf16.mxu0 0
        %4546 = vmatpush2.bf16.msra.mxu0 0
        %4547 = vmatprep.subr.bf16.mxu0 0
        %4548 = vmatpush2.bf16.msra.mxu0 0
        %4549 = vmatprep.subr.bf16.mxu0 0
        %4550 = vmatpush2.bf16.msra.mxu0 0
        %4551 = vmatprep.subr.bf16.mxu0 0
        %4552 = vmatpush2.bf16.msra.mxu0 0
        %4553 = vmatprep.subr.bf16.mxu0 0
        %4554 = vmatpush2.bf16.msra.mxu0 0
        %4555 = vmatprep.mubr.bf16.mxu0 0
        %4556 = vmatmul.mubr.bf16.gmra.mxu0 %v4521
        %v4557 = vpop.f32.mrf.mxu0
        %v4558 = vadd.f32 0.0, %v4557
        %v4559 = vpop.f32.mrf.mxu0
        %v4560 = vadd.f32 0.0, %v4559
        %v4561 = vpop.f32.mrf.mxu0
        %v4562 = vpop.f32.mrf.mxu0
        %4563 = vdwg.mxu0
        %4564 = vmatprep.subr.bf16.mxu0 0
        %4565 = vmatpush1.bf16.msra.mxu0 0
        %4566 = vmatprep.subr.bf16.mxu0 0
        %4567 = vmatpush1.bf16.msra.mxu0 0
        %4568 = vmatprep.subr.bf16.mxu0 0
        %4569 = vmatpush1.bf16.msra.mxu0 0
        %4570 = vmatprep.subr.bf16.mxu0 0
        %4571 = vmatpush1.bf16.msra.mxu0 0
        %4572 = vmatprep.subr.bf16.mxu0 %v4503
        %4573 = vmatpush1.bf16.msra.mxu0 %v4502
        %4574 = vmatprep.subr.bf16.mxu0 %v4499
        %4575 = vmatpush1.bf16.msra.mxu0 %v4498
        %4576 = vmatprep.subr.bf16.mxu0 %v4495
        %4577 = vmatpush1.bf16.msra.mxu0 %v4494
        %4578 = vmatprep.subr.bf16.mxu0 %v4491
        %4579 = vmatpush1.bf16.msra.mxu0 %v4490
        %4580 = vmatprep.subr.bf16.mxu0 0
        %4581 = vmatpush2.bf16.msra.mxu0 0
        %4582 = vmatprep.subr.bf16.mxu0 0
        %4583 = vmatpush2.bf16.msra.mxu0 0
        %4584 = vmatprep.subr.bf16.mxu0 0
        %4585 = vmatpush2.bf16.msra.mxu0 0
        %4586 = vmatprep.subr.bf16.mxu0 0
        %4587 = vmatpush2.bf16.msra.mxu0 0
        %4588 = vmatprep.subr.bf16.mxu0 0
        %4589 = vmatpush2.bf16.msra.mxu0 0
        %4590 = vmatprep.subr.bf16.mxu0 0
        %4591 = vmatpush2.bf16.msra.mxu0 0
        %4592 = vmatprep.subr.bf16.mxu0 0
        %4593 = vmatpush2.bf16.msra.mxu0 0
        %4594 = vmatprep.subr.bf16.mxu0 0
        %4595 = vmatpush2.bf16.msra.mxu0 0
        %4596 = vmatprep.mubr.bf16.mxu0 0
        %4597 = vmatmul.mubr.bf16.gmra.mxu0 %v4521
        %v4598 = vpop.f32.mrf.mxu0
        %v4599 = vadd.f32 0.0, %v4598
        %v4600 = vpop.f32.mrf.mxu0
        %v4601 = vadd.f32 0.0, %v4600
        %v4602 = vpop.f32.mrf.mxu0
        %v4603 = vpop.f32.mrf.mxu0
        %4604 = vdwg.mxu0
        %v4605 = vadd.f32 %v4295, %v4558
        %v4606 = vadd.f32 %v4296, %v4560
        %v4607 = vadd.f32 %v4297, %v4599
        %v4608 = vadd.f32 %v4298, %v4601
        %v4610 = vsel %vm3370, %v3234, 0
        %v4613 = vsel %vm3370, %v3238, 0
        %4615 = vmatprep.subr.mxu0 0.0
        %4616 = vmatpush1.xpose.msra.mxu0 0.0
        %4617 = vmatprep.subr.mxu0 0.0
        %4618 = vmatpush1.xpose.msra.mxu0 0.0
        %4619 = vmatprep.subr.mxu0 0.0
        %4620 = vmatpush1.xpose.msra.mxu0 0.0
        %4621 = vmatprep.subr.mxu0 0.0
        %4622 = vmatpush1.xpose.msra.mxu0 0.0
        %4623 = vmatprep.subr.mxu0 0.0
        %4624 = vmatpush1.xpose.msra.mxu0 0.0
        %4625 = vmatprep.subr.mxu0 0.0
        %4626 = vmatpush1.xpose.msra.mxu0 0.0
        %4627 = vmatprep.subr.mxu0 0.0
        %4628 = vmatpush1.xpose.msra.mxu0 0.0
        %4629 = vmatprep.subr.mxu0 0.0
        %4630 = vmatpush1.xpose.msra.mxu0 0.0
        %4631 = vmatprep.subr.mxu0 0.0
        %4632 = vmatpush1.xpose.msra.mxu0 0.0
        %4633 = vmatprep.subr.mxu0 0.0
        %4634 = vmatpush1.xpose.msra.mxu0 0.0
        %4635 = vmatprep.subr.mxu0 0.0
        %4636 = vmatpush1.xpose.msra.mxu0 0.0
        %4637 = vmatprep.subr.mxu0 0.0
        %4638 = vmatpush1.xpose.msra.mxu0 0.0
        %4639 = vmatprep.subr.mxu0 0.0
        %4640 = vmatpush1.xpose.msra.mxu0 0.0
        %4641 = vmatprep.subr.mxu0 0.0
        %4642 = vmatpush1.xpose.msra.mxu0 0.0
        %4643 = vmatprep.subr.mxu0 0.0
        %4644 = vmatpush1.xpose.msra.mxu0 0.0
        %4645 = vmatprep.subr.mxu0 0.0
        %4646 = vmatpush1.xpose.msra.mxu0 %v4613
        %4647 = vmatprep.subr.mxu0 0.0
        %4648 = vmatpush2.xpose.msra.mxu0 0.0
        %4649 = vmatprep.subr.mxu0 0.0
        %4650 = vmatpush2.xpose.msra.mxu0 0.0
        %4651 = vmatprep.subr.mxu0 0.0
        %4652 = vmatpush2.xpose.msra.mxu0 0.0
        %4653 = vmatprep.subr.mxu0 0.0
        %4654 = vmatpush2.xpose.msra.mxu0 0.0
        %4655 = vmatprep.subr.mxu0 0.0
        %4656 = vmatpush2.xpose.msra.mxu0 0.0
        %4657 = vmatprep.subr.mxu0 0.0
        %4658 = vmatpush2.xpose.msra.mxu0 0.0
        %4659 = vmatprep.subr.mxu0 0.0
        %4660 = vmatpush2.xpose.msra.mxu0 0.0
        %4661 = vmatprep.subr.mxu0 0.0
        %4662 = vmatpush2.xpose.msra.mxu0 0.0
        %4663 = vmatprep.subr.mxu0 0.0
        %4664 = vmatpush2.xpose.msra.mxu0 0.0
        %4665 = vmatprep.subr.mxu0 0.0
        %4666 = vmatpush2.xpose.msra.mxu0 0.0
        %4667 = vmatprep.subr.mxu0 0.0
        %4668 = vmatpush2.xpose.msra.mxu0 0.0
        %4669 = vmatprep.subr.mxu0 0.0
        %4670 = vmatpush2.xpose.msra.mxu0 0.0
        %4671 = vmatprep.subr.mxu0 0.0
        %4672 = vmatpush2.xpose.msra.mxu0 0.0
        %4673 = vmatprep.subr.mxu0 0.0
        %4674 = vmatpush2.xpose.msra.mxu0 0.0
        %4675 = vmatprep.subr.mxu0 0.0
        %4676 = vmatpush2.xpose.msra.mxu0 0.0
        %4677 = vmatprep.subr.mxu0 0.0
        %4678 = vmatpush2.xpose.msra.mxu0 0.0
        %4679 = vmatprep.mubr.f32.mxu0 0.0
        %4680 = vmatmul.mubr.f32.gmra.mxu0 %v4610
        %v4681 = vpop.f32.mrf.mxu0
        %v4682 = vadd.f32 0.0, %v4681
        %v4683 = vpop.f32.mrf.mxu0
        %4684 = vdwg.mxu0
        %v4685 = vsel %vm3447, %v4682, -inf
        %4686 = vmax.xlane.f32.xlu0 %v4685
        %v4687 = vpop.xlane.xlu0 %4686
        %v4688 = vsub.f32 %v4682, %v4687
        %v4689 = vmul.f32 %v4688, 1.442695
        %v4690 = vpow.pop %v4689
        %v4691 = vsel %vm3447, %v4690, 0.0
        %4692 = vadd.xlane.f32.xlu0 %v4691
        %v4693 = vpop.xlane.xlu0 %4692
        %v4694 = vrcp.pop %v4693
        %v4695 = vmul.f32 %v4690, %v4694
        %s4696 = scalar_lea.vmem %s365, 32 [#allocation6]
        %4697 = vst.msk [vmem:[%s4696] sm:$0xff] %vm3447, %v4695
        %v4698 = vpack.c.bf16 %v4695, %v4695
        %v4700 = vsel %vm3447, %v4698, 0
        %v4703 = vsel %vm3464, %v3241, 0
        %4705 = vmatprep.subr.bf16.mxu0 0
        %4706 = vmatpush1.bf16.msra.mxu0 0
        %4707 = vmatprep.subr.bf16.mxu0 0
        %4708 = vmatpush1.bf16.msra.mxu0 0
        %4709 = vmatprep.subr.bf16.mxu0 0
        %4710 = vmatpush1.bf16.msra.mxu0 0
        %4711 = vmatprep.subr.bf16.mxu0 0
        %4712 = vmatpush1.bf16.msra.mxu0 0
        %4713 = vmatprep.subr.bf16.mxu0 0
        %4714 = vmatpush1.bf16.msra.mxu0 0
        %4715 = vmatprep.subr.bf16.mxu0 0
        %4716 = vmatpush1.bf16.msra.mxu0 0
        %4717 = vmatprep.subr.bf16.mxu0 0
        %4718 = vmatpush1.bf16.msra.mxu0 0
        %4719 = vmatprep.subr.bf16.mxu0 0
        %4720 = vmatpush1.bf16.msra.mxu0 %v4703
        %4721 = vmatprep.subr.bf16.mxu0 0
        %4722 = vmatpush2.bf16.msra.mxu0 0
        %4723 = vmatprep.subr.bf16.mxu0 0
        %4724 = vmatpush2.bf16.msra.mxu0 0
        %4725 = vmatprep.subr.bf16.mxu0 0
        %4726 = vmatpush2.bf16.msra.mxu0 0
        %4727 = vmatprep.subr.bf16.mxu0 0
        %4728 = vmatpush2.bf16.msra.mxu0 0
        %4729 = vmatprep.subr.bf16.mxu0 0
        %4730 = vmatpush2.bf16.msra.mxu0 0
        %4731 = vmatprep.subr.bf16.mxu0 0
        %4732 = vmatpush2.bf16.msra.mxu0 0
        %4733 = vmatprep.subr.bf16.mxu0 0
        %4734 = vmatpush2.bf16.msra.mxu0 0
        %4735 = vmatprep.subr.bf16.mxu0 0
        %4736 = vmatpush2.bf16.msra.mxu0 0
        %4737 = vmatprep.mubr.bf16.mxu0 0
        %4738 = vmatmul.mubr.bf16.gmra.mxu0 %v4700
        %v4739 = vpop.f32.mrf.mxu0
        %v4740 = vadd.f32 0.0, %v4739
        %v4741 = vpop.f32.mrf.mxu0
        %v4742 = vpop.f32.mrf.mxu0
        %v4743 = vpop.f32.mrf.mxu0
        %4744 = vdwg.mxu0
        %v4745 = vpack.c.bf16 %v4740, %v4740
        %v4762 = vunpack.c.l.b16 %v3306
        %v4763 = vunpack.c.h.b16 %v3306
        %v4764 = vunpack.c.l.b16 %v3307
        %v4765 = vunpack.c.h.b16 %v3307
        %v4766 = vunpack.c.l.b16 %v3308
        %v4767 = vunpack.c.h.b16 %v3308
        %v4768 = vunpack.c.l.b16 %v3309
        %v4769 = vunpack.c.h.b16 %v3309
        %v4770 = vunpack.c.l.b16 %v3310
        %v4771 = vunpack.c.h.b16 %v3310
        %v4772 = vunpack.c.l.b16 %v3311
        %v4773 = vunpack.c.h.b16 %v3311
        %v4774 = vunpack.c.l.b16 %v3312
        %v4775 = vunpack.c.h.b16 %v3312
        %v4776 = vunpack.c.l.b16 %v3313
        %v4777 = vunpack.c.h.b16 %v3313
        %v4778 = vunpack.c.l.b16 %v3314
        %v4779 = vunpack.c.h.b16 %v3314
        %v4780 = vunpack.c.l.b16 %v3315
        %v4781 = vunpack.c.h.b16 %v3315
        %v4782 = vunpack.c.l.b16 %v3316
        %v4783 = vunpack.c.h.b16 %v3316
        %v4784 = vunpack.c.l.b16 %v3317
        %v4785 = vunpack.c.h.b16 %v3317
        %v4786 = vunpack.c.l.b16 %v3318
        %v4787 = vunpack.c.h.b16 %v3318
        %v4788 = vunpack.c.l.b16 %v3319
        %v4789 = vunpack.c.h.b16 %v3319
        %v4790 = vunpack.c.l.b16 %v3320
        %v4791 = vunpack.c.h.b16 %v3320
        %v4792 = vunpack.c.l.b16 %v3321
        %v4793 = vunpack.c.h.b16 %v3321
        %v4794 = vpack.c.b16 %v4766, %v4762
        %v4795 = vpack.c.b16 %v4767, %v4763
        %v4796 = vpack.c.b16 %v4768, %v4764
        %v4797 = vpack.c.b16 %v4769, %v4765
        %v4798 = vpack.c.b16 %v4774, %v4770
        %v4799 = vpack.c.b16 %v4775, %v4771
        %v4800 = vpack.c.b16 %v4776, %v4772
        %v4801 = vpack.c.b16 %v4777, %v4773
        %v4802 = vpack.c.b16 %v4782, %v4778
        %v4803 = vpack.c.b16 %v4783, %v4779
        %v4804 = vpack.c.b16 %v4784, %v4780
        %v4805 = vpack.c.b16 %v4785, %v4781
        %v4806 = vpack.c.b16 %v4790, %v4786
        %v4807 = vpack.c.b16 %v4791, %v4787
        %v4808 = vpack.c.b16 %v4792, %v4788
        %v4809 = vpack.c.b16 %v4793, %v4789
        %v4827 = vsel %vm3370, %v4745, 0
        %4829 = vmatprep.subr.bf16.mxu0 0
        %4830 = vmatpush1.bf16.msra.mxu0 0
        %4831 = vmatprep.subr.bf16.mxu0 0
        %4832 = vmatpush1.bf16.msra.mxu0 0
        %4833 = vmatprep.subr.bf16.mxu0 0
        %4834 = vmatpush1.bf16.msra.mxu0 0
        %4835 = vmatprep.subr.bf16.mxu0 0
        %4836 = vmatpush1.bf16.msra.mxu0 0
        %4837 = vmatprep.subr.bf16.mxu0 %v4807
        %4838 = vmatpush1.bf16.msra.mxu0 %v4806
        %4839 = vmatprep.subr.bf16.mxu0 %v4803
        %4840 = vmatpush1.bf16.msra.mxu0 %v4802
        %4841 = vmatprep.subr.bf16.mxu0 %v4799
        %4842 = vmatpush1.bf16.msra.mxu0 %v4798
        %4843 = vmatprep.subr.bf16.mxu0 %v4795
        %4844 = vmatpush1.bf16.msra.mxu0 %v4794
        %4845 = vmatprep.subr.bf16.mxu0 0
        %4846 = vmatpush2.bf16.msra.mxu0 0
        %4847 = vmatprep.subr.bf16.mxu0 0
        %4848 = vmatpush2.bf16.msra.mxu0 0
        %4849 = vmatprep.subr.bf16.mxu0 0
        %4850 = vmatpush2.bf16.msra.mxu0 0
        %4851 = vmatprep.subr.bf16.mxu0 0
        %4852 = vmatpush2.bf16.msra.mxu0 0
        %4853 = vmatprep.subr.bf16.mxu0 0
        %4854 = vmatpush2.bf16.msra.mxu0 0
        %4855 = vmatprep.subr.bf16.mxu0 0
        %4856 = vmatpush2.bf16.msra.mxu0 0
        %4857 = vmatprep.subr.bf16.mxu0 0
        %4858 = vmatpush2.bf16.msra.mxu0 0
        %4859 = vmatprep.subr.bf16.mxu0 0
        %4860 = vmatpush2.bf16.msra.mxu0 0
        %4861 = vmatprep.mubr.bf16.mxu0 0
        %4862 = vmatmul.mubr.bf16.gmra.mxu0 %v4827
        %v4863 = vpop.f32.mrf.mxu0
        %v4864 = vadd.f32 0.0, %v4863
        %v4865 = vpop.f32.mrf.mxu0
        %v4866 = vadd.f32 0.0, %v4865
        %v4867 = vpop.f32.mrf.mxu0
        %v4868 = vpop.f32.mrf.mxu0
        %4869 = vdwg.mxu0
        %4870 = vmatprep.subr.bf16.mxu0 0
        %4871 = vmatpush1.bf16.msra.mxu0 0
        %4872 = vmatprep.subr.bf16.mxu0 0
        %4873 = vmatpush1.bf16.msra.mxu0 0
        %4874 = vmatprep.subr.bf16.mxu0 0
        %4875 = vmatpush1.bf16.msra.mxu0 0
        %4876 = vmatprep.subr.bf16.mxu0 0
        %4877 = vmatpush1.bf16.msra.mxu0 0
        %4878 = vmatprep.subr.bf16.mxu0 %v4809
        %4879 = vmatpush1.bf16.msra.mxu0 %v4808
        %4880 = vmatprep.subr.bf16.mxu0 %v4805
        %4881 = vmatpush1.bf16.msra.mxu0 %v4804
        %4882 = vmatprep.subr.bf16.mxu0 %v4801
        %4883 = vmatpush1.bf16.msra.mxu0 %v4800
        %4884 = vmatprep.subr.bf16.mxu0 %v4797
        %4885 = vmatpush1.bf16.msra.mxu0 %v4796
        %4886 = vmatprep.subr.bf16.mxu0 0
        %4887 = vmatpush2.bf16.msra.mxu0 0
        %4888 = vmatprep.subr.bf16.mxu0 0
        %4889 = vmatpush2.bf16.msra.mxu0 0
        %4890 = vmatprep.subr.bf16.mxu0 0
        %4891 = vmatpush2.bf16.msra.mxu0 0
        %4892 = vmatprep.subr.bf16.mxu0 0
        %4893 = vmatpush2.bf16.msra.mxu0 0
        %4894 = vmatprep.subr.bf16.mxu0 0
        %4895 = vmatpush2.bf16.msra.mxu0 0
        %4896 = vmatprep.subr.bf16.mxu0 0
        %4897 = vmatpush2.bf16.msra.mxu0 0
        %4898 = vmatprep.subr.bf16.mxu0 0
        %4899 = vmatpush2.bf16.msra.mxu0 0
        %4900 = vmatprep.subr.bf16.mxu0 0
        %4901 = vmatpush2.bf16.msra.mxu0 0
        %4902 = vmatprep.mubr.bf16.mxu0 0
        %4903 = vmatmul.mubr.bf16.gmra.mxu0 %v4827
        %v4904 = vpop.f32.mrf.mxu0
        %v4905 = vadd.f32 0.0, %v4904
        %v4906 = vpop.f32.mrf.mxu0
        %v4907 = vadd.f32 0.0, %v4906
        %v4908 = vpop.f32.mrf.mxu0
        %v4909 = vpop.f32.mrf.mxu0
        %4910 = vdwg.mxu0
        %v4911 = vadd.f32 %v4605, %v4864
        %v4912 = vadd.f32 %v4606, %v4866
        %v4913 = vadd.f32 %v4607, %v4905
        %v4914 = vadd.f32 %v4608, %v4907
        %4915 = vrot.lane.b32.xlu0 %v3234, 64
        %v4916 = vpop.permute.xlu0 %4915
        %4917 = vrot.lane.b32.xlu0 %v3238, 64
        %v4918 = vpop.permute.xlu0 %4917
        %v4919 = vsel %vm3370, %v4916, 0
        %v4921 = vsel %vm3370, %v4918, 0
        %4923 = vmatprep.subr.mxu0 0.0
        %4924 = vmatpush1.xpose.msra.mxu0 0.0
        %4925 = vmatprep.subr.mxu0 0.0
        %4926 = vmatpush1.xpose.msra.mxu0 0.0
        %4927 = vmatprep.subr.mxu0 0.0
        %4928 = vmatpush1.xpose.msra.mxu0 0.0
        %4929 = vmatprep.subr.mxu0 0.0
        %4930 = vmatpush1.xpose.msra.mxu0 0.0
        %4931 = vmatprep.subr.mxu0 0.0
        %4932 = vmatpush1.xpose.msra.mxu0 0.0
        %4933 = vmatprep.subr.mxu0 0.0
        %4934 = vmatpush1.xpose.msra.mxu0 0.0
        %4935 = vmatprep.subr.mxu0 0.0
        %4936 = vmatpush1.xpose.msra.mxu0 0.0
        %4937 = vmatprep.subr.mxu0 0.0
        %4938 = vmatpush1.xpose.msra.mxu0 0.0
        %4939 = vmatprep.subr.mxu0 0.0
        %4940 = vmatpush1.xpose.msra.mxu0 0.0
        %4941 = vmatprep.subr.mxu0 0.0
        %4942 = vmatpush1.xpose.msra.mxu0 0.0
        %4943 = vmatprep.subr.mxu0 0.0
        %4944 = vmatpush1.xpose.msra.mxu0 0.0
        %4945 = vmatprep.subr.mxu0 0.0
        %4946 = vmatpush1.xpose.msra.mxu0 0.0
        %4947 = vmatprep.subr.mxu0 0.0
        %4948 = vmatpush1.xpose.msra.mxu0 0.0
        %4949 = vmatprep.subr.mxu0 0.0
        %4950 = vmatpush1.xpose.msra.mxu0 0.0
        %4951 = vmatprep.subr.mxu0 0.0
        %4952 = vmatpush1.xpose.msra.mxu0 0.0
        %4953 = vmatprep.subr.mxu0 0.0
        %4954 = vmatpush1.xpose.msra.mxu0 %v4921
        %4955 = vmatprep.subr.mxu0 0.0
        %4956 = vmatpush2.xpose.msra.mxu0 0.0
        %4957 = vmatprep.subr.mxu0 0.0
        %4958 = vmatpush2.xpose.msra.mxu0 0.0
        %4959 = vmatprep.subr.mxu0 0.0
        %4960 = vmatpush2.xpose.msra.mxu0 0.0
        %4961 = vmatprep.subr.mxu0 0.0
        %4962 = vmatpush2.xpose.msra.mxu0 0.0
        %4963 = vmatprep.subr.mxu0 0.0
        %4964 = vmatpush2.xpose.msra.mxu0 0.0
        %4965 = vmatprep.subr.mxu0 0.0
        %4966 = vmatpush2.xpose.msra.mxu0 0.0
        %4967 = vmatprep.subr.mxu0 0.0
        %4968 = vmatpush2.xpose.msra.mxu0 0.0
        %4969 = vmatprep.subr.mxu0 0.0
        %4970 = vmatpush2.xpose.msra.mxu0 0.0
        %4971 = vmatprep.subr.mxu0 0.0
        %4972 = vmatpush2.xpose.msra.mxu0 0.0
        %4973 = vmatprep.subr.mxu0 0.0
        %4974 = vmatpush2.xpose.msra.mxu0 0.0
        %4975 = vmatprep.subr.mxu0 0.0
        %4976 = vmatpush2.xpose.msra.mxu0 0.0
        %4977 = vmatprep.subr.mxu0 0.0
        %4978 = vmatpush2.xpose.msra.mxu0 0.0
        %4979 = vmatprep.subr.mxu0 0.0
        %4980 = vmatpush2.xpose.msra.mxu0 0.0
        %4981 = vmatprep.subr.mxu0 0.0
        %4982 = vmatpush2.xpose.msra.mxu0 0.0
        %4983 = vmatprep.subr.mxu0 0.0
        %4984 = vmatpush2.xpose.msra.mxu0 0.0
        %4985 = vmatprep.subr.mxu0 0.0
        %4986 = vmatpush2.xpose.msra.mxu0 0.0
        %4987 = vmatprep.mubr.f32.mxu0 0.0
        %4988 = vmatmul.mubr.f32.gmra.mxu0 %v4919
        %v4989 = vpop.f32.mrf.mxu0
        %v4990 = vadd.f32 0.0, %v4989
        %v4991 = vpop.f32.mrf.mxu0
        %4992 = vdwg.mxu0
        %v4993 = vsel %vm3447, %v4990, -inf
        %4994 = vmax.xlane.f32.xlu0 %v4993
        %v4995 = vpop.xlane.xlu0 %4994
        %v4996 = vsub.f32 %v4990, %v4995
        %v4997 = vmul.f32 %v4996, 1.442695
        %v4998 = vpow.pop %v4997
        %v4999 = vsel %vm3447, %v4998, 0.0
        %5000 = vadd.xlane.f32.xlu0 %v4999
        %v5001 = vpop.xlane.xlu0 %5000
        %v5002 = vrcp.pop %v5001
        %v5003 = vmul.f32 %v4998, %v5002
        %s5004 = scalar_lea.vmem %s365, 40 [#allocation6]
        %5005 = vst.msk [vmem:[%s5004] sm:$0xff] %vm3447, %v5003
        %v5006 = vpack.c.bf16 %v5003, %v5003
        %v5008 = vunpack.c.l.b16 %v3241
        %v5009 = vpack.c.b16 %v5008, %v5008
        %5010 = vrot.lane.b32.xlu0 %v5009, 64
        %v5011 = vpop.permute.xlu0 %5010
        %v5013 = vsel %vm3447, %v5006, 0
        %v5016 = vsel %vm3464, %v5011, 0
        %5018 = vmatprep.subr.bf16.mxu0 0
        %5019 = vmatpush1.bf16.msra.mxu0 0
        %5020 = vmatprep.subr.bf16.mxu0 0
        %5021 = vmatpush1.bf16.msra.mxu0 0
        %5022 = vmatprep.subr.bf16.mxu0 0
        %5023 = vmatpush1.bf16.msra.mxu0 0
        %5024 = vmatprep.subr.bf16.mxu0 0
        %5025 = vmatpush1.bf16.msra.mxu0 0
        %5026 = vmatprep.subr.bf16.mxu0 0
        %5027 = vmatpush1.bf16.msra.mxu0 0
        %5028 = vmatprep.subr.bf16.mxu0 0
        %5029 = vmatpush1.bf16.msra.mxu0 0
        %5030 = vmatprep.subr.bf16.mxu0 0
        %5031 = vmatpush1.bf16.msra.mxu0 0
        %5032 = vmatprep.subr.bf16.mxu0 0
        %5033 = vmatpush1.bf16.msra.mxu0 %v5016
        %5034 = vmatprep.subr.bf16.mxu0 0
        %5035 = vmatpush2.bf16.msra.mxu0 0
        %5036 = vmatprep.subr.bf16.mxu0 0
        %5037 = vmatpush2.bf16.msra.mxu0 0
        %5038 = vmatprep.subr.bf16.mxu0 0
        %5039 = vmatpush2.bf16.msra.mxu0 0
        %5040 = vmatprep.subr.bf16.mxu0 0
        %5041 = vmatpush2.bf16.msra.mxu0 0
        %5042 = vmatprep.subr.bf16.mxu0 0
        %5043 = vmatpush2.bf16.msra.mxu0 0
        %5044 = vmatprep.subr.bf16.mxu0 0
        %5045 = vmatpush2.bf16.msra.mxu0 0
        %5046 = vmatprep.subr.bf16.mxu0 0
        %5047 = vmatpush2.bf16.msra.mxu0 0
        %5048 = vmatprep.subr.bf16.mxu0 0
        %5049 = vmatpush2.bf16.msra.mxu0 0
        %5050 = vmatprep.mubr.bf16.mxu0 0
        %5051 = vmatmul.mubr.bf16.gmra.mxu0 %v5013
        %v5052 = vpop.f32.mrf.mxu0
        %v5053 = vadd.f32 0.0, %v5052
        %v5054 = vpop.f32.mrf.mxu0
        %v5055 = vpop.f32.mrf.mxu0
        %v5056 = vpop.f32.mrf.mxu0
        %5057 = vdwg.mxu0
        %v5058 = vpack.c.bf16 %v5053, %v5053
        %v5075 = vunpack.c.l.b16 %v3322
        %v5076 = vunpack.c.h.b16 %v3322
        %v5077 = vunpack.c.l.b16 %v3323
        %v5078 = vunpack.c.h.b16 %v3323
        %v5079 = vunpack.c.l.b16 %v3324
        %v5080 = vunpack.c.h.b16 %v3324
        %v5081 = vunpack.c.l.b16 %v3325
        %v5082 = vunpack.c.h.b16 %v3325
        %v5083 = vunpack.c.l.b16 %v3326
        %v5084 = vunpack.c.h.b16 %v3326
        %v5085 = vunpack.c.l.b16 %v3327
        %v5086 = vunpack.c.h.b16 %v3327
        %v5087 = vunpack.c.l.b16 %v3328
        %v5088 = vunpack.c.h.b16 %v3328
        %v5089 = vunpack.c.l.b16 %v3329
        %v5090 = vunpack.c.h.b16 %v3329
        %v5091 = vunpack.c.l.b16 %v3330
        %v5092 = vunpack.c.h.b16 %v3330
        %v5093 = vunpack.c.l.b16 %v3331
        %v5094 = vunpack.c.h.b16 %v3331
        %v5095 = vunpack.c.l.b16 %v3332
        %v5096 = vunpack.c.h.b16 %v3332
        %v5097 = vunpack.c.l.b16 %v3333
        %v5098 = vunpack.c.h.b16 %v3333
        %v5099 = vunpack.c.l.b16 %v3334
        %v5100 = vunpack.c.h.b16 %v3334
        %v5101 = vunpack.c.l.b16 %v3335
        %v5102 = vunpack.c.h.b16 %v3335
        %v5103 = vunpack.c.l.b16 %v3336
        %v5104 = vunpack.c.h.b16 %v3336
        %v5105 = vunpack.c.l.b16 %v3337
        %v5106 = vunpack.c.h.b16 %v3337
        %v5107 = vpack.c.b16 %v5079, %v5075
        %v5108 = vpack.c.b16 %v5080, %v5076
        %v5109 = vpack.c.b16 %v5081, %v5077
        %v5110 = vpack.c.b16 %v5082, %v5078
        %v5111 = vpack.c.b16 %v5087, %v5083
        %v5112 = vpack.c.b16 %v5088, %v5084
        %v5113 = vpack.c.b16 %v5089, %v5085
        %v5114 = vpack.c.b16 %v5090, %v5086
        %v5115 = vpack.c.b16 %v5095, %v5091
        %v5116 = vpack.c.b16 %v5096, %v5092
        %v5117 = vpack.c.b16 %v5097, %v5093
        %v5118 = vpack.c.b16 %v5098, %v5094
        %v5119 = vpack.c.b16 %v5103, %v5099
        %v5120 = vpack.c.b16 %v5104, %v5100
        %v5121 = vpack.c.b16 %v5105, %v5101
        %v5122 = vpack.c.b16 %v5106, %v5102
        %v5140 = vsel %vm3370, %v5058, 0
        %5142 = vmatprep.subr.bf16.mxu0 0
        %5143 = vmatpush1.bf16.msra.mxu0 0
        %5144 = vmatprep.subr.bf16.mxu0 0
        %5145 = vmatpush1.bf16.msra.mxu0 0
        %5146 = vmatprep.subr.bf16.mxu0 0
        %5147 = vmatpush1.bf16.msra.mxu0 0
        %5148 = vmatprep.subr.bf16.mxu0 0
        %5149 = vmatpush1.bf16.msra.mxu0 0
        %5150 = vmatprep.subr.bf16.mxu0 %v5120
        %5151 = vmatpush1.bf16.msra.mxu0 %v5119
        %5152 = vmatprep.subr.bf16.mxu0 %v5116
        %5153 = vmatpush1.bf16.msra.mxu0 %v5115
        %5154 = vmatprep.subr.bf16.mxu0 %v5112
        %5155 = vmatpush1.bf16.msra.mxu0 %v5111
        %5156 = vmatprep.subr.bf16.mxu0 %v5108
        %5157 = vmatpush1.bf16.msra.mxu0 %v5107
        %5158 = vmatprep.subr.bf16.mxu0 0
        %5159 = vmatpush2.bf16.msra.mxu0 0
        %5160 = vmatprep.subr.bf16.mxu0 0
        %5161 = vmatpush2.bf16.msra.mxu0 0
        %5162 = vmatprep.subr.bf16.mxu0 0
        %5163 = vmatpush2.bf16.msra.mxu0 0
        %5164 = vmatprep.subr.bf16.mxu0 0
        %5165 = vmatpush2.bf16.msra.mxu0 0
        %5166 = vmatprep.subr.bf16.mxu0 0
        %5167 = vmatpush2.bf16.msra.mxu0 0
        %5168 = vmatprep.subr.bf16.mxu0 0
        %5169 = vmatpush2.bf16.msra.mxu0 0
        %5170 = vmatprep.subr.bf16.mxu0 0
        %5171 = vmatpush2.bf16.msra.mxu0 0
        %5172 = vmatprep.subr.bf16.mxu0 0
        %5173 = vmatpush2.bf16.msra.mxu0 0
        %5174 = vmatprep.mubr.bf16.mxu0 0
        %5175 = vmatmul.mubr.bf16.gmra.mxu0 %v5140
        %v5176 = vpop.f32.mrf.mxu0
        %v5177 = vadd.f32 0.0, %v5176
        %v5178 = vpop.f32.mrf.mxu0
        %v5179 = vadd.f32 0.0, %v5178
        %v5180 = vpop.f32.mrf.mxu0
        %v5181 = vpop.f32.mrf.mxu0
        %5182 = vdwg.mxu0
        %5183 = vmatprep.subr.bf16.mxu0 0
        %5184 = vmatpush1.bf16.msra.mxu0 0
        %5185 = vmatprep.subr.bf16.mxu0 0
        %5186 = vmatpush1.bf16.msra.mxu0 0
        %5187 = vmatprep.subr.bf16.mxu0 0
        %5188 = vmatpush1.bf16.msra.mxu0 0
        %5189 = vmatprep.subr.bf16.mxu0 0
        %5190 = vmatpush1.bf16.msra.mxu0 0
        %5191 = vmatprep.subr.bf16.mxu0 %v5122
        %5192 = vmatpush1.bf16.msra.mxu0 %v5121
        %5193 = vmatprep.subr.bf16.mxu0 %v5118
        %5194 = vmatpush1.bf16.msra.mxu0 %v5117
        %5195 = vmatprep.subr.bf16.mxu0 %v5114
        %5196 = vmatpush1.bf16.msra.mxu0 %v5113
        %5197 = vmatprep.subr.bf16.mxu0 %v5110
        %5198 = vmatpush1.bf16.msra.mxu0 %v5109
        %5199 = vmatprep.subr.bf16.mxu0 0
        %5200 = vmatpush2.bf16.msra.mxu0 0
        %5201 = vmatprep.subr.bf16.mxu0 0
        %5202 = vmatpush2.bf16.msra.mxu0 0
        %5203 = vmatprep.subr.bf16.mxu0 0
        %5204 = vmatpush2.bf16.msra.mxu0 0
        %5205 = vmatprep.subr.bf16.mxu0 0
        %5206 = vmatpush2.bf16.msra.mxu0 0
        %5207 = vmatprep.subr.bf16.mxu0 0
        %5208 = vmatpush2.bf16.msra.mxu0 0
        %5209 = vmatprep.subr.bf16.mxu0 0
        %5210 = vmatpush2.bf16.msra.mxu0 0
        %5211 = vmatprep.subr.bf16.mxu0 0
        %5212 = vmatpush2.bf16.msra.mxu0 0
        %5213 = vmatprep.subr.bf16.mxu0 0
        %5214 = vmatpush2.bf16.msra.mxu0 0
        %5215 = vmatprep.mubr.bf16.mxu0 0
        %5216 = vmatmul.mubr.bf16.gmra.mxu0 %v5140
        %v5217 = vpop.f32.mrf.mxu0
        %v5218 = vadd.f32 0.0, %v5217
        %v5219 = vpop.f32.mrf.mxu0
        %v5220 = vadd.f32 0.0, %v5219
        %v5221 = vpop.f32.mrf.mxu0
        %v5222 = vpop.f32.mrf.mxu0
        %5223 = vdwg.mxu0
        %v5224 = vadd.f32 %v4911, %v5177
        %v5225 = vadd.f32 %v4912, %v5179
        %v5226 = vadd.f32 %v4913, %v5218
        %v5227 = vadd.f32 %v4914, %v5220
        %v5229 = vsel %vm3370, %v3235, 0
        %v5232 = vsel %vm3370, %v3239, 0
        %5234 = vmatprep.subr.mxu0 0.0
        %5235 = vmatpush1.xpose.msra.mxu0 0.0
        %5236 = vmatprep.subr.mxu0 0.0
        %5237 = vmatpush1.xpose.msra.mxu0 0.0
        %5238 = vmatprep.subr.mxu0 0.0
        %5239 = vmatpush1.xpose.msra.mxu0 0.0
        %5240 = vmatprep.subr.mxu0 0.0
        %5241 = vmatpush1.xpose.msra.mxu0 0.0
        %5242 = vmatprep.subr.mxu0 0.0
        %5243 = vmatpush1.xpose.msra.mxu0 0.0
        %5244 = vmatprep.subr.mxu0 0.0
        %5245 = vmatpush1.xpose.msra.mxu0 0.0
        %5246 = vmatprep.subr.mxu0 0.0
        %5247 = vmatpush1.xpose.msra.mxu0 0.0
        %5248 = vmatprep.subr.mxu0 0.0
        %5249 = vmatpush1.xpose.msra.mxu0 0.0
        %5250 = vmatprep.subr.mxu0 0.0
        %5251 = vmatpush1.xpose.msra.mxu0 0.0
        %5252 = vmatprep.subr.mxu0 0.0
        %5253 = vmatpush1.xpose.msra.mxu0 0.0
        %5254 = vmatprep.subr.mxu0 0.0
        %5255 = vmatpush1.xpose.msra.mxu0 0.0
        %5256 = vmatprep.subr.mxu0 0.0
        %5257 = vmatpush1.xpose.msra.mxu0 0.0
        %5258 = vmatprep.subr.mxu0 0.0
        %5259 = vmatpush1.xpose.msra.mxu0 0.0
        %5260 = vmatprep.subr.mxu0 0.0
        %5261 = vmatpush1.xpose.msra.mxu0 0.0
        %5262 = vmatprep.subr.mxu0 0.0
        %5263 = vmatpush1.xpose.msra.mxu0 0.0
        %5264 = vmatprep.subr.mxu0 0.0
        %5265 = vmatpush1.xpose.msra.mxu0 %v5232
        %5266 = vmatprep.subr.mxu0 0.0
        %5267 = vmatpush2.xpose.msra.mxu0 0.0
        %5268 = vmatprep.subr.mxu0 0.0
        %5269 = vmatpush2.xpose.msra.mxu0 0.0
        %5270 = vmatprep.subr.mxu0 0.0
        %5271 = vmatpush2.xpose.msra.mxu0 0.0
        %5272 = vmatprep.subr.mxu0 0.0
        %5273 = vmatpush2.xpose.msra.mxu0 0.0
        %5274 = vmatprep.subr.mxu0 0.0
        %5275 = vmatpush2.xpose.msra.mxu0 0.0
        %5276 = vmatprep.subr.mxu0 0.0
        %5277 = vmatpush2.xpose.msra.mxu0 0.0
        %5278 = vmatprep.subr.mxu0 0.0
        %5279 = vmatpush2.xpose.msra.mxu0 0.0
        %5280 = vmatprep.subr.mxu0 0.0
        %5281 = vmatpush2.xpose.msra.mxu0 0.0
        %5282 = vmatprep.subr.mxu0 0.0
        %5283 = vmatpush2.xpose.msra.mxu0 0.0
        %5284 = vmatprep.subr.mxu0 0.0
        %5285 = vmatpush2.xpose.msra.mxu0 0.0
        %5286 = vmatprep.subr.mxu0 0.0
        %5287 = vmatpush2.xpose.msra.mxu0 0.0
        %5288 = vmatprep.subr.mxu0 0.0
        %5289 = vmatpush2.xpose.msra.mxu0 0.0
        %5290 = vmatprep.subr.mxu0 0.0
        %5291 = vmatpush2.xpose.msra.mxu0 0.0
        %5292 = vmatprep.subr.mxu0 0.0
        %5293 = vmatpush2.xpose.msra.mxu0 0.0
        %5294 = vmatprep.subr.mxu0 0.0
        %5295 = vmatpush2.xpose.msra.mxu0 0.0
        %5296 = vmatprep.subr.mxu0 0.0
        %5297 = vmatpush2.xpose.msra.mxu0 0.0
        %5298 = vmatprep.mubr.f32.mxu0 0.0
        %5299 = vmatmul.mubr.f32.gmra.mxu0 %v5229
        %v5300 = vpop.f32.mrf.mxu0
        %v5301 = vadd.f32 0.0, %v5300
        %v5302 = vpop.f32.mrf.mxu0
        %5303 = vdwg.mxu0
        %v5304 = vsel %vm3447, %v5301, -inf
        %5305 = vmax.xlane.f32.xlu0 %v5304
        %v5306 = vpop.xlane.xlu0 %5305
        %v5307 = vsub.f32 %v5301, %v5306
        %v5308 = vmul.f32 %v5307, 1.442695
        %v5309 = vpow.pop %v5308
        %v5310 = vsel %vm3447, %v5309, 0.0
        %5311 = vadd.xlane.f32.xlu0 %v5310
        %v5312 = vpop.xlane.xlu0 %5311
        %v5313 = vrcp.pop %v5312
        %v5314 = vmul.f32 %v5309, %v5313
        %s5315 = scalar_lea.vmem %s365, 48 [#allocation6]
        %5316 = vst.msk [vmem:[%s5315] sm:$0xff] %vm3447, %v5314
        %v5317 = vpack.c.bf16 %v5314, %v5314
        %v5318 = vunpack.c.h.b16 %v3241
        %v5319 = vpack.c.b16 %v5318, %v5318
        %v5321 = vsel %vm3447, %v5317, 0
        %v5324 = vsel %vm3464, %v5319, 0
        %5326 = vmatprep.subr.bf16.mxu0 0
        %5327 = vmatpush1.bf16.msra.mxu0 0
        %5328 = vmatprep.subr.bf16.mxu0 0
        %5329 = vmatpush1.bf16.msra.mxu0 0
        %5330 = vmatprep.subr.bf16.mxu0 0
        %5331 = vmatpush1.bf16.msra.mxu0 0
        %5332 = vmatprep.subr.bf16.mxu0 0
        %5333 = vmatpush1.bf16.msra.mxu0 0
        %5334 = vmatprep.subr.bf16.mxu0 0
        %5335 = vmatpush1.bf16.msra.mxu0 0
        %5336 = vmatprep.subr.bf16.mxu0 0
        %5337 = vmatpush1.bf16.msra.mxu0 0
        %5338 = vmatprep.subr.bf16.mxu0 0
        %5339 = vmatpush1.bf16.msra.mxu0 0
        %5340 = vmatprep.subr.bf16.mxu0 0
        %5341 = vmatpush1.bf16.msra.mxu0 %v5324
        %5342 = vmatprep.subr.bf16.mxu0 0
        %5343 = vmatpush2.bf16.msra.mxu0 0
        %5344 = vmatprep.subr.bf16.mxu0 0
        %5345 = vmatpush2.bf16.msra.mxu0 0
        %5346 = vmatprep.subr.bf16.mxu0 0
        %5347 = vmatpush2.bf16.msra.mxu0 0
        %5348 = vmatprep.subr.bf16.mxu0 0
        %5349 = vmatpush2.bf16.msra.mxu0 0
        %5350 = vmatprep.subr.bf16.mxu0 0
        %5351 = vmatpush2.bf16.msra.mxu0 0
        %5352 = vmatprep.subr.bf16.mxu0 0
        %5353 = vmatpush2.bf16.msra.mxu0 0
        %5354 = vmatprep.subr.bf16.mxu0 0
        %5355 = vmatpush2.bf16.msra.mxu0 0
        %5356 = vmatprep.subr.bf16.mxu0 0
        %5357 = vmatpush2.bf16.msra.mxu0 0
        %5358 = vmatprep.mubr.bf16.mxu0 0
        %5359 = vmatmul.mubr.bf16.gmra.mxu0 %v5321
        %v5360 = vpop.f32.mrf.mxu0
        %v5361 = vadd.f32 0.0, %v5360
        %v5362 = vpop.f32.mrf.mxu0
        %v5363 = vpop.f32.mrf.mxu0
        %v5364 = vpop.f32.mrf.mxu0
        %5365 = vdwg.mxu0
        %v5366 = vpack.c.bf16 %v5361, %v5361
        %v5383 = vunpack.c.l.b16 %v3338
        %v5384 = vunpack.c.h.b16 %v3338
        %v5385 = vunpack.c.l.b16 %v3339
        %v5386 = vunpack.c.h.b16 %v3339
        %v5387 = vunpack.c.l.b16 %v3340
        %v5388 = vunpack.c.h.b16 %v3340
        %v5389 = vunpack.c.l.b16 %v3341
        %v5390 = vunpack.c.h.b16 %v3341
        %v5391 = vunpack.c.l.b16 %v3342
        %v5392 = vunpack.c.h.b16 %v3342
        %v5393 = vunpack.c.l.b16 %v3343
        %v5394 = vunpack.c.h.b16 %v3343
        %v5395 = vunpack.c.l.b16 %v3344
        %v5396 = vunpack.c.h.b16 %v3344
        %v5397 = vunpack.c.l.b16 %v3345
        %v5398 = vunpack.c.h.b16 %v3345
        %v5399 = vunpack.c.l.b16 %v3346
        %v5400 = vunpack.c.h.b16 %v3346
        %v5401 = vunpack.c.l.b16 %v3347
        %v5402 = vunpack.c.h.b16 %v3347
        %v5403 = vunpack.c.l.b16 %v3348
        %v5404 = vunpack.c.h.b16 %v3348
        %v5405 = vunpack.c.l.b16 %v3349
        %v5406 = vunpack.c.h.b16 %v3349
        %v5407 = vunpack.c.l.b16 %v3350
        %v5408 = vunpack.c.h.b16 %v3350
        %v5409 = vunpack.c.l.b16 %v3351
        %v5410 = vunpack.c.h.b16 %v3351
        %v5411 = vunpack.c.l.b16 %v3352
        %v5412 = vunpack.c.h.b16 %v3352
        %v5413 = vunpack.c.l.b16 %v3353
        %v5414 = vunpack.c.h.b16 %v3353
        %v5415 = vpack.c.b16 %v5387, %v5383
        %v5416 = vpack.c.b16 %v5388, %v5384
        %v5417 = vpack.c.b16 %v5389, %v5385
        %v5418 = vpack.c.b16 %v5390, %v5386
        %v5419 = vpack.c.b16 %v5395, %v5391
        %v5420 = vpack.c.b16 %v5396, %v5392
        %v5421 = vpack.c.b16 %v5397, %v5393
        %v5422 = vpack.c.b16 %v5398, %v5394
        %v5423 = vpack.c.b16 %v5403, %v5399
        %v5424 = vpack.c.b16 %v5404, %v5400
        %v5425 = vpack.c.b16 %v5405, %v5401
        %v5426 = vpack.c.b16 %v5406, %v5402
        %v5427 = vpack.c.b16 %v5411, %v5407
        %v5428 = vpack.c.b16 %v5412, %v5408
        %v5429 = vpack.c.b16 %v5413, %v5409
        %v5430 = vpack.c.b16 %v5414, %v5410
        %v5448 = vsel %vm3370, %v5366, 0
        %5450 = vmatprep.subr.bf16.mxu0 0
        %5451 = vmatpush1.bf16.msra.mxu0 0
        %5452 = vmatprep.subr.bf16.mxu0 0
        %5453 = vmatpush1.bf16.msra.mxu0 0
        %5454 = vmatprep.subr.bf16.mxu0 0
        %5455 = vmatpush1.bf16.msra.mxu0 0
        %5456 = vmatprep.subr.bf16.mxu0 0
        %5457 = vmatpush1.bf16.msra.mxu0 0
        %5458 = vmatprep.subr.bf16.mxu0 %v5428
        %5459 = vmatpush1.bf16.msra.mxu0 %v5427
        %5460 = vmatprep.subr.bf16.mxu0 %v5424
        %5461 = vmatpush1.bf16.msra.mxu0 %v5423
        %5462 = vmatprep.subr.bf16.mxu0 %v5420
        %5463 = vmatpush1.bf16.msra.mxu0 %v5419
        %5464 = vmatprep.subr.bf16.mxu0 %v5416
        %5465 = vmatpush1.bf16.msra.mxu0 %v5415
        %5466 = vmatprep.subr.bf16.mxu0 0
        %5467 = vmatpush2.bf16.msra.mxu0 0
        %5468 = vmatprep.subr.bf16.mxu0 0
        %5469 = vmatpush2.bf16.msra.mxu0 0
        %5470 = vmatprep.subr.bf16.mxu0 0
        %5471 = vmatpush2.bf16.msra.mxu0 0
        %5472 = vmatprep.subr.bf16.mxu0 0
        %5473 = vmatpush2.bf16.msra.mxu0 0
        %5474 = vmatprep.subr.bf16.mxu0 0
        %5475 = vmatpush2.bf16.msra.mxu0 0
        %5476 = vmatprep.subr.bf16.mxu0 0
        %5477 = vmatpush2.bf16.msra.mxu0 0
        %5478 = vmatprep.subr.bf16.mxu0 0
        %5479 = vmatpush2.bf16.msra.mxu0 0
        %5480 = vmatprep.subr.bf16.mxu0 0
        %5481 = vmatpush2.bf16.msra.mxu0 0
        %5482 = vmatprep.mubr.bf16.mxu0 0
        %5483 = vmatmul.mubr.bf16.gmra.mxu0 %v5448
        %v5484 = vpop.f32.mrf.mxu0
        %v5485 = vadd.f32 0.0, %v5484
        %v5486 = vpop.f32.mrf.mxu0
        %v5487 = vadd.f32 0.0, %v5486
        %v5488 = vpop.f32.mrf.mxu0
        %v5489 = vpop.f32.mrf.mxu0
        %5490 = vdwg.mxu0
        %5491 = vmatprep.subr.bf16.mxu0 0
        %5492 = vmatpush1.bf16.msra.mxu0 0
        %5493 = vmatprep.subr.bf16.mxu0 0
        %5494 = vmatpush1.bf16.msra.mxu0 0
        %5495 = vmatprep.subr.bf16.mxu0 0
        %5496 = vmatpush1.bf16.msra.mxu0 0
        %5497 = vmatprep.subr.bf16.mxu0 0
        %5498 = vmatpush1.bf16.msra.mxu0 0
        %5499 = vmatprep.subr.bf16.mxu0 %v5430
        %5500 = vmatpush1.bf16.msra.mxu0 %v5429
        %5501 = vmatprep.subr.bf16.mxu0 %v5426
        %5502 = vmatpush1.bf16.msra.mxu0 %v5425
        %5503 = vmatprep.subr.bf16.mxu0 %v5422
        %5504 = vmatpush1.bf16.msra.mxu0 %v5421
        %5505 = vmatprep.subr.bf16.mxu0 %v5418
        %5506 = vmatpush1.bf16.msra.mxu0 %v5417
        %5507 = vmatprep.subr.bf16.mxu0 0
        %5508 = vmatpush2.bf16.msra.mxu0 0
        %5509 = vmatprep.subr.bf16.mxu0 0
        %5510 = vmatpush2.bf16.msra.mxu0 0
        %5511 = vmatprep.subr.bf16.mxu0 0
        %5512 = vmatpush2.bf16.msra.mxu0 0
        %5513 = vmatprep.subr.bf16.mxu0 0
        %5514 = vmatpush2.bf16.msra.mxu0 0
        %5515 = vmatprep.subr.bf16.mxu0 0
        %5516 = vmatpush2.bf16.msra.mxu0 0
        %5517 = vmatprep.subr.bf16.mxu0 0
        %5518 = vmatpush2.bf16.msra.mxu0 0
        %5519 = vmatprep.subr.bf16.mxu0 0
        %5520 = vmatpush2.bf16.msra.mxu0 0
        %5521 = vmatprep.subr.bf16.mxu0 0
        %5522 = vmatpush2.bf16.msra.mxu0 0
        %5523 = vmatprep.mubr.bf16.mxu0 0
        %5524 = vmatmul.mubr.bf16.gmra.mxu0 %v5448
        %v5525 = vpop.f32.mrf.mxu0
        %v5526 = vadd.f32 0.0, %v5525
        %v5527 = vpop.f32.mrf.mxu0
        %v5528 = vadd.f32 0.0, %v5527
        %v5529 = vpop.f32.mrf.mxu0
        %v5530 = vpop.f32.mrf.mxu0
        %5531 = vdwg.mxu0
        %v5532 = vadd.f32 %v5224, %v5485
        %v5533 = vadd.f32 %v5225, %v5487
        %v5534 = vadd.f32 %v5226, %v5526
        %v5535 = vadd.f32 %v5227, %v5528
        %5536 = vrot.lane.b32.xlu0 %v3235, 64
        %v5537 = vpop.permute.xlu0 %5536
        %5538 = vrot.lane.b32.xlu0 %v3239, 64
        %v5539 = vpop.permute.xlu0 %5538
        %v5540 = vsel %vm3370, %v5537, 0
        %v5542 = vsel %vm3370, %v5539, 0
        %5544 = vmatprep.subr.mxu0 0.0
        %5545 = vmatpush1.xpose.msra.mxu0 0.0
        %5546 = vmatprep.subr.mxu0 0.0
        %5547 = vmatpush1.xpose.msra.mxu0 0.0
        %5548 = vmatprep.subr.mxu0 0.0
        %5549 = vmatpush1.xpose.msra.mxu0 0.0
        %5550 = vmatprep.subr.mxu0 0.0
        %5551 = vmatpush1.xpose.msra.mxu0 0.0
        %5552 = vmatprep.subr.mxu0 0.0
        %5553 = vmatpush1.xpose.msra.mxu0 0.0
        %5554 = vmatprep.subr.mxu0 0.0
        %5555 = vmatpush1.xpose.msra.mxu0 0.0
        %5556 = vmatprep.subr.mxu0 0.0
        %5557 = vmatpush1.xpose.msra.mxu0 0.0
        %5558 = vmatprep.subr.mxu0 0.0
        %5559 = vmatpush1.xpose.msra.mxu0 0.0
        %5560 = vmatprep.subr.mxu0 0.0
        %5561 = vmatpush1.xpose.msra.mxu0 0.0
        %5562 = vmatprep.subr.mxu0 0.0
        %5563 = vmatpush1.xpose.msra.mxu0 0.0
        %5564 = vmatprep.subr.mxu0 0.0
        %5565 = vmatpush1.xpose.msra.mxu0 0.0
        %5566 = vmatprep.subr.mxu0 0.0
        %5567 = vmatpush1.xpose.msra.mxu0 0.0
        %5568 = vmatprep.subr.mxu0 0.0
        %5569 = vmatpush1.xpose.msra.mxu0 0.0
        %5570 = vmatprep.subr.mxu0 0.0
        %5571 = vmatpush1.xpose.msra.mxu0 0.0
        %5572 = vmatprep.subr.mxu0 0.0
        %5573 = vmatpush1.xpose.msra.mxu0 0.0
        %5574 = vmatprep.subr.mxu0 0.0
        %5575 = vmatpush1.xpose.msra.mxu0 %v5542
        %5576 = vmatprep.subr.mxu0 0.0
        %5577 = vmatpush2.xpose.msra.mxu0 0.0
        %5578 = vmatprep.subr.mxu0 0.0
        %5579 = vmatpush2.xpose.msra.mxu0 0.0
        %5580 = vmatprep.subr.mxu0 0.0
        %5581 = vmatpush2.xpose.msra.mxu0 0.0
        %5582 = vmatprep.subr.mxu0 0.0
        %5583 = vmatpush2.xpose.msra.mxu0 0.0
        %5584 = vmatprep.subr.mxu0 0.0
        %5585 = vmatpush2.xpose.msra.mxu0 0.0
        %5586 = vmatprep.subr.mxu0 0.0
        %5587 = vmatpush2.xpose.msra.mxu0 0.0
        %5588 = vmatprep.subr.mxu0 0.0
        %5589 = vmatpush2.xpose.msra.mxu0 0.0
        %5590 = vmatprep.subr.mxu0 0.0
        %5591 = vmatpush2.xpose.msra.mxu0 0.0
        %5592 = vmatprep.subr.mxu0 0.0
        %5593 = vmatpush2.xpose.msra.mxu0 0.0
        %5594 = vmatprep.subr.mxu0 0.0
        %5595 = vmatpush2.xpose.msra.mxu0 0.0
        %5596 = vmatprep.subr.mxu0 0.0
        %5597 = vmatpush2.xpose.msra.mxu0 0.0
        %5598 = vmatprep.subr.mxu0 0.0
        %5599 = vmatpush2.xpose.msra.mxu0 0.0
        %5600 = vmatprep.subr.mxu0 0.0
        %5601 = vmatpush2.xpose.msra.mxu0 0.0
        %5602 = vmatprep.subr.mxu0 0.0
        %5603 = vmatpush2.xpose.msra.mxu0 0.0
        %5604 = vmatprep.subr.mxu0 0.0
        %5605 = vmatpush2.xpose.msra.mxu0 0.0
        %5606 = vmatprep.subr.mxu0 0.0
        %5607 = vmatpush2.xpose.msra.mxu0 0.0
        %5608 = vmatprep.mubr.f32.mxu0 0.0
        %5609 = vmatmul.mubr.f32.gmra.mxu0 %v5540
        %v5610 = vpop.f32.mrf.mxu0
        %v5611 = vadd.f32 0.0, %v5610
        %v5612 = vpop.f32.mrf.mxu0
        %5613 = vdwg.mxu0
        %v5614 = vsel %vm3447, %v5611, -inf
        %5615 = vmax.xlane.f32.xlu0 %v5614
        %v5616 = vpop.xlane.xlu0 %5615
        %v5617 = vsub.f32 %v5611, %v5616
        %v5618 = vmul.f32 %v5617, 1.442695
        %v5619 = vpow.pop %v5618
        %v5620 = vsel %vm3447, %v5619, 0.0
        %5621 = vadd.xlane.f32.xlu0 %v5620
        %v5622 = vpop.xlane.xlu0 %5621
        %v5623 = vrcp.pop %v5622
        %v5624 = vmul.f32 %v5619, %v5623
        %s5625 = scalar_lea.vmem %s365, 56 [#allocation6]
        %5626 = vst.msk [vmem:[%s5625] sm:$0xff] %vm3447, %v5624
        %v5627 = vpack.c.bf16 %v5624, %v5624
        %5628 = vrot.lane.b32.xlu0 %v5319, 64
        %v5629 = vpop.permute.xlu0 %5628
        %v5631 = vsel %vm3447, %v5627, 0
        %v5634 = vsel %vm3464, %v5629, 0
        %5636 = vmatprep.subr.bf16.mxu0 0
        %5637 = vmatpush1.bf16.msra.mxu0 0
        %5638 = vmatprep.subr.bf16.mxu0 0
        %5639 = vmatpush1.bf16.msra.mxu0 0
        %5640 = vmatprep.subr.bf16.mxu0 0
        %5641 = vmatpush1.bf16.msra.mxu0 0
        %5642 = vmatprep.subr.bf16.mxu0 0
        %5643 = vmatpush1.bf16.msra.mxu0 0
        %5644 = vmatprep.subr.bf16.mxu0 0
        %5645 = vmatpush1.bf16.msra.mxu0 0
        %5646 = vmatprep.subr.bf16.mxu0 0
        %5647 = vmatpush1.bf16.msra.mxu0 0
        %5648 = vmatprep.subr.bf16.mxu0 0
        %5649 = vmatpush1.bf16.msra.mxu0 0
        %5650 = vmatprep.subr.bf16.mxu0 0
        %5651 = vmatpush1.bf16.msra.mxu0 %v5634
        %5652 = vmatprep.subr.bf16.mxu0 0
        %5653 = vmatpush2.bf16.msra.mxu0 0
        %5654 = vmatprep.subr.bf16.mxu0 0
        %5655 = vmatpush2.bf16.msra.mxu0 0
        %5656 = vmatprep.subr.bf16.mxu0 0
        %5657 = vmatpush2.bf16.msra.mxu0 0
        %5658 = vmatprep.subr.bf16.mxu0 0
        %5659 = vmatpush2.bf16.msra.mxu0 0
        %5660 = vmatprep.subr.bf16.mxu0 0
        %5661 = vmatpush2.bf16.msra.mxu0 0
        %5662 = vmatprep.subr.bf16.mxu0 0
        %5663 = vmatpush2.bf16.msra.mxu0 0
        %5664 = vmatprep.subr.bf16.mxu0 0
        %5665 = vmatpush2.bf16.msra.mxu0 0
        %5666 = vmatprep.subr.bf16.mxu0 0
        %5667 = vmatpush2.bf16.msra.mxu0 0
        %5668 = vmatprep.mubr.bf16.mxu0 0
        %5669 = vmatmul.mubr.bf16.gmra.mxu0 %v5631
        %v5670 = vpop.f32.mrf.mxu0
        %v5671 = vadd.f32 0.0, %v5670
        %v5672 = vpop.f32.mrf.mxu0
        %v5673 = vpop.f32.mrf.mxu0
        %v5674 = vpop.f32.mrf.mxu0
        %5675 = vdwg.mxu0
        %v5676 = vpack.c.bf16 %v5671, %v5671
        %v5693 = vunpack.c.l.b16 %v3354
        %v5694 = vunpack.c.h.b16 %v3354
        %v5695 = vunpack.c.l.b16 %v3355
        %v5696 = vunpack.c.h.b16 %v3355
        %v5697 = vunpack.c.l.b16 %v3356
        %v5698 = vunpack.c.h.b16 %v3356
        %v5699 = vunpack.c.l.b16 %v3357
        %v5700 = vunpack.c.h.b16 %v3357
        %v5701 = vunpack.c.l.b16 %v3358
        %v5702 = vunpack.c.h.b16 %v3358
        %v5703 = vunpack.c.l.b16 %v3359
        %v5704 = vunpack.c.h.b16 %v3359
        %v5705 = vunpack.c.l.b16 %v3360
        %v5706 = vunpack.c.h.b16 %v3360
        %v5707 = vunpack.c.l.b16 %v3361
        %v5708 = vunpack.c.h.b16 %v3361
        %v5709 = vunpack.c.l.b16 %v3362
        %v5710 = vunpack.c.h.b16 %v3362
        %v5711 = vunpack.c.l.b16 %v3363
        %v5712 = vunpack.c.h.b16 %v3363
        %v5713 = vunpack.c.l.b16 %v3364
        %v5714 = vunpack.c.h.b16 %v3364
        %v5715 = vunpack.c.l.b16 %v3365
        %v5716 = vunpack.c.h.b16 %v3365
        %v5717 = vunpack.c.l.b16 %v3366
        %v5718 = vunpack.c.h.b16 %v3366
        %v5719 = vunpack.c.l.b16 %v3367
        %v5720 = vunpack.c.h.b16 %v3367
        %v5721 = vunpack.c.l.b16 %v3368
        %v5722 = vunpack.c.h.b16 %v3368
        %v5723 = vunpack.c.l.b16 %v3369
        %v5724 = vunpack.c.h.b16 %v3369
        %v5725 = vpack.c.b16 %v5697, %v5693
        %v5726 = vpack.c.b16 %v5698, %v5694
        %v5727 = vpack.c.b16 %v5699, %v5695
        %v5728 = vpack.c.b16 %v5700, %v5696
        %v5729 = vpack.c.b16 %v5705, %v5701
        %v5730 = vpack.c.b16 %v5706, %v5702
        %v5731 = vpack.c.b16 %v5707, %v5703
        %v5732 = vpack.c.b16 %v5708, %v5704
        %v5733 = vpack.c.b16 %v5713, %v5709
        %v5734 = vpack.c.b16 %v5714, %v5710
        %v5735 = vpack.c.b16 %v5715, %v5711
        %v5736 = vpack.c.b16 %v5716, %v5712
        %v5737 = vpack.c.b16 %v5721, %v5717
        %v5738 = vpack.c.b16 %v5722, %v5718
        %v5739 = vpack.c.b16 %v5723, %v5719
        %v5740 = vpack.c.b16 %v5724, %v5720
        %v5758 = vsel %vm3370, %v5676, 0
        %5760 = vmatprep.subr.bf16.mxu0 0
        %5761 = vmatpush1.bf16.msra.mxu0 0
        %5762 = vmatprep.subr.bf16.mxu0 0
        %5763 = vmatpush1.bf16.msra.mxu0 0
        %5764 = vmatprep.subr.bf16.mxu0 0
        %5765 = vmatpush1.bf16.msra.mxu0 0
        %5766 = vmatprep.subr.bf16.mxu0 0
        %5767 = vmatpush1.bf16.msra.mxu0 0
        %5768 = vmatprep.subr.bf16.mxu0 %v5738
        %5769 = vmatpush1.bf16.msra.mxu0 %v5737
        %5770 = vmatprep.subr.bf16.mxu0 %v5734
        %5771 = vmatpush1.bf16.msra.mxu0 %v5733
        %5772 = vmatprep.subr.bf16.mxu0 %v5730
        %5773 = vmatpush1.bf16.msra.mxu0 %v5729
        %5774 = vmatprep.subr.bf16.mxu0 %v5726
        %5775 = vmatpush1.bf16.msra.mxu0 %v5725
        %5776 = vmatprep.subr.bf16.mxu0 0
        %5777 = vmatpush2.bf16.msra.mxu0 0
        %5778 = vmatprep.subr.bf16.mxu0 0
        %5779 = vmatpush2.bf16.msra.mxu0 0
        %5780 = vmatprep.subr.bf16.mxu0 0
        %5781 = vmatpush2.bf16.msra.mxu0 0
        %5782 = vmatprep.subr.bf16.mxu0 0
        %5783 = vmatpush2.bf16.msra.mxu0 0
        %5784 = vmatprep.subr.bf16.mxu0 0
        %5785 = vmatpush2.bf16.msra.mxu0 0
        %5786 = vmatprep.subr.bf16.mxu0 0
        %5787 = vmatpush2.bf16.msra.mxu0 0
        %5788 = vmatprep.subr.bf16.mxu0 0
        %5789 = vmatpush2.bf16.msra.mxu0 0
        %5790 = vmatprep.subr.bf16.mxu0 0
        %5791 = vmatpush2.bf16.msra.mxu0 0
        %5792 = vmatprep.mubr.bf16.mxu0 0
        %5793 = vmatmul.mubr.bf16.gmra.mxu0 %v5758
        %v5794 = vpop.f32.mrf.mxu0
        %v5795 = vadd.f32 0.0, %v5794
        %v5796 = vpop.f32.mrf.mxu0
        %v5797 = vadd.f32 0.0, %v5796
        %v5798 = vpop.f32.mrf.mxu0
        %v5799 = vpop.f32.mrf.mxu0
        %5800 = vdwg.mxu0
        %5801 = vmatprep.subr.bf16.mxu0 0
        %5802 = vmatpush1.bf16.msra.mxu0 0
        %5803 = vmatprep.subr.bf16.mxu0 0
        %5804 = vmatpush1.bf16.msra.mxu0 0
        %5805 = vmatprep.subr.bf16.mxu0 0
        %5806 = vmatpush1.bf16.msra.mxu0 0
        %5807 = vmatprep.subr.bf16.mxu0 0
        %5808 = vmatpush1.bf16.msra.mxu0 0
        %5809 = vmatprep.subr.bf16.mxu0 %v5740
        %5810 = vmatpush1.bf16.msra.mxu0 %v5739
        %5811 = vmatprep.subr.bf16.mxu0 %v5736
        %5812 = vmatpush1.bf16.msra.mxu0 %v5735
        %5813 = vmatprep.subr.bf16.mxu0 %v5732
        %5814 = vmatpush1.bf16.msra.mxu0 %v5731
        %5815 = vmatprep.subr.bf16.mxu0 %v5728
        %5816 = vmatpush1.bf16.msra.mxu0 %v5727
        %5817 = vmatprep.subr.bf16.mxu0 0
        %5818 = vmatpush2.bf16.msra.mxu0 0
        %5819 = vmatprep.subr.bf16.mxu0 0
        %5820 = vmatpush2.bf16.msra.mxu0 0
        %5821 = vmatprep.subr.bf16.mxu0 0
        %5822 = vmatpush2.bf16.msra.mxu0 0
        %5823 = vmatprep.subr.bf16.mxu0 0
        %5824 = vmatpush2.bf16.msra.mxu0 0
        %5825 = vmatprep.subr.bf16.mxu0 0
        %5826 = vmatpush2.bf16.msra.mxu0 0
        %5827 = vmatprep.subr.bf16.mxu0 0
        %5828 = vmatpush2.bf16.msra.mxu0 0
        %5829 = vmatprep.subr.bf16.mxu0 0
        %5830 = vmatpush2.bf16.msra.mxu0 0
        %5831 = vmatprep.subr.bf16.mxu0 0
        %5832 = vmatpush2.bf16.msra.mxu0 0
        %5833 = vmatprep.mubr.bf16.mxu0 0
        %5834 = vmatmul.mubr.bf16.gmra.mxu0 %v5758
        %v5835 = vpop.f32.mrf.mxu0
        %v5836 = vadd.f32 0.0, %v5835
        %v5837 = vpop.f32.mrf.mxu0
        %v5838 = vadd.f32 0.0, %v5837
        %v5839 = vpop.f32.mrf.mxu0
        %v5840 = vpop.f32.mrf.mxu0
        %5841 = vdwg.mxu0
        %v5842 = vadd.f32 %v5532, %v5795
        %v5843 = vadd.f32 %v5533, %v5797
        %v5844 = vadd.f32 %v5534, %v5836
        %v5845 = vadd.f32 %v5535, %v5838
        %v5846 = vadd.f32 %v5842, %v5843
        %v5847 = vadd.f32 %v5846, %v5844
        %v5848 = vadd.f32 %v5847, %v5845
        %5849 = vadd.xlane.f32.xlu0 %v5848
        %v5850 = vpop.xlane.xlu0 %5849
        %v5851 = vrcp.pop 512.0
        %v5852 = vmul.f32 %v5850, %v5851
        %v5853 = vsub.f32 %v5842, %v5852
        %v5854 = vsub.f32 %v5843, %v5852
        %v5855 = vsub.f32 %v5844, %v5852
        %v5856 = vsub.f32 %v5845, %v5852
        %v5857 = vmul.f32 %v5853, %v5853
        %v5858 = vmul.f32 %v5854, %v5854
        %v5859 = vmul.f32 %v5855, %v5855
        %v5860 = vmul.f32 %v5856, %v5856
        %v5861 = vadd.f32 %v5857, %v5858
        %v5862 = vadd.f32 %v5861, %v5859
        %v5863 = vadd.f32 %v5862, %v5860
        %5864 = vadd.xlane.f32.xlu0 %v5863
        %v5865 = vpop.xlane.xlu0 %5864
        %v5866 = vmul.f32 %v5865, %v5851
        %v5867 = vadd.f32 %v5866, 1e-05
        %v5868 = vrsqrt.pop %v5867
        %v5869 = vmul.f32 %v5853, %v5868
        %v5870 = vmul.f32 %v5854, %v5868
        %v5871 = vmul.f32 %v5855, %v5868
        %v5872 = vmul.f32 %v5856, %v5868
        %5873 = vst [vmem:[%s358] sm:$0xff] %v5869
        %5874 = vst [vmem:[%s358 + $0x8] sm:$0xff] %v5870
        %5875 = vst [vmem:[%s358 + $0x10] sm:$0xff] %v5871
        %5876 = vst [vmem:[%s358 + $0x18] sm:$0xff] %v5872
        %s5877 = sand.u32 %s212, 1
        %s5878 = scalar_lea.sflag [#allocation5], %s5877
        %s5879 = sand.u32 %s212, 1
        %s5880 = smul.addr %s5879, 32
        %s5881 = scalar_lea.vmem [#allocation4], %s5880
        %s5882 = sand.u32 %s240, 1
        %s5883 = scalar_lea.sflag [#allocation7], %s5882
        %s5884 = sand.u32 %s240, 1
        %s5885 = smul.addr %s5884, 64
        %s5886 = scalar_lea.vmem [#allocation6], %s5885
        // Predicated region
        $region53: #{multi_head_attention.1} parent=47 // pred_check
          %p5887 = pneg %p222
        $region54: #{multi_head_attention.1} parent=47 // pred_check_branch
          %5889 = sbr.rel (%p5887) target = $region56
        $region55: #{multi_head_attention.1} parent=47 // pred_region
          %s5891 = ssub.s32 512, 512
          %5892 = vsyncadd %s5878, %s5891
          %s5893 = smul.addr %s31, 4
          %s5894 = smul.addr %s30, 4
          %s5895 = sadd.s32 %s5893, %s5894
          %s5896 = smul.addr %s5895, 128
          %s5897 = scalar_lea.hbm %s7, %s5896
          %s5899 = sshll.u32 %s5881, 4
          %s5900 = int_to_ptr.vmem [resolvable:$true] %s5899
          %5902 = dma.vmem_to_hbm [thread:$0]  %s5900, 512, %s5897, %s5878
        $region56: #{multi_head_attention.1} parent=47 // pred_fallthru
          _
        // Predicated region
        $region57: #{multi_head_attention.1} parent=47 // pred_check
          %p5903 = pneg %p250
        $region58: #{multi_head_attention.1} parent=47 // pred_check_branch
          %5905 = sbr.rel (%p5903) target = $region60
        $region59: #{multi_head_attention.1} parent=47 // pred_region
          %s5907 = ssub.s32 1024, 1024
          %5908 = vsyncadd %s5883, %s5907
          %s5909 = smul.addr %s30, 8
          %s5910 = sadd.s32 %s31, %s5909
          %s5911 = smul.addr %s5910, 128
          %s5912 = scalar_lea.hbm %s8, %s5911
          %s5913 = sshll.u32 %s5886, 4
          %s5914 = int_to_ptr.vmem [resolvable:$true] %s5913
          %5919 = dma.vmem_to_hbm [thread:$0]  %s5914, 1024, %s5912, %s5883, 128, 128, 8
        $region60: #{multi_head_attention.1} parent=47 // pred_fallthru
          _
      $region48: #{multi_head_attention.1} parent=5 // pred_fallthru
        _
      %p5920 = scmp.le.s32.totalorder 2, %s21
      // Predicated region
      $region61: #{multi_head_attention.1} parent=5 // pred_check
        %p5921 = pneg %p5920
      $region62: #{multi_head_attention.1} parent=5 // pred_check_branch
        %5923 = sbr.rel (%p5921) target = $region64
      $region63: #{multi_head_attention.1} parent=5 // pred_region
        %s5924 = ssub.s32 %s21, 2
        // Predicated region
        $region65: #{multi_head_attention.1} parent=63 // pred_check
          %p5925 = pneg %p228
        $region66: #{multi_head_attention.1} parent=63 // pred_check_branch
          %5927 = sbr.rel (%p5925) target = $region68
        $region67: #{multi_head_attention.1} parent=63 // pred_region
          %s5928 = sand.u32 %s213, 1
          %s5929 = scalar_lea.sflag [#allocation5], %s5928
          %s5930 = sand.u32 %s213, 1
          %s5931 = smul.addr %s5930, 32
          %s5932 = scalar_lea.vmem [#allocation4], %s5931
          %5933 = dma.done %s5929, 512
        $region68: #{multi_head_attention.1} parent=63 // pred_fallthru
          _
        // Predicated region
        $region69: #{multi_head_attention.1} parent=63 // pred_check
          %p5934 = pneg %p256
        $region70: #{multi_head_attention.1} parent=63 // pred_check_branch
          %5936 = sbr.rel (%p5934) target = $region72
        $region71: #{multi_head_attention.1} parent=63 // pred_region
          %s5937 = sand.u32 %s241, 1
          %s5938 = scalar_lea.sflag [#allocation7], %s5937
          %s5939 = sand.u32 %s241, 1
          %s5940 = smul.addr %s5939, 64
          %s5941 = scalar_lea.vmem [#allocation6], %s5940
          %5942 = dma.done %s5938, 1024
        $region72: #{multi_head_attention.1} parent=63 // pred_fallthru
          _
      $region64: #{multi_head_attention.1} parent=5 // pred_fallthru
        _
    $region6: #{multi_head_attention.1} parent=1 // loop_footer
      %s25 = sadd.s32 1, %s21
    $region7: #{multi_head_attention.1} parent=1 // loop_footer_branch
      %20 = sbr.rel target = $region3
    $region8: #{multi_head_attention.1} parent=1 // loop_exit
      _
    %5943 = vsyncpa [#allocation5], 1
    %s5944 = scalar_lea.sflag [#allocation5], 1
    %5945 = vsyncpa %s5944, 1
    %5946 = vsyncpa [#allocation7], 1
    %s5947 = scalar_lea.sflag [#allocation7], 1
    %5948 = vsyncpa %s5947, 1

</llo_original>
